<compile_context>
chip_gen: v7x
topology: tpu7x:2x2x1
jax: 0.10.0
libtpu: 0.0.40
codegen_flags: <defaults>
</compile_context>

<pallas_src>
import jax
import jax.numpy as jnp
from jax.experimental import pallas as pl
from jax.experimental.pallas import tpu as pltpu


def _round_up(x, m):
    return (x + m - 1) // m * m


# ----------------------------------------------------------------------------
# Pallas kernel: per-mode real-packed matmul on the MXU.
#   x_ref : (mode_tile, Bp, Kp)   packed [xr | xi] rows (padded)
#   w_ref : (mode_tile, Kp, Np)   packed [[wr wi]; [-wi wr]] (padded)
#   o_ref : (mode_tile, Bp, Np)   packed [out_r | out_i]
# ----------------------------------------------------------------------------
def _make_spectral_mix_kernel(mode_tile):
    def kernel(x_ref, w_ref, o_ref):
        # Small static unrolled loop over the modes in this tile; each
        # iteration is one (Bp, Kp) @ (Kp, Np) MXU matmul with f32 accumulate.
        for m in range(mode_tile):
            o_ref[m] = jnp.dot(
                x_ref[m],
                w_ref[m],
                precision=jax.lax.Precision.HIGHEST,
                preferred_element_type=jnp.float32,
            )

    return kernel


def pallas_spectral_mix(x_packed, w_packed, *, mode_tile=8):
    """x_packed: (M_pad, Bp, Kp) f32; w_packed: (M_pad, Kp, Np) f32."""
    Mp, Bp, Kp = x_packed.shape
    Np = w_packed.shape[2]
    assert Mp % mode_tile == 0

    return pl.pallas_call(
        _make_spectral_mix_kernel(mode_tile),
        out_shape=jax.ShapeDtypeStruct((Mp, Bp, Np), jnp.float32),
        grid_spec=pltpu.PrefetchScalarGridSpec(
            num_scalar_prefetch=0,
            grid=(Mp // mode_tile,),
            in_specs=[
                pl.BlockSpec((mode_tile, Bp, Kp), lambda t: (t, 0, 0)),
                pl.BlockSpec((mode_tile, Kp, Np), lambda t: (t, 0, 0)),
            ],
            out_specs=pl.BlockSpec((mode_tile, Bp, Np), lambda t: (t, 0, 0)),
        ),
        compiler_params=pltpu.CompilerParams(
            dimension_semantics=("parallel",),
        ),
    )(x_packed, w_packed)


# ----------------------------------------------------------------------------
# SpectralConv2d forward (matches the PyTorch module: a single weight tensor,
# only the x_ft[:, :, :modes1, :modes2] block is mixed).
# ----------------------------------------------------------------------------
def spectral_conv2d(x, w_real, w_imag, modes1, modes2, *, mode_tile=8):
    """x: (B, Cin, H, W) float32; weights: (Cin, Cout, modes1, modes2) f32."""
    B, Cin, H, W = x.shape
    Cout = w_real.shape[1]
    Wh = W // 2 + 1
    M = modes1 * modes2

    # --- plain-JAX glue: forward FFT and low-mode extraction -----------------
    x_ft = jnp.fft.rfft2(x, norm="ortho")                 # (B, Cin, H, Wh) c64
    x_low = x_ft[:, :, :modes1, :modes2]                  # (B, Cin, m1, m2)
    xr = jnp.real(x_low).reshape(B, Cin, M).astype(jnp.float32)
    xi = jnp.imag(x_low).reshape(B, Cin, M).astype(jnp.float32)

    # Real-packed activations: X[m] = [xr | xi] rows of shape (B, 2*Cin).
    X = jnp.concatenate([xr, xi], axis=1)                 # (B, 2Cin, M)
    X = jnp.transpose(X, (2, 0, 1))                       # (M, B, 2Cin)

    # Real-packed weights: W[m] = [[wr wi]; [-wi wr]], shape (2*Cin, 2*Cout).
    wr = w_real.reshape(Cin, Cout, M).astype(jnp.float32)
    wi = w_imag.reshape(Cin, Cout, M).astype(jnp.float32)
    w_top = jnp.concatenate([wr, wi], axis=1)             # (Cin, 2Cout, M)
    w_bot = jnp.concatenate([-wi, wr], axis=1)            # (Cin, 2Cout, M)
    Wp = jnp.concatenate([w_top, w_bot], axis=0)          # (2Cin, 2Cout, M)
    Wp = jnp.transpose(Wp, (2, 0, 1))                     # (M, 2Cin, 2Cout)

    # Pad to TPU-friendly shapes: modes -> multiple of the grid tile,
    # batch (sublane) -> multiple of 8, packed channels (lane / contraction)
    # -> multiples of 128 so the kernel's loads/stores are lane-dense.
    M_pad = _round_up(max(M, 1), mode_tile)
    Bp = _round_up(B, 8)
    Kp = _round_up(2 * Cin, 128)
    Np = _round_up(2 * Cout, 128)
    X = jnp.pad(X, ((0, M_pad - M), (0, Bp - B), (0, Kp - 2 * Cin)))
    Wp = jnp.pad(Wp, ((0, M_pad - M), (0, Kp - 2 * Cin), (0, Np - 2 * Cout)))

    # --- Pallas hot path ------------------------------------------------------
    out = pallas_spectral_mix(X, Wp, mode_tile=mode_tile)  # (M_pad, Bp, Np)

    # Strip padding and unpack real/imag halves.
    out = out[:M, :B, : 2 * Cout]                         # (M, B, 2Cout)
    out = jnp.transpose(out, (1, 2, 0))                   # (B, 2Cout, M)
    out_r = out[:, :Cout, :].reshape(B, Cout, modes1, modes2)
    out_i = out[:, Cout:, :].reshape(B, Cout, modes1, modes2)

    # Scatter into the zero-initialized spectrum and inverse transform.
    out_ft = jnp.zeros((B, Cout, H, Wh), dtype=jnp.complex64)
    out_ft = out_ft.at[:, :, :modes1, :modes2].set(out_r + 1j * out_i)
    y = jnp.fft.irfft2(out_ft, s=(H, W), norm="ortho")    # (B, Cout, H, W)
    return y.astype(jnp.float32)


if __name__ == "__main__":
    # Small deterministic example consistent with the module.
    B, Cin, Cout, H, W = 2, 4, 4, 16, 16
    modes1, modes2 = 4, 4

    key = jax.random.PRNGKey(0)
    kx, kwr, kwi = jax.random.split(key, 3)

    x = jax.random.normal(kx, (B, Cin, H, W), dtype=jnp.float32)

    # Deterministic synthetic init mirroring
    #   torch.randn(in_c, out_c, m1, m2, dtype=cfloat) * (1/(in_c*out_c))
    scale = 1.0 / (Cin * Cout)
    w_real = scale * jax.random.normal(kwr, (Cin, Cout, modes1, modes2), jnp.float32)
    w_imag = scale * jax.random.normal(kwi, (Cin, Cout, modes1, modes2), jnp.float32)

    y = spectral_conv2d(x, w_real, w_imag, modes1, modes2)
    y = jax.block_until_ready(y)

    # Pure-JAX reference: exact f32 elementwise complex contraction (no MXU).
    x_ft = jnp.fft.rfft2(x, norm="ortho")
    w_c = (w_real + 1j * w_imag).astype(jnp.complex64)
    x_low = x_ft[:, :, :modes1, :modes2]
    out_low_ref = jnp.sum(x_low[:, :, None, :, :] * w_c[None, :, :, :, :], axis=1)
    out_ft_ref = jnp.zeros((B, Cout, H, W // 2 + 1), dtype=jnp.complex64)
    out_ft_ref = out_ft_ref.at[:, :, :modes1, :modes2].set(out_low_ref)
    y_ref = jnp.fft.irfft2(out_ft_ref, s=(H, W), norm="ortho")

    assert y.shape == (B, Cout, H, W)
    assert jnp.allclose(y, y_ref, atol=1e-4, rtol=1e-4), float(
        jnp.max(jnp.abs(y - y_ref))
    )
    print("KERNEL_OK")
</pallas_src>

<mosaic_0001>
module attributes {stable_mosaic.version = 11 : i64} {
  func.func @kernel(%arg0: i32, %arg1: memref<8x8x128xf32, #tpu.memory_space<vmem>>, %arg2: memref<8x128x128xf32, #tpu.memory_space<vmem>>, %arg3: memref<8x8x128xf32, #tpu.memory_space<vmem>>) attributes {dimension_semantics = [#tpu.dimension_semantics<parallel>], iteration_bounds = array<i64: 2>, scalar_prefetch = 0 : i64, scratch_operands = 0 : i64, tpu.core_type = #tpu.core_type<tc>, window_params = [{transform_indices = @transform_0, window_bounds = array<i64: 8, 8, 128>}, {transform_indices = @transform_1, window_bounds = array<i64: 8, 128, 128>}, {transform_indices = @transform_2, window_bounds = array<i64: 8, 8, 128>}]} {
    %c0 = arith.constant 0 : index
    %c0_0 = arith.constant 0 : index
    %c0_1 = arith.constant 0 : index
    %0 = vector.load %arg1[%c0, %c0_0, %c0_1] : memref<8x8x128xf32, #tpu.memory_space<vmem>>, vector<1x8x128xf32>
    %1 = vector.shape_cast %0 : vector<1x8x128xf32> to vector<8x128xf32>
    %c0_2 = arith.constant 0 : index
    %c0_3 = arith.constant 0 : index
    %c0_4 = arith.constant 0 : index
    %2 = vector.load %arg2[%c0_2, %c0_3, %c0_4] : memref<8x128x128xf32, #tpu.memory_space<vmem>>, vector<1x128x128xf32>
    %3 = vector.shape_cast %2 : vector<1x128x128xf32> to vector<128x128xf32>
    %cst = arith.constant dense<0.000000e+00> : vector<8x128xf32>
    %4 = tpu.matmul %1, %3, %cst {dimension_numbers = #tpu.dot_dimension_numbers<[1], [0], [0], [1], [0, 0, 1, 1], [], []>, precision = #tpu.contract_precision<fp32>} : vector<8x128xf32>, vector<128x128xf32>, vector<8x128xf32> -> vector<8x128xf32>
    %c0_5 = arith.constant 0 : index
    %c0_6 = arith.constant 0 : index
    %c0_7 = arith.constant 0 : index
    %5 = vector.load %arg3[%c0_5, %c0_6, %c0_7] : memref<8x8x128xf32, #tpu.memory_space<vmem>>, vector<1x8x128xf32>
    %6 = vector.shape_cast %5 : vector<1x8x128xf32> to vector<8x128xf32>
    %7 = vector.shape_cast %4 : vector<8x128xf32> to vector<1x8x128xf32>
    tpu.vector_store %arg3[%c0_5, %c0_6, %c0_7], %7 {strides = array<i32>} : memref<8x8x128xf32, #tpu.memory_space<vmem>>, vector<1x8x128xf32>,
    %c1 = arith.constant 1 : index
    %c0_8 = arith.constant 0 : index
    %c0_9 = arith.constant 0 : index
    %8 = vector.load %arg1[%c1, %c0_8, %c0_9] : memref<8x8x128xf32, #tpu.memory_space<vmem>>, vector<1x8x128xf32>
    %9 = vector.shape_cast %8 : vector<1x8x128xf32> to vector<8x128xf32>
    %c1_10 = arith.constant 1 : index
    %c0_11 = arith.constant 0 : index
    %c0_12 = arith.constant 0 : index
    %10 = vector.load %arg2[%c1_10, %c0_11, %c0_12] : memref<8x128x128xf32, #tpu.memory_space<vmem>>, vector<1x128x128xf32>
    %11 = vector.shape_cast %10 : vector<1x128x128xf32> to vector<128x128xf32>
    %cst_13 = arith.constant dense<0.000000e+00> : vector<8x128xf32>
    %12 = tpu.matmul %9, %11, %cst_13 {dimension_numbers = #tpu.dot_dimension_numbers<[1], [0], [0], [1], [0, 0, 1, 1], [], []>, precision = #tpu.contract_precision<fp32>} : vector<8x128xf32>, vector<128x128xf32>, vector<8x128xf32> -> vector<8x128xf32>
    %c1_14 = arith.constant 1 : index
    %c0_15 = arith.constant 0 : index
    %c0_16 = arith.constant 0 : index
    %13 = vector.load %arg3[%c1_14, %c0_15, %c0_16] : memref<8x8x128xf32, #tpu.memory_space<vmem>>, vector<1x8x128xf32>
    %14 = vector.shape_cast %13 : vector<1x8x128xf32> to vector<8x128xf32>
    %15 = vector.shape_cast %12 : vector<8x128xf32> to vector<1x8x128xf32>
    tpu.vector_store %arg3[%c1_14, %c0_15, %c0_16], %15 {strides = array<i32>} : memref<8x8x128xf32, #tpu.memory_space<vmem>>, vector<1x8x128xf32>,
    %c2 = arith.constant 2 : index
    %c0_17 = arith.constant 0 : index
    %c0_18 = arith.constant 0 : index
    %16 = vector.load %arg1[%c2, %c0_17, %c0_18] : memref<8x8x128xf32, #tpu.memory_space<vmem>>, vector<1x8x128xf32>
    %17 = vector.shape_cast %16 : vector<1x8x128xf32> to vector<8x128xf32>
    %c2_19 = arith.constant 2 : index
    %c0_20 = arith.constant 0 : index
    %c0_21 = arith.constant 0 : index
    %18 = vector.load %arg2[%c2_19, %c0_20, %c0_21] : memref<8x128x128xf32, #tpu.memory_space<vmem>>, vector<1x128x128xf32>
    %19 = vector.shape_cast %18 : vector<1x128x128xf32> to vector<128x128xf32>
    %cst_22 = arith.constant dense<0.000000e+00> : vector<8x128xf32>
    %20 = tpu.matmul %17, %19, %cst_22 {dimension_numbers = #tpu.dot_dimension_numbers<[1], [0], [0], [1], [0, 0, 1, 1], [], []>, precision = #tpu.contract_precision<fp32>} : vector<8x128xf32>, vector<128x128xf32>, vector<8x128xf32> -> vector<8x128xf32>
    %c2_23 = arith.constant 2 : index
    %c0_24 = arith.constant 0 : index
    %c0_25 = arith.constant 0 : index
    %21 = vector.load %arg3[%c2_23, %c0_24, %c0_25] : memref<8x8x128xf32, #tpu.memory_space<vmem>>, vector<1x8x128xf32>
    %22 = vector.shape_cast %21 : vector<1x8x128xf32> to vector<8x128xf32>
    %23 = vector.shape_cast %20 : vector<8x128xf32> to vector<1x8x128xf32>
    tpu.vector_store %arg3[%c2_23, %c0_24, %c0_25], %23 {strides = array<i32>} : memref<8x8x128xf32, #tpu.memory_space<vmem>>, vector<1x8x128xf32>,
    %c3 = arith.constant 3 : index
    %c0_26 = arith.constant 0 : index
    %c0_27 = arith.constant 0 : index
    %24 = vector.load %arg1[%c3, %c0_26, %c0_27] : memref<8x8x128xf32, #tpu.memory_space<vmem>>, vector<1x8x128xf32>
    %25 = vector.shape_cast %24 : vector<1x8x128xf32> to vector<8x128xf32>
    %c3_28 = arith.constant 3 : index
    %c0_29 = arith.constant 0 : index
    %c0_30 = arith.constant 0 : index
    %26 = vector.load %arg2[%c3_28, %c0_29, %c0_30] : memref<8x128x128xf32, #tpu.memory_space<vmem>>, vector<1x128x128xf32>
    %27 = vector.shape_cast %26 : vector<1x128x128xf32> to vector<128x128xf32>
    %cst_31 = arith.constant dense<0.000000e+00> : vector<8x128xf32>
    %28 = tpu.matmul %25, %27, %cst_31 {dimension_numbers = #tpu.dot_dimension_numbers<[1], [0], [0], [1], [0, 0, 1, 1], [], []>, precision = #tpu.contract_precision<fp32>} : vector<8x128xf32>, vector<128x128xf32>, vector<8x128xf32> -> vector<8x128xf32>
    %c3_32 = arith.constant 3 : index
    %c0_33 = arith.constant 0 : index
    %c0_34 = arith.constant 0 : index
    %29 = vector.load %arg3[%c3_32, %c0_33, %c0_34] : memref<8x8x128xf32, #tpu.memory_space<vmem>>, vector<1x8x128xf32>
    %30 = vector.shape_cast %29 : vector<1x8x128xf32> to vector<8x128xf32>
    %31 = vector.shape_cast %28 : vector<8x128xf32> to vector<1x8x128xf32>
    tpu.vector_store %arg3[%c3_32, %c0_33, %c0_34], %31 {strides = array<i32>} : memref<8x8x128xf32, #tpu.memory_space<vmem>>, vector<1x8x128xf32>,
    %c4 = arith.constant 4 : index
    %c0_35 = arith.constant 0 : index
    %c0_36 = arith.constant 0 : index
    %32 = vector.load %arg1[%c4, %c0_35, %c0_36] : memref<8x8x128xf32, #tpu.memory_space<vmem>>, vector<1x8x128xf32>
    %33 = vector.shape_cast %32 : vector<1x8x128xf32> to vector<8x128xf32>
    %c4_37 = arith.constant 4 : index
    %c0_38 = arith.constant 0 : index
    %c0_39 = arith.constant 0 : index
    %34 = vector.load %arg2[%c4_37, %c0_38, %c0_39] : memref<8x128x128xf32, #tpu.memory_space<vmem>>, vector<1x128x128xf32>
    %35 = vector.shape_cast %34 : vector<1x128x128xf32> to vector<128x128xf32>
    %cst_40 = arith.constant dense<0.000000e+00> : vector<8x128xf32>
    %36 = tpu.matmul %33, %35, %cst_40 {dimension_numbers = #tpu.dot_dimension_numbers<[1], [0], [0], [1], [0, 0, 1, 1], [], []>, precision = #tpu.contract_precision<fp32>} : vector<8x128xf32>, vector<128x128xf32>, vector<8x128xf32> -> vector<8x128xf32>
    %c4_41 = arith.constant 4 : index
    %c0_42 = arith.constant 0 : index
    %c0_43 = arith.constant 0 : index
    %37 = vector.load %arg3[%c4_41, %c0_42, %c0_43] : memref<8x8x128xf32, #tpu.memory_space<vmem>>, vector<1x8x128xf32>
    %38 = vector.shape_cast %37 : vector<1x8x128xf32> to vector<8x128xf32>
    %39 = vector.shape_cast %36 : vector<8x128xf32> to vector<1x8x128xf32>
    tpu.vector_store %arg3[%c4_41, %c0_42, %c0_43], %39 {strides = array<i32>} : memref<8x8x128xf32, #tpu.memory_space<vmem>>, vector<1x8x128xf32>,
    %c5 = arith.constant 5 : index
    %c0_44 = arith.constant 0 : index
    %c0_45 = arith.constant 0 : index
    %40 = vector.load %arg1[%c5, %c0_44, %c0_45] : memref<8x8x128xf32, #tpu.memory_space<vmem>>, vector<1x8x128xf32>
    %41 = vector.shape_cast %40 : vector<1x8x128xf32> to vector<8x128xf32>
    %c5_46 = arith.constant 5 : index
    %c0_47 = arith.constant 0 : index
    %c0_48 = arith.constant 0 : index
    %42 = vector.load %arg2[%c5_46, %c0_47, %c0_48] : memref<8x128x128xf32, #tpu.memory_space<vmem>>, vector<1x128x128xf32>
    %43 = vector.shape_cast %42 : vector<1x128x128xf32> to vector<128x128xf32>
    %cst_49 = arith.constant dense<0.000000e+00> : vector<8x128xf32>
    %44 = tpu.matmul %41, %43, %cst_49 {dimension_numbers = #tpu.dot_dimension_numbers<[1], [0], [0], [1], [0, 0, 1, 1], [], []>, precision = #tpu.contract_precision<fp32>} : vector<8x128xf32>, vector<128x128xf32>, vector<8x128xf32> -> vector<8x128xf32>
    %c5_50 = arith.constant 5 : index
    %c0_51 = arith.constant 0 : index
    %c0_52 = arith.constant 0 : index
    %45 = vector.load %arg3[%c5_50, %c0_51, %c0_52] : memref<8x8x128xf32, #tpu.memory_space<vmem>>, vector<1x8x128xf32>
    %46 = vector.shape_cast %45 : vector<1x8x128xf32> to vector<8x128xf32>
    %47 = vector.shape_cast %44 : vector<8x128xf32> to vector<1x8x128xf32>
    tpu.vector_store %arg3[%c5_50, %c0_51, %c0_52], %47 {strides = array<i32>} : memref<8x8x128xf32, #tpu.memory_space<vmem>>, vector<1x8x128xf32>,
    %c6 = arith.constant 6 : index
    %c0_53 = arith.constant 0 : index
    %c0_54 = arith.constant 0 : index
    %48 = vector.load %arg1[%c6, %c0_53, %c0_54] : memref<8x8x128xf32, #tpu.memory_space<vmem>>, vector<1x8x128xf32>
    %49 = vector.shape_cast %48 : vector<1x8x128xf32> to vector<8x128xf32>
    %c6_55 = arith.constant 6 : index
    %c0_56 = arith.constant 0 : index
    %c0_57 = arith.constant 0 : index
    %50 = vector.load %arg2[%c6_55, %c0_56, %c0_57] : memref<8x128x128xf32, #tpu.memory_space<vmem>>, vector<1x128x128xf32>
    %51 = vector.shape_cast %50 : vector<1x128x128xf32> to vector<128x128xf32>
    %cst_58 = arith.constant dense<0.000000e+00> : vector<8x128xf32>
    %52 = tpu.matmul %49, %51, %cst_58 {dimension_numbers = #tpu.dot_dimension_numbers<[1], [0], [0], [1], [0, 0, 1, 1], [], []>, precision = #tpu.contract_precision<fp32>} : vector<8x128xf32>, vector<128x128xf32>, vector<8x128xf32> -> vector<8x128xf32>
    %c6_59 = arith.constant 6 : index
    %c0_60 = arith.constant 0 : index
    %c0_61 = arith.constant 0 : index
    %53 = vector.load %arg3[%c6_59, %c0_60, %c0_61] : memref<8x8x128xf32, #tpu.memory_space<vmem>>, vector<1x8x128xf32>
    %54 = vector.shape_cast %53 : vector<1x8x128xf32> to vector<8x128xf32>
    %55 = vector.shape_cast %52 : vector<8x128xf32> to vector<1x8x128xf32>
    tpu.vector_store %arg3[%c6_59, %c0_60, %c0_61], %55 {strides = array<i32>} : memref<8x8x128xf32, #tpu.memory_space<vmem>>, vector<1x8x128xf32>,
    %c7 = arith.constant 7 : index
    %c0_62 = arith.constant 0 : index
    %c0_63 = arith.constant 0 : index
    %56 = vector.load %arg1[%c7, %c0_62, %c0_63] : memref<8x8x128xf32, #tpu.memory_space<vmem>>, vector<1x8x128xf32>
    %57 = vector.shape_cast %56 : vector<1x8x128xf32> to vector<8x128xf32>
    %c7_64 = arith.constant 7 : index
    %c0_65 = arith.constant 0 : index
    %c0_66 = arith.constant 0 : index
    %58 = vector.load %arg2[%c7_64, %c0_65, %c0_66] : memref<8x128x128xf32, #tpu.memory_space<vmem>>, vector<1x128x128xf32>
    %59 = vector.shape_cast %58 : vector<1x128x128xf32> to vector<128x128xf32>
    %cst_67 = arith.constant dense<0.000000e+00> : vector<8x128xf32>
    %60 = tpu.matmul %57, %59, %cst_67 {dimension_numbers = #tpu.dot_dimension_numbers<[1], [0], [0], [1], [0, 0, 1, 1], [], []>, precision = #tpu.contract_precision<fp32>} : vector<8x128xf32>, vector<128x128xf32>, vector<8x128xf32> -> vector<8x128xf32>
    %c7_68 = arith.constant 7 : index
    %c0_69 = arith.constant 0 : index
    %c0_70 = arith.constant 0 : index
    %61 = vector.load %arg3[%c7_68, %c0_69, %c0_70] : memref<8x8x128xf32, #tpu.memory_space<vmem>>, vector<1x8x128xf32>
    %62 = vector.shape_cast %61 : vector<1x8x128xf32> to vector<8x128xf32>
    %63 = vector.shape_cast %60 : vector<8x128xf32> to vector<1x8x128xf32>
    tpu.vector_store %arg3[%c7_68, %c0_69, %c0_70], %63 {strides = array<i32>} : memref<8x8x128xf32, #tpu.memory_space<vmem>>, vector<1x8x128xf32>,
    return
  }
  func.func @transform_0(%arg0: i32) -> (i32, i32, i32) {
    %c0_i32 = arith.constant 0 : i32
    %c0_i32_0 = arith.constant 0 : i32
    %c0_i32_1 = arith.constant 0 : i32
    return %arg0, %c0_i32, %c0_i32_0 : i32, i32, i32
  }
  func.func @transform_1(%arg0: i32) -> (i32, i32, i32) {
    %c0_i32 = arith.constant 0 : i32
    %c0_i32_0 = arith.constant 0 : i32
    %c0_i32_1 = arith.constant 0 : i32
    return %arg0, %c0_i32, %c0_i32_0 : i32, i32, i32
  }
  func.func @transform_2(%arg0: i32) -> (i32, i32, i32) {
    %c0_i32 = arith.constant 0 : i32
    %c0_i32_0 = arith.constant 0 : i32
    %c0_i32_1 = arith.constant 0 : i32
    return %arg0, %c0_i32, %c0_i32_0 : i32, i32, i32
  }
}

</mosaic_0001>

<llo_original>
// kernel: tpu_custom_call.1
$region0: #{tpu_custom_call.1}
  #allocation0 [shape = 'u32[]', space=smem, size = 0x4, offset = 0x4, fixed_abs, tag = 'smem constant byte address 0x4 - core index']
  #allocation1 [shape = 'u32[144,128]{1,0:T(1,128)}', space=vmem, size = 0x12000, scoped, tag = 'internal scratch']
  %s0 = inlined_call_operand.hbm [shape: f32[16,8,128], index: 0, kind: input, shape index: {}]
  %s1 = inlined_call_operand.hbm [shape: f32[16,128,128], index: 1, kind: input, shape index: {}]
  %s2 = inlined_call_operand.hbm [shape: f32[16,8,128], index: 2, kind: output, shape index: {}]
  %s3 = sld [smem:[#allocation0]]
  $region49: #{tpu_custom_call.1} parent=0
    _
  %s5 = ssub.s32 1, %s3
  %s6 = scalar_select 0, %s5, %s3
  $region1: #{tpu_custom_call.1} parent=0
    #allocation2 [shape = 'u8[65536]{0}', space=vmem, size = 0x10000, scoped, tag = 'input window, operand 0']
    #allocation3 [shape = 's32[2]{0}', space=sflag, size = 0x8, scoped, tag = 'scoped memory for tpu_custom_call.1']
    #allocation4 [shape = 's32[2]{0}', space=sflag, size = 0x8, scoped, tag = 'scoped memory for tpu_custom_call.1']
    #allocation5 [shape = 'u8[1048576]{0}', space=vmem, size = 0x100000, scoped, tag = 'input window, operand 1']
    #allocation6 [shape = 's32[2]{0}', space=sflag, size = 0x8, scoped, tag = 'scoped memory for tpu_custom_call.1']
    #allocation7 [shape = 'u8[65536]{0}', space=vmem, size = 0x10000, scoped, tag = 'output window, operand 0']
    %7 = vsyncpa [#allocation3], 0
    %s8 = scalar_lea.sflag [#allocation3], 1
    %9 = vsyncpa %s8, 0
    %10 = vsyncpa [#allocation6], 0
    %s11 = scalar_lea.sflag [#allocation6], 1
    %12 = vsyncpa %s11, 0
    %13 = vsyncpa [#allocation4], 0
    %s14 = scalar_lea.sflag [#allocation4], 1
    %15 = vsyncpa %s14, 0
    loop: start=0, step=1, limit=4
    $region2: #{tpu_custom_call.1} parent=1 // loop_pre_header
      _
    $region3: #{tpu_custom_call.1} parent=1 // loop_header
      %s17 = sphi 0, %s21
      %p18 = scmp.ge.s32.totalorder %s17, 4
      %s27 = sphi 0, %s29
      %s30 = sphi 0, %s27
      %s31 = sphi 0, %s30
      %s47 = sphi 0, %s31
      %s53 = sphi 0, %s55
      %s56 = sphi 0, %s53
      %s57 = sphi 0, %s56
      %s73 = sphi 0, %s57
      %s79 = sphi 0, %s81
      %s82 = sphi 0, %s79
      %s83 = sphi 0, %s82
      %s99 = sphi 0, %s83
    $region4: #{tpu_custom_call.1} parent=1 // loop_header_branch
      %20 = sbr.rel (%p18) target = $region8
    $region5: #{tpu_custom_call.1} parent=1 // loop_body
      %s22 = ssub.s32 %s17, 1
      %s23 = ssub.s32 %s17, 2
      %s24 = sadd.s32 %s17, 1
      %s25 = ssub.s32 %s17, %s24
      %p26 = scmp.eq.s32.totalorder %s25, 0
      %s28 = sadd.s32 %s27, 1
      %s29 = scalar_select %p26, %s27, %s28
      %p32 = pneg %p26
      %p33 = scmp.eq.s32.totalorder %s17, 1
      %p34 = por %p32, %p33
      %p35 = scmp.ne.s32.totalorder %s27, %s30
      %p36 = scmp.eq.s32.totalorder %s17, 0
      %p37 = por %p35, %p36
      %p38 = scmp.ne.s32.totalorder %s27, %s30
      %p39 = scmp.eq.s32.totalorder %s22, 1
      %p40 = por %p38, %p39
      %p41 = scmp.ne.s32.totalorder %s30, %s31
      %p42 = scmp.eq.s32.totalorder %s22, 0
      %p43 = por %p41, %p42
      %p44 = scmp.ne.s32.totalorder %s30, %s31
      %p45 = scmp.eq.s32.totalorder %s23, 1
      %p46 = por %p44, %p45
      %p48 = scmp.ne.s32.totalorder %s31, %s47
      %p49 = scmp.eq.s32.totalorder %s23, 0
      %p50 = por %p48, %p49
      %s51 = ssub.s32 %s17, %s24
      %p52 = scmp.eq.s32.totalorder %s51, 0
      %s54 = sadd.s32 %s53, 1
      %s55 = scalar_select %p52, %s53, %s54
      %p58 = pneg %p52
      %p59 = scmp.eq.s32.totalorder %s17, 1
      %p60 = por %p58, %p59
      %p61 = scmp.ne.s32.totalorder %s53, %s56
      %p62 = scmp.eq.s32.totalorder %s17, 0
      %p63 = por %p61, %p62
      %p64 = scmp.ne.s32.totalorder %s53, %s56
      %p65 = scmp.eq.s32.totalorder %s22, 1
      %p66 = por %p64, %p65
      %p67 = scmp.ne.s32.totalorder %s56, %s57
      %p68 = scmp.eq.s32.totalorder %s22, 0
      %p69 = por %p67, %p68
      %p70 = scmp.ne.s32.totalorder %s56, %s57
      %p71 = scmp.eq.s32.totalorder %s23, 1
      %p72 = por %p70, %p71
      %p74 = scmp.ne.s32.totalorder %s57, %s73
      %p75 = scmp.eq.s32.totalorder %s23, 0
      %p76 = por %p74, %p75
      %s77 = ssub.s32 %s17, %s24
      %p78 = scmp.eq.s32.totalorder %s77, 0
      %s80 = sadd.s32 %s79, 1
      %s81 = scalar_select %p78, %s79, %s80
      %p84 = pneg %p78
      %p85 = scmp.eq.s32.totalorder %s17, 1
      %p86 = por %p84, %p85
      %p87 = scmp.ne.s32.totalorder %s79, %s82
      %p88 = scmp.eq.s32.totalorder %s17, 0
      %p89 = por %p87, %p88
      %p90 = scmp.ne.s32.totalorder %s79, %s82
      %p91 = scmp.eq.s32.totalorder %s22, 1
      %p92 = por %p90, %p91
      %p93 = scmp.ne.s32.totalorder %s82, %s83
      %p94 = scmp.eq.s32.totalorder %s22, 0
      %p95 = por %p93, %p94
      %p96 = scmp.ne.s32.totalorder %s82, %s83
      %p97 = scmp.eq.s32.totalorder %s23, 1
      %p98 = por %p96, %p97
      %p100 = scmp.ne.s32.totalorder %s83, %s99
      %p101 = scmp.eq.s32.totalorder %s23, 0
      %p102 = por %p100, %p101
      %p103 = scmp.le.s32.totalorder 1, %s17
      %p104 = scmp.lt.s32.totalorder %s17, 3
      %p105 = pnand %p103, %p104
      %p106 = pneg %p105
      // Predicated region
      $region9: #{tpu_custom_call.1} parent=5 // pred_check
        _
      $region10: #{tpu_custom_call.1} parent=5 // pred_check_branch
        %108 = sbr.rel (%p105) target = $region12
      $region11: #{tpu_custom_call.1} parent=5 // pred_region
        %s109 = ssub.s32 %s17, 1
      $region12: #{tpu_custom_call.1} parent=5 // pred_fallthru
        _
      %p110 = scmp.lt.s32.totalorder %s17, 2
      // Predicated region
      $region13: #{tpu_custom_call.1} parent=5 // pred_check
        %p111 = pneg %p110
      $region14: #{tpu_custom_call.1} parent=5 // pred_check_branch
        %113 = sbr.rel (%p111) target = $region16
      $region15: #{tpu_custom_call.1} parent=5 // pred_region
        // Predicated region
        $region17: #{tpu_custom_call.1} parent=15 // pred_check
          %p114 = pneg %p37
        $region18: #{tpu_custom_call.1} parent=15 // pred_check_branch
          %116 = sbr.rel (%p114) target = $region20
        $region19: #{tpu_custom_call.1} parent=15 // pred_region
          %s117 = sand.u32 %s27, 1
          %s118 = scalar_lea.sflag [#allocation3], %s117
          %s119 = sand.u32 %s27, 1
          %s120 = smul.addr %s119, 64
          %s121 = scalar_lea.vmem [#allocation2], %s120
          %s122 = smul.u32 8, %s17
          %s124 = ssub.s32 1024, 1024
          %125 = vsyncadd %s118, %s124
          %s126 = smul.addr %s122, 128
          %s127 = scalar_lea.hbm %s0, %s126
          %s128 = sshll.u32 %s121, 4
          %s129 = int_to_ptr.vmem [resolvable:$true] %s128
          %134 = dma.hbm_to_vmem [thread:$0]  %s127, 1024, %s129, %s118, 128, 128, 8
        $region20: #{tpu_custom_call.1} parent=15 // pred_fallthru
          _
        // Predicated region
        $region21: #{tpu_custom_call.1} parent=15 // pred_check
          %p135 = pneg %p63
        $region22: #{tpu_custom_call.1} parent=15 // pred_check_branch
          %137 = sbr.rel (%p135) target = $region24
        $region23: #{tpu_custom_call.1} parent=15 // pred_region
          %s138 = sand.u32 %s53, 1
          %s139 = scalar_lea.sflag [#allocation6], %s138
          %s140 = sand.u32 %s53, 1
          %s141 = smul.addr %s140, 1024
          %s142 = scalar_lea.vmem [#allocation5], %s141
          %s143 = smul.u32 8, %s17
          %s145 = ssub.s32 16384, 16384
          %146 = vsyncadd %s139, %s145
          %s147 = smul.addr %s143, 16
          %s148 = smul.addr %s147, 128
          %s149 = scalar_lea.hbm %s1, %s148
          %s150 = sshll.u32 %s142, 4
          %s151 = int_to_ptr.vmem [resolvable:$true] %s150
          %156 = dma.hbm_to_vmem [thread:$0]  %s149, 16384, %s151, %s139, 128, 128, 8
        $region24: #{tpu_custom_call.1} parent=15 // pred_fallthru
          _
      $region16: #{tpu_custom_call.1} parent=5 // pred_fallthru
        _
      %p157 = scmp.le.s32.totalorder 1, %s17
      %p158 = scmp.lt.s32.totalorder %s17, 3
      %p159 = pnand %p157, %p158
      %p160 = pneg %p159
      // Predicated region
      $region25: #{tpu_custom_call.1} parent=5 // pred_check
        _
      $region26: #{tpu_custom_call.1} parent=5 // pred_check_branch
        %162 = sbr.rel (%p159) target = $region28
      $region27: #{tpu_custom_call.1} parent=5 // pred_region
        %s163 = ssub.s32 %s17, 1
        %s164 = sand.u32 %s30, 1
        %s165 = scalar_lea.sflag [#allocation3], %s164
        %s166 = sand.u32 %s30, 1
        %s167 = smul.addr %s166, 64
        %s168 = scalar_lea.vmem [#allocation2], %s167
        // Predicated region
        $region29: #{tpu_custom_call.1} parent=27 // pred_check
          %p169 = pneg %p43
        $region30: #{tpu_custom_call.1} parent=27 // pred_check_branch
          %171 = sbr.rel (%p169) target = $region32
        $region31: #{tpu_custom_call.1} parent=27 // pred_region
          %172 = dma.done %s165, 1024
        $region32: #{tpu_custom_call.1} parent=27 // pred_fallthru
          _
        %s173 = sand.u32 %s56, 1
        %s174 = scalar_lea.sflag [#allocation6], %s173
        %s175 = sand.u32 %s56, 1
        %s176 = smul.addr %s175, 1024
        %s177 = scalar_lea.vmem [#allocation5], %s176
        // Predicated region
        $region33: #{tpu_custom_call.1} parent=27 // pred_check
          %p178 = pneg %p69
        $region34: #{tpu_custom_call.1} parent=27 // pred_check_branch
          %180 = sbr.rel (%p178) target = $region36
        $region35: #{tpu_custom_call.1} parent=27 // pred_region
          %181 = dma.done %s174, 16384
        $region36: #{tpu_custom_call.1} parent=27 // pred_fallthru
          _
        %s182 = sand.u32 %s30, 1
        %s183 = scalar_lea.sflag [#allocation3], %s182
        %s184 = sand.u32 %s30, 1
        %s185 = smul.addr %s184, 64
        %s186 = scalar_lea.vmem [#allocation2], %s185
        %p187 = pneg %p43
        %p188 = pneg %p40
        %s189 = sand.u32 %s56, 1
        %s190 = scalar_lea.sflag [#allocation6], %s189
        %s191 = sand.u32 %s56, 1
        %s192 = smul.addr %s191, 1024
        %s193 = scalar_lea.vmem [#allocation5], %s192
        %p194 = pneg %p69
        %p195 = pneg %p66
        %p196 = pneg %p95
        %p197 = pneg %p92
        %s198 = sand.u32 %s82, 1
        %s199 = scalar_lea.sflag [#allocation4], %s198
        %s200 = sand.u32 %s82, 1
        %s201 = smul.addr %s200, 64
        %s202 = scalar_lea.vmem [#allocation7], %s201
        %s203 = smul.u32 8, %s22
        %s204 = smul.u32 8, %s22
        %s205 = smul.u32 8, %s22
        %v206 = vld [vmem:[%s168] sm:$0xff]
        %v207 = vld [vmem:[%s177] sm:$0xff]
        %v208 = vld [vmem:[%s177 + $0x8] sm:$0xff]
        %v209 = vld [vmem:[%s177 + $0x10] sm:$0xff]
        %v210 = vld [vmem:[%s177 + $0x18] sm:$0xff]
        %v211 = vld [vmem:[%s177 + $0x20] sm:$0xff]
        %v212 = vld [vmem:[%s177 + $0x28] sm:$0xff]
        %v213 = vld [vmem:[%s177 + $0x30] sm:$0xff]
        %v214 = vld [vmem:[%s177 + $0x38] sm:$0xff]
        %v215 = vld [vmem:[%s177 + $0x40] sm:$0xff]
        %v216 = vld [vmem:[%s177 + $0x48] sm:$0xff]
        %v217 = vld [vmem:[%s177 + $0x50] sm:$0xff]
        %v218 = vld [vmem:[%s177 + $0x58] sm:$0xff]
        %v219 = vld [vmem:[%s177 + $0x60] sm:$0xff]
        %v220 = vld [vmem:[%s177 + $0x68] sm:$0xff]
        %v221 = vld [vmem:[%s177 + $0x70] sm:$0xff]
        %v222 = vld [vmem:[%s177 + $0x78] sm:$0xff]
        %223 = vmatprep.subr.mxu0 0.0
        %v224 = vand.u32 %v207, 4294901760
        %225 = vmatpush1.msra.mxu0 %v224
        %226 = vmatprep.subr.mxu0 0.0
        %v227 = vand.u32 %v208, 4294901760
        %228 = vmatpush1.msra.mxu0 %v227
        %229 = vmatprep.subr.mxu0 0.0
        %v230 = vand.u32 %v209, 4294901760
        %231 = vmatpush1.msra.mxu0 %v230
        %232 = vmatprep.subr.mxu0 0.0
        %v233 = vand.u32 %v210, 4294901760
        %234 = vmatpush1.msra.mxu0 %v233
        %235 = vmatprep.subr.mxu0 0.0
        %v236 = vand.u32 %v211, 4294901760
        %237 = vmatpush1.msra.mxu0 %v236
        %238 = vmatprep.subr.mxu0 0.0
        %v239 = vand.u32 %v212, 4294901760
        %240 = vmatpush1.msra.mxu0 %v239
        %241 = vmatprep.subr.mxu0 0.0
        %v242 = vand.u32 %v213, 4294901760
        %243 = vmatpush1.msra.mxu0 %v242
        %244 = vmatprep.subr.mxu0 0.0
        %v245 = vand.u32 %v214, 4294901760
        %246 = vmatpush1.msra.mxu0 %v245
        %247 = vmatprep.subr.mxu0 0.0
        %v248 = vand.u32 %v215, 4294901760
        %249 = vmatpush1.msra.mxu0 %v248
        %250 = vmatprep.subr.mxu0 0.0
        %v251 = vand.u32 %v216, 4294901760
        %252 = vmatpush1.msra.mxu0 %v251
        %253 = vmatprep.subr.mxu0 0.0
        %v254 = vand.u32 %v217, 4294901760
        %255 = vmatpush1.msra.mxu0 %v254
        %256 = vmatprep.subr.mxu0 0.0
        %v257 = vand.u32 %v218, 4294901760
        %258 = vmatpush1.msra.mxu0 %v257
        %259 = vmatprep.subr.mxu0 0.0
        %v260 = vand.u32 %v219, 4294901760
        %261 = vmatpush1.msra.mxu0 %v260
        %262 = vmatprep.subr.mxu0 0.0
        %v263 = vand.u32 %v220, 4294901760
        %264 = vmatpush1.msra.mxu0 %v263
        %265 = vmatprep.subr.mxu0 0.0
        %v266 = vand.u32 %v221, 4294901760
        %267 = vmatpush1.msra.mxu0 %v266
        %268 = vmatprep.subr.mxu0 0.0
        %v269 = vand.u32 %v222, 4294901760
        %270 = vmatpush1.msra.mxu0 %v269
        %271 = vmatprep.subr.mxu0 0.0
        %272 = vmatpush1.msra.mxu0 0.0
        %273 = vmatprep.subr.mxu0 0.0
        %274 = vmatpush1.msra.mxu0 0.0
        %275 = vmatprep.subr.mxu0 0.0
        %276 = vmatpush1.msra.mxu0 0.0
        %277 = vmatprep.subr.mxu0 0.0
        %278 = vmatpush1.msra.mxu0 0.0
        %279 = vmatprep.subr.mxu0 0.0
        %280 = vmatpush1.msra.mxu0 0.0
        %281 = vmatprep.subr.mxu0 0.0
        %282 = vmatpush1.msra.mxu0 0.0
        %283 = vmatprep.subr.mxu0 0.0
        %284 = vmatpush1.msra.mxu0 0.0
        %285 = vmatprep.subr.mxu0 0.0
        %286 = vmatpush1.msra.mxu0 0.0
        %287 = vmatprep.subr.mxu0 0.0
        %288 = vmatpush1.msra.mxu0 0.0
        %289 = vmatprep.subr.mxu0 0.0
        %290 = vmatpush1.msra.mxu0 0.0
        %291 = vmatprep.subr.mxu0 0.0
        %292 = vmatpush1.msra.mxu0 0.0
        %293 = vmatprep.subr.mxu0 0.0
        %294 = vmatpush1.msra.mxu0 0.0
        %295 = vmatprep.subr.mxu0 0.0
        %296 = vmatpush1.msra.mxu0 0.0
        %297 = vmatprep.subr.mxu0 0.0
        %298 = vmatpush1.msra.mxu0 0.0
        %299 = vmatprep.subr.mxu0 0.0
        %300 = vmatpush1.msra.mxu0 0.0
        %301 = vmatprep.subr.mxu0 0.0
        %302 = vmatpush1.msra.mxu0 0.0
        %303 = vmatprep.mubr.f32.mxu0 0.0
        %v304 = vand.u32 %v206, 4294901760
        %v305 = vsub.f32 %v206, %v304
        %v306 = vand.u32 %v305, 4294901760
        %v307 = vsub.f32 %v305, %v306
        %v308 = vand.u32 %v307, 4294901760
        %309 = vmatmul.mubr.f32.gmra.mrb[0].mxu0 %v308
        %v310 = vpop.f32.mrb[0].mxu0
        %v311 = vadd.f32 0.0, %v310
        %v312 = vpop.f32.mrb[0].mxu0
        %313 = vdwg.mxu0
        %314 = vmatprep.subr.mxu0 0.0
        %v315 = vand.u32 %v207, 4294901760
        %v316 = vsub.f32 %v207, %v315
        %v317 = vand.u32 %v316, 4294901760
        %v318 = vsub.f32 %v316, %v317
        %v319 = vand.u32 %v318, 4294901760
        %320 = vmatpush1.msra.mxu0 %v319
        %321 = vmatprep.subr.mxu0 0.0
        %v322 = vand.u32 %v208, 4294901760
        %v323 = vsub.f32 %v208, %v322
        %v324 = vand.u32 %v323, 4294901760
        %v325 = vsub.f32 %v323, %v324
        %v326 = vand.u32 %v325, 4294901760
        %327 = vmatpush1.msra.mxu0 %v326
        %328 = vmatprep.subr.mxu0 0.0
        %v329 = vand.u32 %v209, 4294901760
        %v330 = vsub.f32 %v209, %v329
        %v331 = vand.u32 %v330, 4294901760
        %v332 = vsub.f32 %v330, %v331
        %v333 = vand.u32 %v332, 4294901760
        %334 = vmatpush1.msra.mxu0 %v333
        %335 = vmatprep.subr.mxu0 0.0
        %v336 = vand.u32 %v210, 4294901760
        %v337 = vsub.f32 %v210, %v336
        %v338 = vand.u32 %v337, 4294901760
        %v339 = vsub.f32 %v337, %v338
        %v340 = vand.u32 %v339, 4294901760
        %341 = vmatpush1.msra.mxu0 %v340
        %342 = vmatprep.subr.mxu0 0.0
        %v343 = vand.u32 %v211, 4294901760
        %v344 = vsub.f32 %v211, %v343
        %v345 = vand.u32 %v344, 4294901760
        %v346 = vsub.f32 %v344, %v345
        %v347 = vand.u32 %v346, 4294901760
        %348 = vmatpush1.msra.mxu0 %v347
        %349 = vmatprep.subr.mxu0 0.0
        %v350 = vand.u32 %v212, 4294901760
        %v351 = vsub.f32 %v212, %v350
        %v352 = vand.u32 %v351, 4294901760
        %v353 = vsub.f32 %v351, %v352
        %v354 = vand.u32 %v353, 4294901760
        %355 = vmatpush1.msra.mxu0 %v354
        %356 = vmatprep.subr.mxu0 0.0
        %v357 = vand.u32 %v213, 4294901760
        %v358 = vsub.f32 %v213, %v357
        %v359 = vand.u32 %v358, 4294901760
        %v360 = vsub.f32 %v358, %v359
        %v361 = vand.u32 %v360, 4294901760
        %362 = vmatpush1.msra.mxu0 %v361
        %363 = vmatprep.subr.mxu0 0.0
        %v364 = vand.u32 %v214, 4294901760
        %v365 = vsub.f32 %v214, %v364
        %v366 = vand.u32 %v365, 4294901760
        %v367 = vsub.f32 %v365, %v366
        %v368 = vand.u32 %v367, 4294901760
        %369 = vmatpush1.msra.mxu0 %v368
        %370 = vmatprep.subr.mxu0 0.0
        %v371 = vand.u32 %v215, 4294901760
        %v372 = vsub.f32 %v215, %v371
        %v373 = vand.u32 %v372, 4294901760
        %v374 = vsub.f32 %v372, %v373
        %v375 = vand.u32 %v374, 4294901760
        %376 = vmatpush1.msra.mxu0 %v375
        %377 = vmatprep.subr.mxu0 0.0
        %v378 = vand.u32 %v216, 4294901760
        %v379 = vsub.f32 %v216, %v378
        %v380 = vand.u32 %v379, 4294901760
        %v381 = vsub.f32 %v379, %v380
        %v382 = vand.u32 %v381, 4294901760
        %383 = vmatpush1.msra.mxu0 %v382
        %384 = vmatprep.subr.mxu0 0.0
        %v385 = vand.u32 %v217, 4294901760
        %v386 = vsub.f32 %v217, %v385
        %v387 = vand.u32 %v386, 4294901760
        %v388 = vsub.f32 %v386, %v387
        %v389 = vand.u32 %v388, 4294901760
        %390 = vmatpush1.msra.mxu0 %v389
        %391 = vmatprep.subr.mxu0 0.0
        %v392 = vand.u32 %v218, 4294901760
        %v393 = vsub.f32 %v218, %v392
        %v394 = vand.u32 %v393, 4294901760
        %v395 = vsub.f32 %v393, %v394
        %v396 = vand.u32 %v395, 4294901760
        %397 = vmatpush1.msra.mxu0 %v396
        %398 = vmatprep.subr.mxu0 0.0
        %v399 = vand.u32 %v219, 4294901760
        %v400 = vsub.f32 %v219, %v399
        %v401 = vand.u32 %v400, 4294901760
        %v402 = vsub.f32 %v400, %v401
        %v403 = vand.u32 %v402, 4294901760
        %404 = vmatpush1.msra.mxu0 %v403
        %405 = vmatprep.subr.mxu0 0.0
        %v406 = vand.u32 %v220, 4294901760
        %v407 = vsub.f32 %v220, %v406
        %v408 = vand.u32 %v407, 4294901760
        %v409 = vsub.f32 %v407, %v408
        %v410 = vand.u32 %v409, 4294901760
        %411 = vmatpush1.msra.mxu0 %v410
        %412 = vmatprep.subr.mxu0 0.0
        %v413 = vand.u32 %v221, 4294901760
        %v414 = vsub.f32 %v221, %v413
        %v415 = vand.u32 %v414, 4294901760
        %v416 = vsub.f32 %v414, %v415
        %v417 = vand.u32 %v416, 4294901760
        %418 = vmatpush1.msra.mxu0 %v417
        %419 = vmatprep.subr.mxu0 0.0
        %v420 = vand.u32 %v222, 4294901760
        %v421 = vsub.f32 %v222, %v420
        %v422 = vand.u32 %v421, 4294901760
        %v423 = vsub.f32 %v421, %v422
        %v424 = vand.u32 %v423, 4294901760
        %425 = vmatpush1.msra.mxu0 %v424
        %426 = vmatprep.subr.mxu0 0.0
        %427 = vmatpush1.msra.mxu0 0.0
        %428 = vmatprep.subr.mxu0 0.0
        %429 = vmatpush1.msra.mxu0 0.0
        %430 = vmatprep.subr.mxu0 0.0
        %431 = vmatpush1.msra.mxu0 0.0
        %432 = vmatprep.subr.mxu0 0.0
        %433 = vmatpush1.msra.mxu0 0.0
        %434 = vmatprep.subr.mxu0 0.0
        %435 = vmatpush1.msra.mxu0 0.0
        %436 = vmatprep.subr.mxu0 0.0
        %437 = vmatpush1.msra.mxu0 0.0
        %438 = vmatprep.subr.mxu0 0.0
        %439 = vmatpush1.msra.mxu0 0.0
        %440 = vmatprep.subr.mxu0 0.0
        %441 = vmatpush1.msra.mxu0 0.0
        %442 = vmatprep.subr.mxu0 0.0
        %443 = vmatpush1.msra.mxu0 0.0
        %444 = vmatprep.subr.mxu0 0.0
        %445 = vmatpush1.msra.mxu0 0.0
        %446 = vmatprep.subr.mxu0 0.0
        %447 = vmatpush1.msra.mxu0 0.0
        %448 = vmatprep.subr.mxu0 0.0
        %449 = vmatpush1.msra.mxu0 0.0
        %450 = vmatprep.subr.mxu0 0.0
        %451 = vmatpush1.msra.mxu0 0.0
        %452 = vmatprep.subr.mxu0 0.0
        %453 = vmatpush1.msra.mxu0 0.0
        %454 = vmatprep.subr.mxu0 0.0
        %455 = vmatpush1.msra.mxu0 0.0
        %456 = vmatprep.subr.mxu0 0.0
        %457 = vmatpush1.msra.mxu0 0.0
        %458 = vmatprep.mubr.f32.mxu0 0.0
        %v459 = vand.u32 %v206, 4294901760
        %460 = vmatmul.mubr.f32.gmra.mrb[0].mxu0 %v459
        %v461 = vpop.f32.mrb[0].mxu0
        %v462 = vadd.f32 %v311, %v461
        %v463 = vpop.f32.mrb[0].mxu0
        %464 = vdwg.mxu0
        %465 = vmatprep.subr.mxu0 0.0
        %v466 = vand.u32 %v207, 4294901760
        %v467 = vsub.f32 %v207, %v466
        %468 = vmatpush1.msra.mxu0 %v467
        %469 = vmatprep.subr.mxu0 0.0
        %v470 = vand.u32 %v208, 4294901760
        %v471 = vsub.f32 %v208, %v470
        %472 = vmatpush1.msra.mxu0 %v471
        %473 = vmatprep.subr.mxu0 0.0
        %v474 = vand.u32 %v209, 4294901760
        %v475 = vsub.f32 %v209, %v474
        %476 = vmatpush1.msra.mxu0 %v475
        %477 = vmatprep.subr.mxu0 0.0
        %v478 = vand.u32 %v210, 4294901760
        %v479 = vsub.f32 %v210, %v478
        %480 = vmatpush1.msra.mxu0 %v479
        %481 = vmatprep.subr.mxu0 0.0
        %v482 = vand.u32 %v211, 4294901760
        %v483 = vsub.f32 %v211, %v482
        %484 = vmatpush1.msra.mxu0 %v483
        %485 = vmatprep.subr.mxu0 0.0
        %v486 = vand.u32 %v212, 4294901760
        %v487 = vsub.f32 %v212, %v486
        %488 = vmatpush1.msra.mxu0 %v487
        %489 = vmatprep.subr.mxu0 0.0
        %v490 = vand.u32 %v213, 4294901760
        %v491 = vsub.f32 %v213, %v490
        %492 = vmatpush1.msra.mxu0 %v491
        %493 = vmatprep.subr.mxu0 0.0
        %v494 = vand.u32 %v214, 4294901760
        %v495 = vsub.f32 %v214, %v494
        %496 = vmatpush1.msra.mxu0 %v495
        %497 = vmatprep.subr.mxu0 0.0
        %v498 = vand.u32 %v215, 4294901760
        %v499 = vsub.f32 %v215, %v498
        %500 = vmatpush1.msra.mxu0 %v499
        %501 = vmatprep.subr.mxu0 0.0
        %v502 = vand.u32 %v216, 4294901760
        %v503 = vsub.f32 %v216, %v502
        %504 = vmatpush1.msra.mxu0 %v503
        %505 = vmatprep.subr.mxu0 0.0
        %v506 = vand.u32 %v217, 4294901760
        %v507 = vsub.f32 %v217, %v506
        %508 = vmatpush1.msra.mxu0 %v507
        %509 = vmatprep.subr.mxu0 0.0
        %v510 = vand.u32 %v218, 4294901760
        %v511 = vsub.f32 %v218, %v510
        %512 = vmatpush1.msra.mxu0 %v511
        %513 = vmatprep.subr.mxu0 0.0
        %v514 = vand.u32 %v219, 4294901760
        %v515 = vsub.f32 %v219, %v514
        %516 = vmatpush1.msra.mxu0 %v515
        %517 = vmatprep.subr.mxu0 0.0
        %v518 = vand.u32 %v220, 4294901760
        %v519 = vsub.f32 %v220, %v518
        %520 = vmatpush1.msra.mxu0 %v519
        %521 = vmatprep.subr.mxu0 0.0
        %v522 = vand.u32 %v221, 4294901760
        %v523 = vsub.f32 %v221, %v522
        %524 = vmatpush1.msra.mxu0 %v523
        %525 = vmatprep.subr.mxu0 0.0
        %v526 = vand.u32 %v222, 4294901760
        %v527 = vsub.f32 %v222, %v526
        %528 = vmatpush1.msra.mxu0 %v527
        %529 = vmatprep.subr.mxu0 0.0
        %530 = vmatpush1.msra.mxu0 0.0
        %531 = vmatprep.subr.mxu0 0.0
        %532 = vmatpush1.msra.mxu0 0.0
        %533 = vmatprep.subr.mxu0 0.0
        %534 = vmatpush1.msra.mxu0 0.0
        %535 = vmatprep.subr.mxu0 0.0
        %536 = vmatpush1.msra.mxu0 0.0
        %537 = vmatprep.subr.mxu0 0.0
        %538 = vmatpush1.msra.mxu0 0.0
        %539 = vmatprep.subr.mxu0 0.0
        %540 = vmatpush1.msra.mxu0 0.0
        %541 = vmatprep.subr.mxu0 0.0
        %542 = vmatpush1.msra.mxu0 0.0
        %543 = vmatprep.subr.mxu0 0.0
        %544 = vmatpush1.msra.mxu0 0.0
        %545 = vmatprep.subr.mxu0 0.0
        %546 = vmatpush1.msra.mxu0 0.0
        %547 = vmatprep.subr.mxu0 0.0
        %548 = vmatpush1.msra.mxu0 0.0
        %549 = vmatprep.subr.mxu0 0.0
        %550 = vmatpush1.msra.mxu0 0.0
        %551 = vmatprep.subr.mxu0 0.0
        %552 = vmatpush1.msra.mxu0 0.0
        %553 = vmatprep.subr.mxu0 0.0
        %554 = vmatpush1.msra.mxu0 0.0
        %555 = vmatprep.subr.mxu0 0.0
        %556 = vmatpush1.msra.mxu0 0.0
        %557 = vmatprep.subr.mxu0 0.0
        %558 = vmatpush1.msra.mxu0 0.0
        %559 = vmatprep.subr.mxu0 0.0
        %560 = vmatpush1.msra.mxu0 0.0
        %561 = vmatprep.mubr.f32.mxu0 0.0
        %v562 = vand.u32 %v206, 4294901760
        %v563 = vsub.f32 %v206, %v562
        %564 = vmatmul.mubr.f32.gmra.mrb[0].mxu0 %v563
        %v565 = vpop.f32.mrb[0].mxu0
        %v566 = vadd.f32 %v462, %v565
        %v567 = vpop.f32.mrb[0].mxu0
        %568 = vdwg.mxu0
        %569 = vmatprep.subr.mxu0 0.0
        %v570 = vand.u32 %v207, 4294901760
        %571 = vmatpush1.msra.mxu0 %v570
        %572 = vmatprep.subr.mxu0 0.0
        %v573 = vand.u32 %v208, 4294901760
        %574 = vmatpush1.msra.mxu0 %v573
        %575 = vmatprep.subr.mxu0 0.0
        %v576 = vand.u32 %v209, 4294901760
        %577 = vmatpush1.msra.mxu0 %v576
        %578 = vmatprep.subr.mxu0 0.0
        %v579 = vand.u32 %v210, 4294901760
        %580 = vmatpush1.msra.mxu0 %v579
        %581 = vmatprep.subr.mxu0 0.0
        %v582 = vand.u32 %v211, 4294901760
        %583 = vmatpush1.msra.mxu0 %v582
        %584 = vmatprep.subr.mxu0 0.0
        %v585 = vand.u32 %v212, 4294901760
        %586 = vmatpush1.msra.mxu0 %v585
        %587 = vmatprep.subr.mxu0 0.0
        %v588 = vand.u32 %v213, 4294901760
        %589 = vmatpush1.msra.mxu0 %v588
        %590 = vmatprep.subr.mxu0 0.0
        %v591 = vand.u32 %v214, 4294901760
        %592 = vmatpush1.msra.mxu0 %v591
        %593 = vmatprep.subr.mxu0 0.0
        %v594 = vand.u32 %v215, 4294901760
        %595 = vmatpush1.msra.mxu0 %v594
        %596 = vmatprep.subr.mxu0 0.0
        %v597 = vand.u32 %v216, 4294901760
        %598 = vmatpush1.msra.mxu0 %v597
        %599 = vmatprep.subr.mxu0 0.0
        %v600 = vand.u32 %v217, 4294901760
        %601 = vmatpush1.msra.mxu0 %v600
        %602 = vmatprep.subr.mxu0 0.0
        %v603 = vand.u32 %v218, 4294901760
        %604 = vmatpush1.msra.mxu0 %v603
        %605 = vmatprep.subr.mxu0 0.0
        %v606 = vand.u32 %v219, 4294901760
        %607 = vmatpush1.msra.mxu0 %v606
        %608 = vmatprep.subr.mxu0 0.0
        %v609 = vand.u32 %v220, 4294901760
        %610 = vmatpush1.msra.mxu0 %v609
        %611 = vmatprep.subr.mxu0 0.0
        %v612 = vand.u32 %v221, 4294901760
        %613 = vmatpush1.msra.mxu0 %v612
        %614 = vmatprep.subr.mxu0 0.0
        %v615 = vand.u32 %v222, 4294901760
        %616 = vmatpush1.msra.mxu0 %v615
        %617 = vmatprep.subr.mxu0 0.0
        %618 = vmatpush1.msra.mxu0 0.0
        %619 = vmatprep.subr.mxu0 0.0
        %620 = vmatpush1.msra.mxu0 0.0
        %621 = vmatprep.subr.mxu0 0.0
        %622 = vmatpush1.msra.mxu0 0.0
        %623 = vmatprep.subr.mxu0 0.0
        %624 = vmatpush1.msra.mxu0 0.0
        %625 = vmatprep.subr.mxu0 0.0
        %626 = vmatpush1.msra.mxu0 0.0
        %627 = vmatprep.subr.mxu0 0.0
        %628 = vmatpush1.msra.mxu0 0.0
        %629 = vmatprep.subr.mxu0 0.0
        %630 = vmatpush1.msra.mxu0 0.0
        %631 = vmatprep.subr.mxu0 0.0
        %632 = vmatpush1.msra.mxu0 0.0
        %633 = vmatprep.subr.mxu0 0.0
        %634 = vmatpush1.msra.mxu0 0.0
        %635 = vmatprep.subr.mxu0 0.0
        %636 = vmatpush1.msra.mxu0 0.0
        %637 = vmatprep.subr.mxu0 0.0
        %638 = vmatpush1.msra.mxu0 0.0
        %639 = vmatprep.subr.mxu0 0.0
        %640 = vmatpush1.msra.mxu0 0.0
        %641 = vmatprep.subr.mxu0 0.0
        %642 = vmatpush1.msra.mxu0 0.0
        %643 = vmatprep.subr.mxu0 0.0
        %644 = vmatpush1.msra.mxu0 0.0
        %645 = vmatprep.subr.mxu0 0.0
        %646 = vmatpush1.msra.mxu0 0.0
        %647 = vmatprep.subr.mxu0 0.0
        %648 = vmatpush1.msra.mxu0 0.0
        %649 = vmatprep.mubr.f32.mxu0 0.0
        %v650 = vand.u32 %v206, 4294901760
        %v651 = vsub.f32 %v206, %v650
        %v652 = vand.u32 %v651, 4294901760
        %653 = vmatmul.mubr.f32.gmra.mrb[0].mxu0 %v652
        %v654 = vpop.f32.mrb[0].mxu0
        %v655 = vadd.f32 %v566, %v654
        %v656 = vpop.f32.mrb[0].mxu0
        %657 = vdwg.mxu0
        %658 = vmatprep.subr.mxu0 0.0
        %v659 = vand.u32 %v207, 4294901760
        %v660 = vsub.f32 %v207, %v659
        %v661 = vand.u32 %v660, 4294901760
        %662 = vmatpush1.msra.mxu0 %v661
        %663 = vmatprep.subr.mxu0 0.0
        %v664 = vand.u32 %v208, 4294901760
        %v665 = vsub.f32 %v208, %v664
        %v666 = vand.u32 %v665, 4294901760
        %667 = vmatpush1.msra.mxu0 %v666
        %668 = vmatprep.subr.mxu0 0.0
        %v669 = vand.u32 %v209, 4294901760
        %v670 = vsub.f32 %v209, %v669
        %v671 = vand.u32 %v670, 4294901760
        %672 = vmatpush1.msra.mxu0 %v671
        %673 = vmatprep.subr.mxu0 0.0
        %v674 = vand.u32 %v210, 4294901760
        %v675 = vsub.f32 %v210, %v674
        %v676 = vand.u32 %v675, 4294901760
        %677 = vmatpush1.msra.mxu0 %v676
        %678 = vmatprep.subr.mxu0 0.0
        %v679 = vand.u32 %v211, 4294901760
        %v680 = vsub.f32 %v211, %v679
        %v681 = vand.u32 %v680, 4294901760
        %682 = vmatpush1.msra.mxu0 %v681
        %683 = vmatprep.subr.mxu0 0.0
        %v684 = vand.u32 %v212, 4294901760
        %v685 = vsub.f32 %v212, %v684
        %v686 = vand.u32 %v685, 4294901760
        %687 = vmatpush1.msra.mxu0 %v686
        %688 = vmatprep.subr.mxu0 0.0
        %v689 = vand.u32 %v213, 4294901760
        %v690 = vsub.f32 %v213, %v689
        %v691 = vand.u32 %v690, 4294901760
        %692 = vmatpush1.msra.mxu0 %v691
        %693 = vmatprep.subr.mxu0 0.0
        %v694 = vand.u32 %v214, 4294901760
        %v695 = vsub.f32 %v214, %v694
        %v696 = vand.u32 %v695, 4294901760
        %697 = vmatpush1.msra.mxu0 %v696
        %698 = vmatprep.subr.mxu0 0.0
        %v699 = vand.u32 %v215, 4294901760
        %v700 = vsub.f32 %v215, %v699
        %v701 = vand.u32 %v700, 4294901760
        %702 = vmatpush1.msra.mxu0 %v701
        %703 = vmatprep.subr.mxu0 0.0
        %v704 = vand.u32 %v216, 4294901760
        %v705 = vsub.f32 %v216, %v704
        %v706 = vand.u32 %v705, 4294901760
        %707 = vmatpush1.msra.mxu0 %v706
        %708 = vmatprep.subr.mxu0 0.0
        %v709 = vand.u32 %v217, 4294901760
        %v710 = vsub.f32 %v217, %v709
        %v711 = vand.u32 %v710, 4294901760
        %712 = vmatpush1.msra.mxu0 %v711
        %713 = vmatprep.subr.mxu0 0.0
        %v714 = vand.u32 %v218, 4294901760
        %v715 = vsub.f32 %v218, %v714
        %v716 = vand.u32 %v715, 4294901760
        %717 = vmatpush1.msra.mxu0 %v716
        %718 = vmatprep.subr.mxu0 0.0
        %v719 = vand.u32 %v219, 4294901760
        %v720 = vsub.f32 %v219, %v719
        %v721 = vand.u32 %v720, 4294901760
        %722 = vmatpush1.msra.mxu0 %v721
        %723 = vmatprep.subr.mxu0 0.0
        %v724 = vand.u32 %v220, 4294901760
        %v725 = vsub.f32 %v220, %v724
        %v726 = vand.u32 %v725, 4294901760
        %727 = vmatpush1.msra.mxu0 %v726
        %728 = vmatprep.subr.mxu0 0.0
        %v729 = vand.u32 %v221, 4294901760
        %v730 = vsub.f32 %v221, %v729
        %v731 = vand.u32 %v730, 4294901760
        %732 = vmatpush1.msra.mxu0 %v731
        %733 = vmatprep.subr.mxu0 0.0
        %v734 = vand.u32 %v222, 4294901760
        %v735 = vsub.f32 %v222, %v734
        %v736 = vand.u32 %v735, 4294901760
        %737 = vmatpush1.msra.mxu0 %v736
        %738 = vmatprep.subr.mxu0 0.0
        %739 = vmatpush1.msra.mxu0 0.0
        %740 = vmatprep.subr.mxu0 0.0
        %741 = vmatpush1.msra.mxu0 0.0
        %742 = vmatprep.subr.mxu0 0.0
        %743 = vmatpush1.msra.mxu0 0.0
        %744 = vmatprep.subr.mxu0 0.0
        %745 = vmatpush1.msra.mxu0 0.0
        %746 = vmatprep.subr.mxu0 0.0
        %747 = vmatpush1.msra.mxu0 0.0
        %748 = vmatprep.subr.mxu0 0.0
        %749 = vmatpush1.msra.mxu0 0.0
        %750 = vmatprep.subr.mxu0 0.0
        %751 = vmatpush1.msra.mxu0 0.0
        %752 = vmatprep.subr.mxu0 0.0
        %753 = vmatpush1.msra.mxu0 0.0
        %754 = vmatprep.subr.mxu0 0.0
        %755 = vmatpush1.msra.mxu0 0.0
        %756 = vmatprep.subr.mxu0 0.0
        %757 = vmatpush1.msra.mxu0 0.0
        %758 = vmatprep.subr.mxu0 0.0
        %759 = vmatpush1.msra.mxu0 0.0
        %760 = vmatprep.subr.mxu0 0.0
        %761 = vmatpush1.msra.mxu0 0.0
        %762 = vmatprep.subr.mxu0 0.0
        %763 = vmatpush1.msra.mxu0 0.0
        %764 = vmatprep.subr.mxu0 0.0
        %765 = vmatpush1.msra.mxu0 0.0
        %766 = vmatprep.subr.mxu0 0.0
        %767 = vmatpush1.msra.mxu0 0.0
        %768 = vmatprep.subr.mxu0 0.0
        %769 = vmatpush1.msra.mxu0 0.0
        %770 = vmatprep.mubr.f32.mxu0 0.0
        %v771 = vand.u32 %v206, 4294901760
        %772 = vmatmul.mubr.f32.gmra.mrb[0].mxu0 %v771
        %v773 = vpop.f32.mrb[0].mxu0
        %v774 = vadd.f32 %v655, %v773
        %v775 = vpop.f32.mrb[0].mxu0
        %776 = vdwg.mxu0
        %777 = vmatprep.subr.mxu0 0.0
        %v778 = vand.u32 %v207, 4294901760
        %779 = vmatpush1.msra.mxu0 %v778
        %780 = vmatprep.subr.mxu0 0.0
        %v781 = vand.u32 %v208, 4294901760
        %782 = vmatpush1.msra.mxu0 %v781
        %783 = vmatprep.subr.mxu0 0.0
        %v784 = vand.u32 %v209, 4294901760
        %785 = vmatpush1.msra.mxu0 %v784
        %786 = vmatprep.subr.mxu0 0.0
        %v787 = vand.u32 %v210, 4294901760
        %788 = vmatpush1.msra.mxu0 %v787
        %789 = vmatprep.subr.mxu0 0.0
        %v790 = vand.u32 %v211, 4294901760
        %791 = vmatpush1.msra.mxu0 %v790
        %792 = vmatprep.subr.mxu0 0.0
        %v793 = vand.u32 %v212, 4294901760
        %794 = vmatpush1.msra.mxu0 %v793
        %795 = vmatprep.subr.mxu0 0.0
        %v796 = vand.u32 %v213, 4294901760
        %797 = vmatpush1.msra.mxu0 %v796
        %798 = vmatprep.subr.mxu0 0.0
        %v799 = vand.u32 %v214, 4294901760
        %800 = vmatpush1.msra.mxu0 %v799
        %801 = vmatprep.subr.mxu0 0.0
        %v802 = vand.u32 %v215, 4294901760
        %803 = vmatpush1.msra.mxu0 %v802
        %804 = vmatprep.subr.mxu0 0.0
        %v805 = vand.u32 %v216, 4294901760
        %806 = vmatpush1.msra.mxu0 %v805
        %807 = vmatprep.subr.mxu0 0.0
        %v808 = vand.u32 %v217, 4294901760
        %809 = vmatpush1.msra.mxu0 %v808
        %810 = vmatprep.subr.mxu0 0.0
        %v811 = vand.u32 %v218, 4294901760
        %812 = vmatpush1.msra.mxu0 %v811
        %813 = vmatprep.subr.mxu0 0.0
        %v814 = vand.u32 %v219, 4294901760
        %815 = vmatpush1.msra.mxu0 %v814
        %816 = vmatprep.subr.mxu0 0.0
        %v817 = vand.u32 %v220, 4294901760
        %818 = vmatpush1.msra.mxu0 %v817
        %819 = vmatprep.subr.mxu0 0.0
        %v820 = vand.u32 %v221, 4294901760
        %821 = vmatpush1.msra.mxu0 %v820
        %822 = vmatprep.subr.mxu0 0.0
        %v823 = vand.u32 %v222, 4294901760
        %824 = vmatpush1.msra.mxu0 %v823
        %825 = vmatprep.subr.mxu0 0.0
        %826 = vmatpush1.msra.mxu0 0.0
        %827 = vmatprep.subr.mxu0 0.0
        %828 = vmatpush1.msra.mxu0 0.0
        %829 = vmatprep.subr.mxu0 0.0
        %830 = vmatpush1.msra.mxu0 0.0
        %831 = vmatprep.subr.mxu0 0.0
        %832 = vmatpush1.msra.mxu0 0.0
        %833 = vmatprep.subr.mxu0 0.0
        %834 = vmatpush1.msra.mxu0 0.0
        %835 = vmatprep.subr.mxu0 0.0
        %836 = vmatpush1.msra.mxu0 0.0
        %837 = vmatprep.subr.mxu0 0.0
        %838 = vmatpush1.msra.mxu0 0.0
        %839 = vmatprep.subr.mxu0 0.0
        %840 = vmatpush1.msra.mxu0 0.0
        %841 = vmatprep.subr.mxu0 0.0
        %842 = vmatpush1.msra.mxu0 0.0
        %843 = vmatprep.subr.mxu0 0.0
        %844 = vmatpush1.msra.mxu0 0.0
        %845 = vmatprep.subr.mxu0 0.0
        %846 = vmatpush1.msra.mxu0 0.0
        %847 = vmatprep.subr.mxu0 0.0
        %848 = vmatpush1.msra.mxu0 0.0
        %849 = vmatprep.subr.mxu0 0.0
        %850 = vmatpush1.msra.mxu0 0.0
        %851 = vmatprep.subr.mxu0 0.0
        %852 = vmatpush1.msra.mxu0 0.0
        %853 = vmatprep.subr.mxu0 0.0
        %854 = vmatpush1.msra.mxu0 0.0
        %855 = vmatprep.subr.mxu0 0.0
        %856 = vmatpush1.msra.mxu0 0.0
        %857 = vmatprep.mubr.f32.mxu0 0.0
        %v858 = vand.u32 %v206, 4294901760
        %859 = vmatmul.mubr.f32.gmra.mrb[0].mxu0 %v858
        %v860 = vpop.f32.mrb[0].mxu0
        %v861 = vadd.f32 %v774, %v860
        %v862 = vpop.f32.mrb[0].mxu0
        %863 = vdwg.mxu0
        %864 = vst [vmem:[%s202] sm:$0xff] %v861
        %s865 = scalar_lea.vmem %s168, 8 [#allocation2]
        %v866 = vld [vmem:[%s865] sm:$0xff]
        %s867 = scalar_lea.vmem %s177, 128 [#allocation5]
        %v868 = vld [vmem:[%s867] sm:$0xff]
        %v869 = vld [vmem:[%s867 + $0x8] sm:$0xff]
        %v870 = vld [vmem:[%s867 + $0x10] sm:$0xff]
        %v871 = vld [vmem:[%s867 + $0x18] sm:$0xff]
        %v872 = vld [vmem:[%s867 + $0x20] sm:$0xff]
        %v873 = vld [vmem:[%s867 + $0x28] sm:$0xff]
        %v874 = vld [vmem:[%s867 + $0x30] sm:$0xff]
        %v875 = vld [vmem:[%s867 + $0x38] sm:$0xff]
        %v876 = vld [vmem:[%s867 + $0x40] sm:$0xff]
        %v877 = vld [vmem:[%s867 + $0x48] sm:$0xff]
        %v878 = vld [vmem:[%s867 + $0x50] sm:$0xff]
        %v879 = vld [vmem:[%s867 + $0x58] sm:$0xff]
        %v880 = vld [vmem:[%s867 + $0x60] sm:$0xff]
        %v881 = vld [vmem:[%s867 + $0x68] sm:$0xff]
        %v882 = vld [vmem:[%s867 + $0x70] sm:$0xff]
        %v883 = vld [vmem:[%s867 + $0x78] sm:$0xff]
        %884 = vmatprep.subr.mxu0 0.0
        %v885 = vand.u32 %v868, 4294901760
        %886 = vmatpush1.msra.mxu0 %v885
        %887 = vmatprep.subr.mxu0 0.0
        %v888 = vand.u32 %v869, 4294901760
        %889 = vmatpush1.msra.mxu0 %v888
        %890 = vmatprep.subr.mxu0 0.0
        %v891 = vand.u32 %v870, 4294901760
        %892 = vmatpush1.msra.mxu0 %v891
        %893 = vmatprep.subr.mxu0 0.0
        %v894 = vand.u32 %v871, 4294901760
        %895 = vmatpush1.msra.mxu0 %v894
        %896 = vmatprep.subr.mxu0 0.0
        %v897 = vand.u32 %v872, 4294901760
        %898 = vmatpush1.msra.mxu0 %v897
        %899 = vmatprep.subr.mxu0 0.0
        %v900 = vand.u32 %v873, 4294901760
        %901 = vmatpush1.msra.mxu0 %v900
        %902 = vmatprep.subr.mxu0 0.0
        %v903 = vand.u32 %v874, 4294901760
        %904 = vmatpush1.msra.mxu0 %v903
        %905 = vmatprep.subr.mxu0 0.0
        %v906 = vand.u32 %v875, 4294901760
        %907 = vmatpush1.msra.mxu0 %v906
        %908 = vmatprep.subr.mxu0 0.0
        %v909 = vand.u32 %v876, 4294901760
        %910 = vmatpush1.msra.mxu0 %v909
        %911 = vmatprep.subr.mxu0 0.0
        %v912 = vand.u32 %v877, 4294901760
        %913 = vmatpush1.msra.mxu0 %v912
        %914 = vmatprep.subr.mxu0 0.0
        %v915 = vand.u32 %v878, 4294901760
        %916 = vmatpush1.msra.mxu0 %v915
        %917 = vmatprep.subr.mxu0 0.0
        %v918 = vand.u32 %v879, 4294901760
        %919 = vmatpush1.msra.mxu0 %v918
        %920 = vmatprep.subr.mxu0 0.0
        %v921 = vand.u32 %v880, 4294901760
        %922 = vmatpush1.msra.mxu0 %v921
        %923 = vmatprep.subr.mxu0 0.0
        %v924 = vand.u32 %v881, 4294901760
        %925 = vmatpush1.msra.mxu0 %v924
        %926 = vmatprep.subr.mxu0 0.0
        %v927 = vand.u32 %v882, 4294901760
        %928 = vmatpush1.msra.mxu0 %v927
        %929 = vmatprep.subr.mxu0 0.0
        %v930 = vand.u32 %v883, 4294901760
        %931 = vmatpush1.msra.mxu0 %v930
        %932 = vmatprep.subr.mxu0 0.0
        %933 = vmatpush1.msra.mxu0 0.0
        %934 = vmatprep.subr.mxu0 0.0
        %935 = vmatpush1.msra.mxu0 0.0
        %936 = vmatprep.subr.mxu0 0.0
        %937 = vmatpush1.msra.mxu0 0.0
        %938 = vmatprep.subr.mxu0 0.0
        %939 = vmatpush1.msra.mxu0 0.0
        %940 = vmatprep.subr.mxu0 0.0
        %941 = vmatpush1.msra.mxu0 0.0
        %942 = vmatprep.subr.mxu0 0.0
        %943 = vmatpush1.msra.mxu0 0.0
        %944 = vmatprep.subr.mxu0 0.0
        %945 = vmatpush1.msra.mxu0 0.0
        %946 = vmatprep.subr.mxu0 0.0
        %947 = vmatpush1.msra.mxu0 0.0
        %948 = vmatprep.subr.mxu0 0.0
        %949 = vmatpush1.msra.mxu0 0.0
        %950 = vmatprep.subr.mxu0 0.0
        %951 = vmatpush1.msra.mxu0 0.0
        %952 = vmatprep.subr.mxu0 0.0
        %953 = vmatpush1.msra.mxu0 0.0
        %954 = vmatprep.subr.mxu0 0.0
        %955 = vmatpush1.msra.mxu0 0.0
        %956 = vmatprep.subr.mxu0 0.0
        %957 = vmatpush1.msra.mxu0 0.0
        %958 = vmatprep.subr.mxu0 0.0
        %959 = vmatpush1.msra.mxu0 0.0
        %960 = vmatprep.subr.mxu0 0.0
        %961 = vmatpush1.msra.mxu0 0.0
        %962 = vmatprep.subr.mxu0 0.0
        %963 = vmatpush1.msra.mxu0 0.0
        %964 = vmatprep.mubr.f32.mxu0 0.0
        %v965 = vand.u32 %v866, 4294901760
        %v966 = vsub.f32 %v866, %v965
        %v967 = vand.u32 %v966, 4294901760
        %v968 = vsub.f32 %v966, %v967
        %v969 = vand.u32 %v968, 4294901760
        %970 = vmatmul.mubr.f32.gmra.mrb[0].mxu0 %v969
        %v971 = vpop.f32.mrb[0].mxu0
        %v972 = vadd.f32 0.0, %v971
        %v973 = vpop.f32.mrb[0].mxu0
        %974 = vdwg.mxu0
        %975 = vmatprep.subr.mxu0 0.0
        %v976 = vand.u32 %v868, 4294901760
        %v977 = vsub.f32 %v868, %v976
        %v978 = vand.u32 %v977, 4294901760
        %v979 = vsub.f32 %v977, %v978
        %v980 = vand.u32 %v979, 4294901760
        %981 = vmatpush1.msra.mxu0 %v980
        %982 = vmatprep.subr.mxu0 0.0
        %v983 = vand.u32 %v869, 4294901760
        %v984 = vsub.f32 %v869, %v983
        %v985 = vand.u32 %v984, 4294901760
        %v986 = vsub.f32 %v984, %v985
        %v987 = vand.u32 %v986, 4294901760
        %988 = vmatpush1.msra.mxu0 %v987
        %989 = vmatprep.subr.mxu0 0.0
        %v990 = vand.u32 %v870, 4294901760
        %v991 = vsub.f32 %v870, %v990
        %v992 = vand.u32 %v991, 4294901760
        %v993 = vsub.f32 %v991, %v992
        %v994 = vand.u32 %v993, 4294901760
        %995 = vmatpush1.msra.mxu0 %v994
        %996 = vmatprep.subr.mxu0 0.0
        %v997 = vand.u32 %v871, 4294901760
        %v998 = vsub.f32 %v871, %v997
        %v999 = vand.u32 %v998, 4294901760
        %v1000 = vsub.f32 %v998, %v999
        %v1001 = vand.u32 %v1000, 4294901760
        %1002 = vmatpush1.msra.mxu0 %v1001
        %1003 = vmatprep.subr.mxu0 0.0
        %v1004 = vand.u32 %v872, 4294901760
        %v1005 = vsub.f32 %v872, %v1004
        %v1006 = vand.u32 %v1005, 4294901760
        %v1007 = vsub.f32 %v1005, %v1006
        %v1008 = vand.u32 %v1007, 4294901760
        %1009 = vmatpush1.msra.mxu0 %v1008
        %1010 = vmatprep.subr.mxu0 0.0
        %v1011 = vand.u32 %v873, 4294901760
        %v1012 = vsub.f32 %v873, %v1011
        %v1013 = vand.u32 %v1012, 4294901760
        %v1014 = vsub.f32 %v1012, %v1013
        %v1015 = vand.u32 %v1014, 4294901760
        %1016 = vmatpush1.msra.mxu0 %v1015
        %1017 = vmatprep.subr.mxu0 0.0
        %v1018 = vand.u32 %v874, 4294901760
        %v1019 = vsub.f32 %v874, %v1018
        %v1020 = vand.u32 %v1019, 4294901760
        %v1021 = vsub.f32 %v1019, %v1020
        %v1022 = vand.u32 %v1021, 4294901760
        %1023 = vmatpush1.msra.mxu0 %v1022
        %1024 = vmatprep.subr.mxu0 0.0
        %v1025 = vand.u32 %v875, 4294901760
        %v1026 = vsub.f32 %v875, %v1025
        %v1027 = vand.u32 %v1026, 4294901760
        %v1028 = vsub.f32 %v1026, %v1027
        %v1029 = vand.u32 %v1028, 4294901760
        %1030 = vmatpush1.msra.mxu0 %v1029
        %1031 = vmatprep.subr.mxu0 0.0
        %v1032 = vand.u32 %v876, 4294901760
        %v1033 = vsub.f32 %v876, %v1032
        %v1034 = vand.u32 %v1033, 4294901760
        %v1035 = vsub.f32 %v1033, %v1034
        %v1036 = vand.u32 %v1035, 4294901760
        %1037 = vmatpush1.msra.mxu0 %v1036
        %1038 = vmatprep.subr.mxu0 0.0
        %v1039 = vand.u32 %v877, 4294901760
        %v1040 = vsub.f32 %v877, %v1039
        %v1041 = vand.u32 %v1040, 4294901760
        %v1042 = vsub.f32 %v1040, %v1041
        %v1043 = vand.u32 %v1042, 4294901760
        %1044 = vmatpush1.msra.mxu0 %v1043
        %1045 = vmatprep.subr.mxu0 0.0
        %v1046 = vand.u32 %v878, 4294901760
        %v1047 = vsub.f32 %v878, %v1046
        %v1048 = vand.u32 %v1047, 4294901760
        %v1049 = vsub.f32 %v1047, %v1048
        %v1050 = vand.u32 %v1049, 4294901760
        %1051 = vmatpush1.msra.mxu0 %v1050
        %1052 = vmatprep.subr.mxu0 0.0
        %v1053 = vand.u32 %v879, 4294901760
        %v1054 = vsub.f32 %v879, %v1053
        %v1055 = vand.u32 %v1054, 4294901760
        %v1056 = vsub.f32 %v1054, %v1055
        %v1057 = vand.u32 %v1056, 4294901760
        %1058 = vmatpush1.msra.mxu0 %v1057
        %1059 = vmatprep.subr.mxu0 0.0
        %v1060 = vand.u32 %v880, 4294901760
        %v1061 = vsub.f32 %v880, %v1060
        %v1062 = vand.u32 %v1061, 4294901760
        %v1063 = vsub.f32 %v1061, %v1062
        %v1064 = vand.u32 %v1063, 4294901760
        %1065 = vmatpush1.msra.mxu0 %v1064
        %1066 = vmatprep.subr.mxu0 0.0
        %v1067 = vand.u32 %v881, 4294901760
        %v1068 = vsub.f32 %v881, %v1067
        %v1069 = vand.u32 %v1068, 4294901760
        %v1070 = vsub.f32 %v1068, %v1069
        %v1071 = vand.u32 %v1070, 4294901760
        %1072 = vmatpush1.msra.mxu0 %v1071
        %1073 = vmatprep.subr.mxu0 0.0
        %v1074 = vand.u32 %v882, 4294901760
        %v1075 = vsub.f32 %v882, %v1074
        %v1076 = vand.u32 %v1075, 4294901760
        %v1077 = vsub.f32 %v1075, %v1076
        %v1078 = vand.u32 %v1077, 4294901760
        %1079 = vmatpush1.msra.mxu0 %v1078
        %1080 = vmatprep.subr.mxu0 0.0
        %v1081 = vand.u32 %v883, 4294901760
        %v1082 = vsub.f32 %v883, %v1081
        %v1083 = vand.u32 %v1082, 4294901760
        %v1084 = vsub.f32 %v1082, %v1083
        %v1085 = vand.u32 %v1084, 4294901760
        %1086 = vmatpush1.msra.mxu0 %v1085
        %1087 = vmatprep.subr.mxu0 0.0
        %1088 = vmatpush1.msra.mxu0 0.0
        %1089 = vmatprep.subr.mxu0 0.0
        %1090 = vmatpush1.msra.mxu0 0.0
        %1091 = vmatprep.subr.mxu0 0.0
        %1092 = vmatpush1.msra.mxu0 0.0
        %1093 = vmatprep.subr.mxu0 0.0
        %1094 = vmatpush1.msra.mxu0 0.0
        %1095 = vmatprep.subr.mxu0 0.0
        %1096 = vmatpush1.msra.mxu0 0.0
        %1097 = vmatprep.subr.mxu0 0.0
        %1098 = vmatpush1.msra.mxu0 0.0
        %1099 = vmatprep.subr.mxu0 0.0
        %1100 = vmatpush1.msra.mxu0 0.0
        %1101 = vmatprep.subr.mxu0 0.0
        %1102 = vmatpush1.msra.mxu0 0.0
        %1103 = vmatprep.subr.mxu0 0.0
        %1104 = vmatpush1.msra.mxu0 0.0
        %1105 = vmatprep.subr.mxu0 0.0
        %1106 = vmatpush1.msra.mxu0 0.0
        %1107 = vmatprep.subr.mxu0 0.0
        %1108 = vmatpush1.msra.mxu0 0.0
        %1109 = vmatprep.subr.mxu0 0.0
        %1110 = vmatpush1.msra.mxu0 0.0
        %1111 = vmatprep.subr.mxu0 0.0
        %1112 = vmatpush1.msra.mxu0 0.0
        %1113 = vmatprep.subr.mxu0 0.0
        %1114 = vmatpush1.msra.mxu0 0.0
        %1115 = vmatprep.subr.mxu0 0.0
        %1116 = vmatpush1.msra.mxu0 0.0
        %1117 = vmatprep.subr.mxu0 0.0
        %1118 = vmatpush1.msra.mxu0 0.0
        %1119 = vmatprep.mubr.f32.mxu0 0.0
        %v1120 = vand.u32 %v866, 4294901760
        %1121 = vmatmul.mubr.f32.gmra.mrb[0].mxu0 %v1120
        %v1122 = vpop.f32.mrb[0].mxu0
        %v1123 = vadd.f32 %v972, %v1122
        %v1124 = vpop.f32.mrb[0].mxu0
        %1125 = vdwg.mxu0
        %1126 = vmatprep.subr.mxu0 0.0
        %v1127 = vand.u32 %v868, 4294901760
        %v1128 = vsub.f32 %v868, %v1127
        %1129 = vmatpush1.msra.mxu0 %v1128
        %1130 = vmatprep.subr.mxu0 0.0
        %v1131 = vand.u32 %v869, 4294901760
        %v1132 = vsub.f32 %v869, %v1131
        %1133 = vmatpush1.msra.mxu0 %v1132
        %1134 = vmatprep.subr.mxu0 0.0
        %v1135 = vand.u32 %v870, 4294901760
        %v1136 = vsub.f32 %v870, %v1135
        %1137 = vmatpush1.msra.mxu0 %v1136
        %1138 = vmatprep.subr.mxu0 0.0
        %v1139 = vand.u32 %v871, 4294901760
        %v1140 = vsub.f32 %v871, %v1139
        %1141 = vmatpush1.msra.mxu0 %v1140
        %1142 = vmatprep.subr.mxu0 0.0
        %v1143 = vand.u32 %v872, 4294901760
        %v1144 = vsub.f32 %v872, %v1143
        %1145 = vmatpush1.msra.mxu0 %v1144
        %1146 = vmatprep.subr.mxu0 0.0
        %v1147 = vand.u32 %v873, 4294901760
        %v1148 = vsub.f32 %v873, %v1147
        %1149 = vmatpush1.msra.mxu0 %v1148
        %1150 = vmatprep.subr.mxu0 0.0
        %v1151 = vand.u32 %v874, 4294901760
        %v1152 = vsub.f32 %v874, %v1151
        %1153 = vmatpush1.msra.mxu0 %v1152
        %1154 = vmatprep.subr.mxu0 0.0
        %v1155 = vand.u32 %v875, 4294901760
        %v1156 = vsub.f32 %v875, %v1155
        %1157 = vmatpush1.msra.mxu0 %v1156
        %1158 = vmatprep.subr.mxu0 0.0
        %v1159 = vand.u32 %v876, 4294901760
        %v1160 = vsub.f32 %v876, %v1159
        %1161 = vmatpush1.msra.mxu0 %v1160
        %1162 = vmatprep.subr.mxu0 0.0
        %v1163 = vand.u32 %v877, 4294901760
        %v1164 = vsub.f32 %v877, %v1163
        %1165 = vmatpush1.msra.mxu0 %v1164
        %1166 = vmatprep.subr.mxu0 0.0
        %v1167 = vand.u32 %v878, 4294901760
        %v1168 = vsub.f32 %v878, %v1167
        %1169 = vmatpush1.msra.mxu0 %v1168
        %1170 = vmatprep.subr.mxu0 0.0
        %v1171 = vand.u32 %v879, 4294901760
        %v1172 = vsub.f32 %v879, %v1171
        %1173 = vmatpush1.msra.mxu0 %v1172
        %1174 = vmatprep.subr.mxu0 0.0
        %v1175 = vand.u32 %v880, 4294901760
        %v1176 = vsub.f32 %v880, %v1175
        %1177 = vmatpush1.msra.mxu0 %v1176
        %1178 = vmatprep.subr.mxu0 0.0
        %v1179 = vand.u32 %v881, 4294901760
        %v1180 = vsub.f32 %v881, %v1179
        %1181 = vmatpush1.msra.mxu0 %v1180
        %1182 = vmatprep.subr.mxu0 0.0
        %v1183 = vand.u32 %v882, 4294901760
        %v1184 = vsub.f32 %v882, %v1183
        %1185 = vmatpush1.msra.mxu0 %v1184
        %1186 = vmatprep.subr.mxu0 0.0
        %v1187 = vand.u32 %v883, 4294901760
        %v1188 = vsub.f32 %v883, %v1187
        %1189 = vmatpush1.msra.mxu0 %v1188
        %1190 = vmatprep.subr.mxu0 0.0
        %1191 = vmatpush1.msra.mxu0 0.0
        %1192 = vmatprep.subr.mxu0 0.0
        %1193 = vmatpush1.msra.mxu0 0.0
        %1194 = vmatprep.subr.mxu0 0.0
        %1195 = vmatpush1.msra.mxu0 0.0
        %1196 = vmatprep.subr.mxu0 0.0
        %1197 = vmatpush1.msra.mxu0 0.0
        %1198 = vmatprep.subr.mxu0 0.0
        %1199 = vmatpush1.msra.mxu0 0.0
        %1200 = vmatprep.subr.mxu0 0.0
        %1201 = vmatpush1.msra.mxu0 0.0
        %1202 = vmatprep.subr.mxu0 0.0
        %1203 = vmatpush1.msra.mxu0 0.0
        %1204 = vmatprep.subr.mxu0 0.0
        %1205 = vmatpush1.msra.mxu0 0.0
        %1206 = vmatprep.subr.mxu0 0.0
        %1207 = vmatpush1.msra.mxu0 0.0
        %1208 = vmatprep.subr.mxu0 0.0
        %1209 = vmatpush1.msra.mxu0 0.0
        %1210 = vmatprep.subr.mxu0 0.0
        %1211 = vmatpush1.msra.mxu0 0.0
        %1212 = vmatprep.subr.mxu0 0.0
        %1213 = vmatpush1.msra.mxu0 0.0
        %1214 = vmatprep.subr.mxu0 0.0
        %1215 = vmatpush1.msra.mxu0 0.0
        %1216 = vmatprep.subr.mxu0 0.0
        %1217 = vmatpush1.msra.mxu0 0.0
        %1218 = vmatprep.subr.mxu0 0.0
        %1219 = vmatpush1.msra.mxu0 0.0
        %1220 = vmatprep.subr.mxu0 0.0
        %1221 = vmatpush1.msra.mxu0 0.0
        %1222 = vmatprep.mubr.f32.mxu0 0.0
        %v1223 = vand.u32 %v866, 4294901760
        %v1224 = vsub.f32 %v866, %v1223
        %1225 = vmatmul.mubr.f32.gmra.mrb[0].mxu0 %v1224
        %v1226 = vpop.f32.mrb[0].mxu0
        %v1227 = vadd.f32 %v1123, %v1226
        %v1228 = vpop.f32.mrb[0].mxu0
        %1229 = vdwg.mxu0
        %1230 = vmatprep.subr.mxu0 0.0
        %v1231 = vand.u32 %v868, 4294901760
        %1232 = vmatpush1.msra.mxu0 %v1231
        %1233 = vmatprep.subr.mxu0 0.0
        %v1234 = vand.u32 %v869, 4294901760
        %1235 = vmatpush1.msra.mxu0 %v1234
        %1236 = vmatprep.subr.mxu0 0.0
        %v1237 = vand.u32 %v870, 4294901760
        %1238 = vmatpush1.msra.mxu0 %v1237
        %1239 = vmatprep.subr.mxu0 0.0
        %v1240 = vand.u32 %v871, 4294901760
        %1241 = vmatpush1.msra.mxu0 %v1240
        %1242 = vmatprep.subr.mxu0 0.0
        %v1243 = vand.u32 %v872, 4294901760
        %1244 = vmatpush1.msra.mxu0 %v1243
        %1245 = vmatprep.subr.mxu0 0.0
        %v1246 = vand.u32 %v873, 4294901760
        %1247 = vmatpush1.msra.mxu0 %v1246
        %1248 = vmatprep.subr.mxu0 0.0
        %v1249 = vand.u32 %v874, 4294901760
        %1250 = vmatpush1.msra.mxu0 %v1249
        %1251 = vmatprep.subr.mxu0 0.0
        %v1252 = vand.u32 %v875, 4294901760
        %1253 = vmatpush1.msra.mxu0 %v1252
        %1254 = vmatprep.subr.mxu0 0.0
        %v1255 = vand.u32 %v876, 4294901760
        %1256 = vmatpush1.msra.mxu0 %v1255
        %1257 = vmatprep.subr.mxu0 0.0
        %v1258 = vand.u32 %v877, 4294901760
        %1259 = vmatpush1.msra.mxu0 %v1258
        %1260 = vmatprep.subr.mxu0 0.0
        %v1261 = vand.u32 %v878, 4294901760
        %1262 = vmatpush1.msra.mxu0 %v1261
        %1263 = vmatprep.subr.mxu0 0.0
        %v1264 = vand.u32 %v879, 4294901760
        %1265 = vmatpush1.msra.mxu0 %v1264
        %1266 = vmatprep.subr.mxu0 0.0
        %v1267 = vand.u32 %v880, 4294901760
        %1268 = vmatpush1.msra.mxu0 %v1267
        %1269 = vmatprep.subr.mxu0 0.0
        %v1270 = vand.u32 %v881, 4294901760
        %1271 = vmatpush1.msra.mxu0 %v1270
        %1272 = vmatprep.subr.mxu0 0.0
        %v1273 = vand.u32 %v882, 4294901760
        %1274 = vmatpush1.msra.mxu0 %v1273
        %1275 = vmatprep.subr.mxu0 0.0
        %v1276 = vand.u32 %v883, 4294901760
        %1277 = vmatpush1.msra.mxu0 %v1276
        %1278 = vmatprep.subr.mxu0 0.0
        %1279 = vmatpush1.msra.mxu0 0.0
        %1280 = vmatprep.subr.mxu0 0.0
        %1281 = vmatpush1.msra.mxu0 0.0
        %1282 = vmatprep.subr.mxu0 0.0
        %1283 = vmatpush1.msra.mxu0 0.0
        %1284 = vmatprep.subr.mxu0 0.0
        %1285 = vmatpush1.msra.mxu0 0.0
        %1286 = vmatprep.subr.mxu0 0.0
        %1287 = vmatpush1.msra.mxu0 0.0
        %1288 = vmatprep.subr.mxu0 0.0
        %1289 = vmatpush1.msra.mxu0 0.0
        %1290 = vmatprep.subr.mxu0 0.0
        %1291 = vmatpush1.msra.mxu0 0.0
        %1292 = vmatprep.subr.mxu0 0.0
        %1293 = vmatpush1.msra.mxu0 0.0
        %1294 = vmatprep.subr.mxu0 0.0
        %1295 = vmatpush1.msra.mxu0 0.0
        %1296 = vmatprep.subr.mxu0 0.0
        %1297 = vmatpush1.msra.mxu0 0.0
        %1298 = vmatprep.subr.mxu0 0.0
        %1299 = vmatpush1.msra.mxu0 0.0
        %1300 = vmatprep.subr.mxu0 0.0
        %1301 = vmatpush1.msra.mxu0 0.0
        %1302 = vmatprep.subr.mxu0 0.0
        %1303 = vmatpush1.msra.mxu0 0.0
        %1304 = vmatprep.subr.mxu0 0.0
        %1305 = vmatpush1.msra.mxu0 0.0
        %1306 = vmatprep.subr.mxu0 0.0
        %1307 = vmatpush1.msra.mxu0 0.0
        %1308 = vmatprep.subr.mxu0 0.0
        %1309 = vmatpush1.msra.mxu0 0.0
        %1310 = vmatprep.mubr.f32.mxu0 0.0
        %v1311 = vand.u32 %v866, 4294901760
        %v1312 = vsub.f32 %v866, %v1311
        %v1313 = vand.u32 %v1312, 4294901760
        %1314 = vmatmul.mubr.f32.gmra.mrb[0].mxu0 %v1313
        %v1315 = vpop.f32.mrb[0].mxu0
        %v1316 = vadd.f32 %v1227, %v1315
        %v1317 = vpop.f32.mrb[0].mxu0
        %1318 = vdwg.mxu0
        %1319 = vmatprep.subr.mxu0 0.0
        %v1320 = vand.u32 %v868, 4294901760
        %v1321 = vsub.f32 %v868, %v1320
        %v1322 = vand.u32 %v1321, 4294901760
        %1323 = vmatpush1.msra.mxu0 %v1322
        %1324 = vmatprep.subr.mxu0 0.0
        %v1325 = vand.u32 %v869, 4294901760
        %v1326 = vsub.f32 %v869, %v1325
        %v1327 = vand.u32 %v1326, 4294901760
        %1328 = vmatpush1.msra.mxu0 %v1327
        %1329 = vmatprep.subr.mxu0 0.0
        %v1330 = vand.u32 %v870, 4294901760
        %v1331 = vsub.f32 %v870, %v1330
        %v1332 = vand.u32 %v1331, 4294901760
        %1333 = vmatpush1.msra.mxu0 %v1332
        %1334 = vmatprep.subr.mxu0 0.0
        %v1335 = vand.u32 %v871, 4294901760
        %v1336 = vsub.f32 %v871, %v1335
        %v1337 = vand.u32 %v1336, 4294901760
        %1338 = vmatpush1.msra.mxu0 %v1337
        %1339 = vmatprep.subr.mxu0 0.0
        %v1340 = vand.u32 %v872, 4294901760
        %v1341 = vsub.f32 %v872, %v1340
        %v1342 = vand.u32 %v1341, 4294901760
        %1343 = vmatpush1.msra.mxu0 %v1342
        %1344 = vmatprep.subr.mxu0 0.0
        %v1345 = vand.u32 %v873, 4294901760
        %v1346 = vsub.f32 %v873, %v1345
        %v1347 = vand.u32 %v1346, 4294901760
        %1348 = vmatpush1.msra.mxu0 %v1347
        %1349 = vmatprep.subr.mxu0 0.0
        %v1350 = vand.u32 %v874, 4294901760
        %v1351 = vsub.f32 %v874, %v1350
        %v1352 = vand.u32 %v1351, 4294901760
        %1353 = vmatpush1.msra.mxu0 %v1352
        %1354 = vmatprep.subr.mxu0 0.0
        %v1355 = vand.u32 %v875, 4294901760
        %v1356 = vsub.f32 %v875, %v1355
        %v1357 = vand.u32 %v1356, 4294901760
        %1358 = vmatpush1.msra.mxu0 %v1357
        %1359 = vmatprep.subr.mxu0 0.0
        %v1360 = vand.u32 %v876, 4294901760
        %v1361 = vsub.f32 %v876, %v1360
        %v1362 = vand.u32 %v1361, 4294901760
        %1363 = vmatpush1.msra.mxu0 %v1362
        %1364 = vmatprep.subr.mxu0 0.0
        %v1365 = vand.u32 %v877, 4294901760
        %v1366 = vsub.f32 %v877, %v1365
        %v1367 = vand.u32 %v1366, 4294901760
        %1368 = vmatpush1.msra.mxu0 %v1367
        %1369 = vmatprep.subr.mxu0 0.0
        %v1370 = vand.u32 %v878, 4294901760
        %v1371 = vsub.f32 %v878, %v1370
        %v1372 = vand.u32 %v1371, 4294901760
        %1373 = vmatpush1.msra.mxu0 %v1372
        %1374 = vmatprep.subr.mxu0 0.0
        %v1375 = vand.u32 %v879, 4294901760
        %v1376 = vsub.f32 %v879, %v1375
        %v1377 = vand.u32 %v1376, 4294901760
        %1378 = vmatpush1.msra.mxu0 %v1377
        %1379 = vmatprep.subr.mxu0 0.0
        %v1380 = vand.u32 %v880, 4294901760
        %v1381 = vsub.f32 %v880, %v1380
        %v1382 = vand.u32 %v1381, 4294901760
        %1383 = vmatpush1.msra.mxu0 %v1382
        %1384 = vmatprep.subr.mxu0 0.0
        %v1385 = vand.u32 %v881, 4294901760
        %v1386 = vsub.f32 %v881, %v1385
        %v1387 = vand.u32 %v1386, 4294901760
        %1388 = vmatpush1.msra.mxu0 %v1387
        %1389 = vmatprep.subr.mxu0 0.0
        %v1390 = vand.u32 %v882, 4294901760
        %v1391 = vsub.f32 %v882, %v1390
        %v1392 = vand.u32 %v1391, 4294901760
        %1393 = vmatpush1.msra.mxu0 %v1392
        %1394 = vmatprep.subr.mxu0 0.0
        %v1395 = vand.u32 %v883, 4294901760
        %v1396 = vsub.f32 %v883, %v1395
        %v1397 = vand.u32 %v1396, 4294901760
        %1398 = vmatpush1.msra.mxu0 %v1397
        %1399 = vmatprep.subr.mxu0 0.0
        %1400 = vmatpush1.msra.mxu0 0.0
        %1401 = vmatprep.subr.mxu0 0.0
        %1402 = vmatpush1.msra.mxu0 0.0
        %1403 = vmatprep.subr.mxu0 0.0
        %1404 = vmatpush1.msra.mxu0 0.0
        %1405 = vmatprep.subr.mxu0 0.0
        %1406 = vmatpush1.msra.mxu0 0.0
        %1407 = vmatprep.subr.mxu0 0.0
        %1408 = vmatpush1.msra.mxu0 0.0
        %1409 = vmatprep.subr.mxu0 0.0
        %1410 = vmatpush1.msra.mxu0 0.0
        %1411 = vmatprep.subr.mxu0 0.0
        %1412 = vmatpush1.msra.mxu0 0.0
        %1413 = vmatprep.subr.mxu0 0.0
        %1414 = vmatpush1.msra.mxu0 0.0
        %1415 = vmatprep.subr.mxu0 0.0
        %1416 = vmatpush1.msra.mxu0 0.0
        %1417 = vmatprep.subr.mxu0 0.0
        %1418 = vmatpush1.msra.mxu0 0.0
        %1419 = vmatprep.subr.mxu0 0.0
        %1420 = vmatpush1.msra.mxu0 0.0
        %1421 = vmatprep.subr.mxu0 0.0
        %1422 = vmatpush1.msra.mxu0 0.0
        %1423 = vmatprep.subr.mxu0 0.0
        %1424 = vmatpush1.msra.mxu0 0.0
        %1425 = vmatprep.subr.mxu0 0.0
        %1426 = vmatpush1.msra.mxu0 0.0
        %1427 = vmatprep.subr.mxu0 0.0
        %1428 = vmatpush1.msra.mxu0 0.0
        %1429 = vmatprep.subr.mxu0 0.0
        %1430 = vmatpush1.msra.mxu0 0.0
        %1431 = vmatprep.mubr.f32.mxu0 0.0
        %v1432 = vand.u32 %v866, 4294901760
        %1433 = vmatmul.mubr.f32.gmra.mrb[0].mxu0 %v1432
        %v1434 = vpop.f32.mrb[0].mxu0
        %v1435 = vadd.f32 %v1316, %v1434
        %v1436 = vpop.f32.mrb[0].mxu0
        %1437 = vdwg.mxu0
        %1438 = vmatprep.subr.mxu0 0.0
        %v1439 = vand.u32 %v868, 4294901760
        %1440 = vmatpush1.msra.mxu0 %v1439
        %1441 = vmatprep.subr.mxu0 0.0
        %v1442 = vand.u32 %v869, 4294901760
        %1443 = vmatpush1.msra.mxu0 %v1442
        %1444 = vmatprep.subr.mxu0 0.0
        %v1445 = vand.u32 %v870, 4294901760
        %1446 = vmatpush1.msra.mxu0 %v1445
        %1447 = vmatprep.subr.mxu0 0.0
        %v1448 = vand.u32 %v871, 4294901760
        %1449 = vmatpush1.msra.mxu0 %v1448
        %1450 = vmatprep.subr.mxu0 0.0
        %v1451 = vand.u32 %v872, 4294901760
        %1452 = vmatpush1.msra.mxu0 %v1451
        %1453 = vmatprep.subr.mxu0 0.0
        %v1454 = vand.u32 %v873, 4294901760
        %1455 = vmatpush1.msra.mxu0 %v1454
        %1456 = vmatprep.subr.mxu0 0.0
        %v1457 = vand.u32 %v874, 4294901760
        %1458 = vmatpush1.msra.mxu0 %v1457
        %1459 = vmatprep.subr.mxu0 0.0
        %v1460 = vand.u32 %v875, 4294901760
        %1461 = vmatpush1.msra.mxu0 %v1460
        %1462 = vmatprep.subr.mxu0 0.0
        %v1463 = vand.u32 %v876, 4294901760
        %1464 = vmatpush1.msra.mxu0 %v1463
        %1465 = vmatprep.subr.mxu0 0.0
        %v1466 = vand.u32 %v877, 4294901760
        %1467 = vmatpush1.msra.mxu0 %v1466
        %1468 = vmatprep.subr.mxu0 0.0
        %v1469 = vand.u32 %v878, 4294901760
        %1470 = vmatpush1.msra.mxu0 %v1469
        %1471 = vmatprep.subr.mxu0 0.0
        %v1472 = vand.u32 %v879, 4294901760
        %1473 = vmatpush1.msra.mxu0 %v1472
        %1474 = vmatprep.subr.mxu0 0.0
        %v1475 = vand.u32 %v880, 4294901760
        %1476 = vmatpush1.msra.mxu0 %v1475
        %1477 = vmatprep.subr.mxu0 0.0
        %v1478 = vand.u32 %v881, 4294901760
        %1479 = vmatpush1.msra.mxu0 %v1478
        %1480 = vmatprep.subr.mxu0 0.0
        %v1481 = vand.u32 %v882, 4294901760
        %1482 = vmatpush1.msra.mxu0 %v1481
        %1483 = vmatprep.subr.mxu0 0.0
        %v1484 = vand.u32 %v883, 4294901760
        %1485 = vmatpush1.msra.mxu0 %v1484
        %1486 = vmatprep.subr.mxu0 0.0
        %1487 = vmatpush1.msra.mxu0 0.0
        %1488 = vmatprep.subr.mxu0 0.0
        %1489 = vmatpush1.msra.mxu0 0.0
        %1490 = vmatprep.subr.mxu0 0.0
        %1491 = vmatpush1.msra.mxu0 0.0
        %1492 = vmatprep.subr.mxu0 0.0
        %1493 = vmatpush1.msra.mxu0 0.0
        %1494 = vmatprep.subr.mxu0 0.0
        %1495 = vmatpush1.msra.mxu0 0.0
        %1496 = vmatprep.subr.mxu0 0.0
        %1497 = vmatpush1.msra.mxu0 0.0
        %1498 = vmatprep.subr.mxu0 0.0
        %1499 = vmatpush1.msra.mxu0 0.0
        %1500 = vmatprep.subr.mxu0 0.0
        %1501 = vmatpush1.msra.mxu0 0.0
        %1502 = vmatprep.subr.mxu0 0.0
        %1503 = vmatpush1.msra.mxu0 0.0
        %1504 = vmatprep.subr.mxu0 0.0
        %1505 = vmatpush1.msra.mxu0 0.0
        %1506 = vmatprep.subr.mxu0 0.0
        %1507 = vmatpush1.msra.mxu0 0.0
        %1508 = vmatprep.subr.mxu0 0.0
        %1509 = vmatpush1.msra.mxu0 0.0
        %1510 = vmatprep.subr.mxu0 0.0
        %1511 = vmatpush1.msra.mxu0 0.0
        %1512 = vmatprep.subr.mxu0 0.0
        %1513 = vmatpush1.msra.mxu0 0.0
        %1514 = vmatprep.subr.mxu0 0.0
        %1515 = vmatpush1.msra.mxu0 0.0
        %1516 = vmatprep.subr.mxu0 0.0
        %1517 = vmatpush1.msra.mxu0 0.0
        %1518 = vmatprep.mubr.f32.mxu0 0.0
        %v1519 = vand.u32 %v866, 4294901760
        %1520 = vmatmul.mubr.f32.gmra.mrb[0].mxu0 %v1519
        %v1521 = vpop.f32.mrb[0].mxu0
        %v1522 = vadd.f32 %v1435, %v1521
        %v1523 = vpop.f32.mrb[0].mxu0
        %1524 = vdwg.mxu0
        %s1525 = scalar_lea.vmem %s202, 8 [#allocation7]
        %1526 = vst [vmem:[%s1525] sm:$0xff] %v1522
        %s1527 = scalar_lea.vmem %s168, 16 [#allocation2]
        %v1528 = vld [vmem:[%s1527] sm:$0xff]
        %s1529 = scalar_lea.vmem %s177, 256 [#allocation5]
        %v1530 = vld [vmem:[%s1529] sm:$0xff]
        %v1531 = vld [vmem:[%s1529 + $0x8] sm:$0xff]
        %v1532 = vld [vmem:[%s1529 + $0x10] sm:$0xff]
        %v1533 = vld [vmem:[%s1529 + $0x18] sm:$0xff]
        %v1534 = vld [vmem:[%s1529 + $0x20] sm:$0xff]
        %v1535 = vld [vmem:[%s1529 + $0x28] sm:$0xff]
        %v1536 = vld [vmem:[%s1529 + $0x30] sm:$0xff]
        %v1537 = vld [vmem:[%s1529 + $0x38] sm:$0xff]
        %v1538 = vld [vmem:[%s1529 + $0x40] sm:$0xff]
        %v1539 = vld [vmem:[%s1529 + $0x48] sm:$0xff]
        %v1540 = vld [vmem:[%s1529 + $0x50] sm:$0xff]
        %v1541 = vld [vmem:[%s1529 + $0x58] sm:$0xff]
        %v1542 = vld [vmem:[%s1529 + $0x60] sm:$0xff]
        %v1543 = vld [vmem:[%s1529 + $0x68] sm:$0xff]
        %v1544 = vld [vmem:[%s1529 + $0x70] sm:$0xff]
        %v1545 = vld [vmem:[%s1529 + $0x78] sm:$0xff]
        %1546 = vmatprep.subr.mxu0 0.0
        %v1547 = vand.u32 %v1530, 4294901760
        %1548 = vmatpush1.msra.mxu0 %v1547
        %1549 = vmatprep.subr.mxu0 0.0
        %v1550 = vand.u32 %v1531, 4294901760
        %1551 = vmatpush1.msra.mxu0 %v1550
        %1552 = vmatprep.subr.mxu0 0.0
        %v1553 = vand.u32 %v1532, 4294901760
        %1554 = vmatpush1.msra.mxu0 %v1553
        %1555 = vmatprep.subr.mxu0 0.0
        %v1556 = vand.u32 %v1533, 4294901760
        %1557 = vmatpush1.msra.mxu0 %v1556
        %1558 = vmatprep.subr.mxu0 0.0
        %v1559 = vand.u32 %v1534, 4294901760
        %1560 = vmatpush1.msra.mxu0 %v1559
        %1561 = vmatprep.subr.mxu0 0.0
        %v1562 = vand.u32 %v1535, 4294901760
        %1563 = vmatpush1.msra.mxu0 %v1562
        %1564 = vmatprep.subr.mxu0 0.0
        %v1565 = vand.u32 %v1536, 4294901760
        %1566 = vmatpush1.msra.mxu0 %v1565
        %1567 = vmatprep.subr.mxu0 0.0
        %v1568 = vand.u32 %v1537, 4294901760
        %1569 = vmatpush1.msra.mxu0 %v1568
        %1570 = vmatprep.subr.mxu0 0.0
        %v1571 = vand.u32 %v1538, 4294901760
        %1572 = vmatpush1.msra.mxu0 %v1571
        %1573 = vmatprep.subr.mxu0 0.0
        %v1574 = vand.u32 %v1539, 4294901760
        %1575 = vmatpush1.msra.mxu0 %v1574
        %1576 = vmatprep.subr.mxu0 0.0
        %v1577 = vand.u32 %v1540, 4294901760
        %1578 = vmatpush1.msra.mxu0 %v1577
        %1579 = vmatprep.subr.mxu0 0.0
        %v1580 = vand.u32 %v1541, 4294901760
        %1581 = vmatpush1.msra.mxu0 %v1580
        %1582 = vmatprep.subr.mxu0 0.0
        %v1583 = vand.u32 %v1542, 4294901760
        %1584 = vmatpush1.msra.mxu0 %v1583
        %1585 = vmatprep.subr.mxu0 0.0
        %v1586 = vand.u32 %v1543, 4294901760
        %1587 = vmatpush1.msra.mxu0 %v1586
        %1588 = vmatprep.subr.mxu0 0.0
        %v1589 = vand.u32 %v1544, 4294901760
        %1590 = vmatpush1.msra.mxu0 %v1589
        %1591 = vmatprep.subr.mxu0 0.0
        %v1592 = vand.u32 %v1545, 4294901760
        %1593 = vmatpush1.msra.mxu0 %v1592
        %1594 = vmatprep.subr.mxu0 0.0
        %1595 = vmatpush1.msra.mxu0 0.0
        %1596 = vmatprep.subr.mxu0 0.0
        %1597 = vmatpush1.msra.mxu0 0.0
        %1598 = vmatprep.subr.mxu0 0.0
        %1599 = vmatpush1.msra.mxu0 0.0
        %1600 = vmatprep.subr.mxu0 0.0
        %1601 = vmatpush1.msra.mxu0 0.0
        %1602 = vmatprep.subr.mxu0 0.0
        %1603 = vmatpush1.msra.mxu0 0.0
        %1604 = vmatprep.subr.mxu0 0.0
        %1605 = vmatpush1.msra.mxu0 0.0
        %1606 = vmatprep.subr.mxu0 0.0
        %1607 = vmatpush1.msra.mxu0 0.0
        %1608 = vmatprep.subr.mxu0 0.0
        %1609 = vmatpush1.msra.mxu0 0.0
        %1610 = vmatprep.subr.mxu0 0.0
        %1611 = vmatpush1.msra.mxu0 0.0
        %1612 = vmatprep.subr.mxu0 0.0
        %1613 = vmatpush1.msra.mxu0 0.0
        %1614 = vmatprep.subr.mxu0 0.0
        %1615 = vmatpush1.msra.mxu0 0.0
        %1616 = vmatprep.subr.mxu0 0.0
        %1617 = vmatpush1.msra.mxu0 0.0
        %1618 = vmatprep.subr.mxu0 0.0
        %1619 = vmatpush1.msra.mxu0 0.0
        %1620 = vmatprep.subr.mxu0 0.0
        %1621 = vmatpush1.msra.mxu0 0.0
        %1622 = vmatprep.subr.mxu0 0.0
        %1623 = vmatpush1.msra.mxu0 0.0
        %1624 = vmatprep.subr.mxu0 0.0
        %1625 = vmatpush1.msra.mxu0 0.0
        %1626 = vmatprep.mubr.f32.mxu0 0.0
        %v1627 = vand.u32 %v1528, 4294901760
        %v1628 = vsub.f32 %v1528, %v1627
        %v1629 = vand.u32 %v1628, 4294901760
        %v1630 = vsub.f32 %v1628, %v1629
        %v1631 = vand.u32 %v1630, 4294901760
        %1632 = vmatmul.mubr.f32.gmra.mrb[0].mxu0 %v1631
        %v1633 = vpop.f32.mrb[0].mxu0
        %v1634 = vadd.f32 0.0, %v1633
        %v1635 = vpop.f32.mrb[0].mxu0
        %1636 = vdwg.mxu0
        %1637 = vmatprep.subr.mxu0 0.0
        %v1638 = vand.u32 %v1530, 4294901760
        %v1639 = vsub.f32 %v1530, %v1638
        %v1640 = vand.u32 %v1639, 4294901760
        %v1641 = vsub.f32 %v1639, %v1640
        %v1642 = vand.u32 %v1641, 4294901760
        %1643 = vmatpush1.msra.mxu0 %v1642
        %1644 = vmatprep.subr.mxu0 0.0
        %v1645 = vand.u32 %v1531, 4294901760
        %v1646 = vsub.f32 %v1531, %v1645
        %v1647 = vand.u32 %v1646, 4294901760
        %v1648 = vsub.f32 %v1646, %v1647
        %v1649 = vand.u32 %v1648, 4294901760
        %1650 = vmatpush1.msra.mxu0 %v1649
        %1651 = vmatprep.subr.mxu0 0.0
        %v1652 = vand.u32 %v1532, 4294901760
        %v1653 = vsub.f32 %v1532, %v1652
        %v1654 = vand.u32 %v1653, 4294901760
        %v1655 = vsub.f32 %v1653, %v1654
        %v1656 = vand.u32 %v1655, 4294901760
        %1657 = vmatpush1.msra.mxu0 %v1656
        %1658 = vmatprep.subr.mxu0 0.0
        %v1659 = vand.u32 %v1533, 4294901760
        %v1660 = vsub.f32 %v1533, %v1659
        %v1661 = vand.u32 %v1660, 4294901760
        %v1662 = vsub.f32 %v1660, %v1661
        %v1663 = vand.u32 %v1662, 4294901760
        %1664 = vmatpush1.msra.mxu0 %v1663
        %1665 = vmatprep.subr.mxu0 0.0
        %v1666 = vand.u32 %v1534, 4294901760
        %v1667 = vsub.f32 %v1534, %v1666
        %v1668 = vand.u32 %v1667, 4294901760
        %v1669 = vsub.f32 %v1667, %v1668
        %v1670 = vand.u32 %v1669, 4294901760
        %1671 = vmatpush1.msra.mxu0 %v1670
        %1672 = vmatprep.subr.mxu0 0.0
        %v1673 = vand.u32 %v1535, 4294901760
        %v1674 = vsub.f32 %v1535, %v1673
        %v1675 = vand.u32 %v1674, 4294901760
        %v1676 = vsub.f32 %v1674, %v1675
        %v1677 = vand.u32 %v1676, 4294901760
        %1678 = vmatpush1.msra.mxu0 %v1677
        %1679 = vmatprep.subr.mxu0 0.0
        %v1680 = vand.u32 %v1536, 4294901760
        %v1681 = vsub.f32 %v1536, %v1680
        %v1682 = vand.u32 %v1681, 4294901760
        %v1683 = vsub.f32 %v1681, %v1682
        %v1684 = vand.u32 %v1683, 4294901760
        %1685 = vmatpush1.msra.mxu0 %v1684
        %1686 = vmatprep.subr.mxu0 0.0
        %v1687 = vand.u32 %v1537, 4294901760
        %v1688 = vsub.f32 %v1537, %v1687
        %v1689 = vand.u32 %v1688, 4294901760
        %v1690 = vsub.f32 %v1688, %v1689
        %v1691 = vand.u32 %v1690, 4294901760
        %1692 = vmatpush1.msra.mxu0 %v1691
        %1693 = vmatprep.subr.mxu0 0.0
        %v1694 = vand.u32 %v1538, 4294901760
        %v1695 = vsub.f32 %v1538, %v1694
        %v1696 = vand.u32 %v1695, 4294901760
        %v1697 = vsub.f32 %v1695, %v1696
        %v1698 = vand.u32 %v1697, 4294901760
        %1699 = vmatpush1.msra.mxu0 %v1698
        %1700 = vmatprep.subr.mxu0 0.0
        %v1701 = vand.u32 %v1539, 4294901760
        %v1702 = vsub.f32 %v1539, %v1701
        %v1703 = vand.u32 %v1702, 4294901760
        %v1704 = vsub.f32 %v1702, %v1703
        %v1705 = vand.u32 %v1704, 4294901760
        %1706 = vmatpush1.msra.mxu0 %v1705
        %1707 = vmatprep.subr.mxu0 0.0
        %v1708 = vand.u32 %v1540, 4294901760
        %v1709 = vsub.f32 %v1540, %v1708
        %v1710 = vand.u32 %v1709, 4294901760
        %v1711 = vsub.f32 %v1709, %v1710
        %v1712 = vand.u32 %v1711, 4294901760
        %1713 = vmatpush1.msra.mxu0 %v1712
        %1714 = vmatprep.subr.mxu0 0.0
        %v1715 = vand.u32 %v1541, 4294901760
        %v1716 = vsub.f32 %v1541, %v1715
        %v1717 = vand.u32 %v1716, 4294901760
        %v1718 = vsub.f32 %v1716, %v1717
        %v1719 = vand.u32 %v1718, 4294901760
        %1720 = vmatpush1.msra.mxu0 %v1719
        %1721 = vmatprep.subr.mxu0 0.0
        %v1722 = vand.u32 %v1542, 4294901760
        %v1723 = vsub.f32 %v1542, %v1722
        %v1724 = vand.u32 %v1723, 4294901760
        %v1725 = vsub.f32 %v1723, %v1724
        %v1726 = vand.u32 %v1725, 4294901760
        %1727 = vmatpush1.msra.mxu0 %v1726
        %1728 = vmatprep.subr.mxu0 0.0
        %v1729 = vand.u32 %v1543, 4294901760
        %v1730 = vsub.f32 %v1543, %v1729
        %v1731 = vand.u32 %v1730, 4294901760
        %v1732 = vsub.f32 %v1730, %v1731
        %v1733 = vand.u32 %v1732, 4294901760
        %1734 = vmatpush1.msra.mxu0 %v1733
        %1735 = vmatprep.subr.mxu0 0.0
        %v1736 = vand.u32 %v1544, 4294901760
        %v1737 = vsub.f32 %v1544, %v1736
        %v1738 = vand.u32 %v1737, 4294901760
        %v1739 = vsub.f32 %v1737, %v1738
        %v1740 = vand.u32 %v1739, 4294901760
        %1741 = vmatpush1.msra.mxu0 %v1740
        %1742 = vmatprep.subr.mxu0 0.0
        %v1743 = vand.u32 %v1545, 4294901760
        %v1744 = vsub.f32 %v1545, %v1743
        %v1745 = vand.u32 %v1744, 4294901760
        %v1746 = vsub.f32 %v1744, %v1745
        %v1747 = vand.u32 %v1746, 4294901760
        %1748 = vmatpush1.msra.mxu0 %v1747
        %1749 = vmatprep.subr.mxu0 0.0
        %1750 = vmatpush1.msra.mxu0 0.0
        %1751 = vmatprep.subr.mxu0 0.0
        %1752 = vmatpush1.msra.mxu0 0.0
        %1753 = vmatprep.subr.mxu0 0.0
        %1754 = vmatpush1.msra.mxu0 0.0
        %1755 = vmatprep.subr.mxu0 0.0
        %1756 = vmatpush1.msra.mxu0 0.0
        %1757 = vmatprep.subr.mxu0 0.0
        %1758 = vmatpush1.msra.mxu0 0.0
        %1759 = vmatprep.subr.mxu0 0.0
        %1760 = vmatpush1.msra.mxu0 0.0
        %1761 = vmatprep.subr.mxu0 0.0
        %1762 = vmatpush1.msra.mxu0 0.0
        %1763 = vmatprep.subr.mxu0 0.0
        %1764 = vmatpush1.msra.mxu0 0.0
        %1765 = vmatprep.subr.mxu0 0.0
        %1766 = vmatpush1.msra.mxu0 0.0
        %1767 = vmatprep.subr.mxu0 0.0
        %1768 = vmatpush1.msra.mxu0 0.0
        %1769 = vmatprep.subr.mxu0 0.0
        %1770 = vmatpush1.msra.mxu0 0.0
        %1771 = vmatprep.subr.mxu0 0.0
        %1772 = vmatpush1.msra.mxu0 0.0
        %1773 = vmatprep.subr.mxu0 0.0
        %1774 = vmatpush1.msra.mxu0 0.0
        %1775 = vmatprep.subr.mxu0 0.0
        %1776 = vmatpush1.msra.mxu0 0.0
        %1777 = vmatprep.subr.mxu0 0.0
        %1778 = vmatpush1.msra.mxu0 0.0
        %1779 = vmatprep.subr.mxu0 0.0
        %1780 = vmatpush1.msra.mxu0 0.0
        %1781 = vmatprep.mubr.f32.mxu0 0.0
        %v1782 = vand.u32 %v1528, 4294901760
        %1783 = vmatmul.mubr.f32.gmra.mrb[0].mxu0 %v1782
        %v1784 = vpop.f32.mrb[0].mxu0
        %v1785 = vadd.f32 %v1634, %v1784
        %v1786 = vpop.f32.mrb[0].mxu0
        %1787 = vdwg.mxu0
        %1788 = vmatprep.subr.mxu0 0.0
        %v1789 = vand.u32 %v1530, 4294901760
        %v1790 = vsub.f32 %v1530, %v1789
        %1791 = vmatpush1.msra.mxu0 %v1790
        %1792 = vmatprep.subr.mxu0 0.0
        %v1793 = vand.u32 %v1531, 4294901760
        %v1794 = vsub.f32 %v1531, %v1793
        %1795 = vmatpush1.msra.mxu0 %v1794
        %1796 = vmatprep.subr.mxu0 0.0
        %v1797 = vand.u32 %v1532, 4294901760
        %v1798 = vsub.f32 %v1532, %v1797
        %1799 = vmatpush1.msra.mxu0 %v1798
        %1800 = vmatprep.subr.mxu0 0.0
        %v1801 = vand.u32 %v1533, 4294901760
        %v1802 = vsub.f32 %v1533, %v1801
        %1803 = vmatpush1.msra.mxu0 %v1802
        %1804 = vmatprep.subr.mxu0 0.0
        %v1805 = vand.u32 %v1534, 4294901760
        %v1806 = vsub.f32 %v1534, %v1805
        %1807 = vmatpush1.msra.mxu0 %v1806
        %1808 = vmatprep.subr.mxu0 0.0
        %v1809 = vand.u32 %v1535, 4294901760
        %v1810 = vsub.f32 %v1535, %v1809
        %1811 = vmatpush1.msra.mxu0 %v1810
        %1812 = vmatprep.subr.mxu0 0.0
        %v1813 = vand.u32 %v1536, 4294901760
        %v1814 = vsub.f32 %v1536, %v1813
        %1815 = vmatpush1.msra.mxu0 %v1814
        %1816 = vmatprep.subr.mxu0 0.0
        %v1817 = vand.u32 %v1537, 4294901760
        %v1818 = vsub.f32 %v1537, %v1817
        %1819 = vmatpush1.msra.mxu0 %v1818
        %1820 = vmatprep.subr.mxu0 0.0
        %v1821 = vand.u32 %v1538, 4294901760
        %v1822 = vsub.f32 %v1538, %v1821
        %1823 = vmatpush1.msra.mxu0 %v1822
        %1824 = vmatprep.subr.mxu0 0.0
        %v1825 = vand.u32 %v1539, 4294901760
        %v1826 = vsub.f32 %v1539, %v1825
        %1827 = vmatpush1.msra.mxu0 %v1826
        %1828 = vmatprep.subr.mxu0 0.0
        %v1829 = vand.u32 %v1540, 4294901760
        %v1830 = vsub.f32 %v1540, %v1829
        %1831 = vmatpush1.msra.mxu0 %v1830
        %1832 = vmatprep.subr.mxu0 0.0
        %v1833 = vand.u32 %v1541, 4294901760
        %v1834 = vsub.f32 %v1541, %v1833
        %1835 = vmatpush1.msra.mxu0 %v1834
        %1836 = vmatprep.subr.mxu0 0.0
        %v1837 = vand.u32 %v1542, 4294901760
        %v1838 = vsub.f32 %v1542, %v1837
        %1839 = vmatpush1.msra.mxu0 %v1838
        %1840 = vmatprep.subr.mxu0 0.0
        %v1841 = vand.u32 %v1543, 4294901760
        %v1842 = vsub.f32 %v1543, %v1841
        %1843 = vmatpush1.msra.mxu0 %v1842
        %1844 = vmatprep.subr.mxu0 0.0
        %v1845 = vand.u32 %v1544, 4294901760
        %v1846 = vsub.f32 %v1544, %v1845
        %1847 = vmatpush1.msra.mxu0 %v1846
        %1848 = vmatprep.subr.mxu0 0.0
        %v1849 = vand.u32 %v1545, 4294901760
        %v1850 = vsub.f32 %v1545, %v1849
        %1851 = vmatpush1.msra.mxu0 %v1850
        %1852 = vmatprep.subr.mxu0 0.0
        %1853 = vmatpush1.msra.mxu0 0.0
        %1854 = vmatprep.subr.mxu0 0.0
        %1855 = vmatpush1.msra.mxu0 0.0
        %1856 = vmatprep.subr.mxu0 0.0
        %1857 = vmatpush1.msra.mxu0 0.0
        %1858 = vmatprep.subr.mxu0 0.0
        %1859 = vmatpush1.msra.mxu0 0.0
        %1860 = vmatprep.subr.mxu0 0.0
        %1861 = vmatpush1.msra.mxu0 0.0
        %1862 = vmatprep.subr.mxu0 0.0
        %1863 = vmatpush1.msra.mxu0 0.0
        %1864 = vmatprep.subr.mxu0 0.0
        %1865 = vmatpush1.msra.mxu0 0.0
        %1866 = vmatprep.subr.mxu0 0.0
        %1867 = vmatpush1.msra.mxu0 0.0
        %1868 = vmatprep.subr.mxu0 0.0
        %1869 = vmatpush1.msra.mxu0 0.0
        %1870 = vmatprep.subr.mxu0 0.0
        %1871 = vmatpush1.msra.mxu0 0.0
        %1872 = vmatprep.subr.mxu0 0.0
        %1873 = vmatpush1.msra.mxu0 0.0
        %1874 = vmatprep.subr.mxu0 0.0
        %1875 = vmatpush1.msra.mxu0 0.0
        %1876 = vmatprep.subr.mxu0 0.0
        %1877 = vmatpush1.msra.mxu0 0.0
        %1878 = vmatprep.subr.mxu0 0.0
        %1879 = vmatpush1.msra.mxu0 0.0
        %1880 = vmatprep.subr.mxu0 0.0
        %1881 = vmatpush1.msra.mxu0 0.0
        %1882 = vmatprep.subr.mxu0 0.0
        %1883 = vmatpush1.msra.mxu0 0.0
        %1884 = vmatprep.mubr.f32.mxu0 0.0
        %v1885 = vand.u32 %v1528, 4294901760
        %v1886 = vsub.f32 %v1528, %v1885
        %1887 = vmatmul.mubr.f32.gmra.mrb[0].mxu0 %v1886
        %v1888 = vpop.f32.mrb[0].mxu0
        %v1889 = vadd.f32 %v1785, %v1888
        %v1890 = vpop.f32.mrb[0].mxu0
        %1891 = vdwg.mxu0
        %1892 = vmatprep.subr.mxu0 0.0
        %v1893 = vand.u32 %v1530, 4294901760
        %1894 = vmatpush1.msra.mxu0 %v1893
        %1895 = vmatprep.subr.mxu0 0.0
        %v1896 = vand.u32 %v1531, 4294901760
        %1897 = vmatpush1.msra.mxu0 %v1896
        %1898 = vmatprep.subr.mxu0 0.0
        %v1899 = vand.u32 %v1532, 4294901760
        %1900 = vmatpush1.msra.mxu0 %v1899
        %1901 = vmatprep.subr.mxu0 0.0
        %v1902 = vand.u32 %v1533, 4294901760
        %1903 = vmatpush1.msra.mxu0 %v1902
        %1904 = vmatprep.subr.mxu0 0.0
        %v1905 = vand.u32 %v1534, 4294901760
        %1906 = vmatpush1.msra.mxu0 %v1905
        %1907 = vmatprep.subr.mxu0 0.0
        %v1908 = vand.u32 %v1535, 4294901760
        %1909 = vmatpush1.msra.mxu0 %v1908
        %1910 = vmatprep.subr.mxu0 0.0
        %v1911 = vand.u32 %v1536, 4294901760
        %1912 = vmatpush1.msra.mxu0 %v1911
        %1913 = vmatprep.subr.mxu0 0.0
        %v1914 = vand.u32 %v1537, 4294901760
        %1915 = vmatpush1.msra.mxu0 %v1914
        %1916 = vmatprep.subr.mxu0 0.0
        %v1917 = vand.u32 %v1538, 4294901760
        %1918 = vmatpush1.msra.mxu0 %v1917
        %1919 = vmatprep.subr.mxu0 0.0
        %v1920 = vand.u32 %v1539, 4294901760
        %1921 = vmatpush1.msra.mxu0 %v1920
        %1922 = vmatprep.subr.mxu0 0.0
        %v1923 = vand.u32 %v1540, 4294901760
        %1924 = vmatpush1.msra.mxu0 %v1923
        %1925 = vmatprep.subr.mxu0 0.0
        %v1926 = vand.u32 %v1541, 4294901760
        %1927 = vmatpush1.msra.mxu0 %v1926
        %1928 = vmatprep.subr.mxu0 0.0
        %v1929 = vand.u32 %v1542, 4294901760
        %1930 = vmatpush1.msra.mxu0 %v1929
        %1931 = vmatprep.subr.mxu0 0.0
        %v1932 = vand.u32 %v1543, 4294901760
        %1933 = vmatpush1.msra.mxu0 %v1932
        %1934 = vmatprep.subr.mxu0 0.0
        %v1935 = vand.u32 %v1544, 4294901760
        %1936 = vmatpush1.msra.mxu0 %v1935
        %1937 = vmatprep.subr.mxu0 0.0
        %v1938 = vand.u32 %v1545, 4294901760
        %1939 = vmatpush1.msra.mxu0 %v1938
        %1940 = vmatprep.subr.mxu0 0.0
        %1941 = vmatpush1.msra.mxu0 0.0
        %1942 = vmatprep.subr.mxu0 0.0
        %1943 = vmatpush1.msra.mxu0 0.0
        %1944 = vmatprep.subr.mxu0 0.0
        %1945 = vmatpush1.msra.mxu0 0.0
        %1946 = vmatprep.subr.mxu0 0.0
        %1947 = vmatpush1.msra.mxu0 0.0
        %1948 = vmatprep.subr.mxu0 0.0
        %1949 = vmatpush1.msra.mxu0 0.0
        %1950 = vmatprep.subr.mxu0 0.0
        %1951 = vmatpush1.msra.mxu0 0.0
        %1952 = vmatprep.subr.mxu0 0.0
        %1953 = vmatpush1.msra.mxu0 0.0
        %1954 = vmatprep.subr.mxu0 0.0
        %1955 = vmatpush1.msra.mxu0 0.0
        %1956 = vmatprep.subr.mxu0 0.0
        %1957 = vmatpush1.msra.mxu0 0.0
        %1958 = vmatprep.subr.mxu0 0.0
        %1959 = vmatpush1.msra.mxu0 0.0
        %1960 = vmatprep.subr.mxu0 0.0
        %1961 = vmatpush1.msra.mxu0 0.0
        %1962 = vmatprep.subr.mxu0 0.0
        %1963 = vmatpush1.msra.mxu0 0.0
        %1964 = vmatprep.subr.mxu0 0.0
        %1965 = vmatpush1.msra.mxu0 0.0
        %1966 = vmatprep.subr.mxu0 0.0
        %1967 = vmatpush1.msra.mxu0 0.0
        %1968 = vmatprep.subr.mxu0 0.0
        %1969 = vmatpush1.msra.mxu0 0.0
        %1970 = vmatprep.subr.mxu0 0.0
        %1971 = vmatpush1.msra.mxu0 0.0
        %1972 = vmatprep.mubr.f32.mxu0 0.0
        %v1973 = vand.u32 %v1528, 4294901760
        %v1974 = vsub.f32 %v1528, %v1973
        %v1975 = vand.u32 %v1974, 4294901760
        %1976 = vmatmul.mubr.f32.gmra.mrb[0].mxu0 %v1975
        %v1977 = vpop.f32.mrb[0].mxu0
        %v1978 = vadd.f32 %v1889, %v1977
        %v1979 = vpop.f32.mrb[0].mxu0
        %1980 = vdwg.mxu0
        %1981 = vmatprep.subr.mxu0 0.0
        %v1982 = vand.u32 %v1530, 4294901760
        %v1983 = vsub.f32 %v1530, %v1982
        %v1984 = vand.u32 %v1983, 4294901760
        %1985 = vmatpush1.msra.mxu0 %v1984
        %1986 = vmatprep.subr.mxu0 0.0
        %v1987 = vand.u32 %v1531, 4294901760
        %v1988 = vsub.f32 %v1531, %v1987
        %v1989 = vand.u32 %v1988, 4294901760
        %1990 = vmatpush1.msra.mxu0 %v1989
        %1991 = vmatprep.subr.mxu0 0.0
        %v1992 = vand.u32 %v1532, 4294901760
        %v1993 = vsub.f32 %v1532, %v1992
        %v1994 = vand.u32 %v1993, 4294901760
        %1995 = vmatpush1.msra.mxu0 %v1994
        %1996 = vmatprep.subr.mxu0 0.0
        %v1997 = vand.u32 %v1533, 4294901760
        %v1998 = vsub.f32 %v1533, %v1997
        %v1999 = vand.u32 %v1998, 4294901760
        %2000 = vmatpush1.msra.mxu0 %v1999
        %2001 = vmatprep.subr.mxu0 0.0
        %v2002 = vand.u32 %v1534, 4294901760
        %v2003 = vsub.f32 %v1534, %v2002
        %v2004 = vand.u32 %v2003, 4294901760
        %2005 = vmatpush1.msra.mxu0 %v2004
        %2006 = vmatprep.subr.mxu0 0.0
        %v2007 = vand.u32 %v1535, 4294901760
        %v2008 = vsub.f32 %v1535, %v2007
        %v2009 = vand.u32 %v2008, 4294901760
        %2010 = vmatpush1.msra.mxu0 %v2009
        %2011 = vmatprep.subr.mxu0 0.0
        %v2012 = vand.u32 %v1536, 4294901760
        %v2013 = vsub.f32 %v1536, %v2012
        %v2014 = vand.u32 %v2013, 4294901760
        %2015 = vmatpush1.msra.mxu0 %v2014
        %2016 = vmatprep.subr.mxu0 0.0
        %v2017 = vand.u32 %v1537, 4294901760
        %v2018 = vsub.f32 %v1537, %v2017
        %v2019 = vand.u32 %v2018, 4294901760
        %2020 = vmatpush1.msra.mxu0 %v2019
        %2021 = vmatprep.subr.mxu0 0.0
        %v2022 = vand.u32 %v1538, 4294901760
        %v2023 = vsub.f32 %v1538, %v2022
        %v2024 = vand.u32 %v2023, 4294901760
        %2025 = vmatpush1.msra.mxu0 %v2024
        %2026 = vmatprep.subr.mxu0 0.0
        %v2027 = vand.u32 %v1539, 4294901760
        %v2028 = vsub.f32 %v1539, %v2027
        %v2029 = vand.u32 %v2028, 4294901760
        %2030 = vmatpush1.msra.mxu0 %v2029
        %2031 = vmatprep.subr.mxu0 0.0
        %v2032 = vand.u32 %v1540, 4294901760
        %v2033 = vsub.f32 %v1540, %v2032
        %v2034 = vand.u32 %v2033, 4294901760
        %2035 = vmatpush1.msra.mxu0 %v2034
        %2036 = vmatprep.subr.mxu0 0.0
        %v2037 = vand.u32 %v1541, 4294901760
        %v2038 = vsub.f32 %v1541, %v2037
        %v2039 = vand.u32 %v2038, 4294901760
        %2040 = vmatpush1.msra.mxu0 %v2039
        %2041 = vmatprep.subr.mxu0 0.0
        %v2042 = vand.u32 %v1542, 4294901760
        %v2043 = vsub.f32 %v1542, %v2042
        %v2044 = vand.u32 %v2043, 4294901760
        %2045 = vmatpush1.msra.mxu0 %v2044
        %2046 = vmatprep.subr.mxu0 0.0
        %v2047 = vand.u32 %v1543, 4294901760
        %v2048 = vsub.f32 %v1543, %v2047
        %v2049 = vand.u32 %v2048, 4294901760
        %2050 = vmatpush1.msra.mxu0 %v2049
        %2051 = vmatprep.subr.mxu0 0.0
        %v2052 = vand.u32 %v1544, 4294901760
        %v2053 = vsub.f32 %v1544, %v2052
        %v2054 = vand.u32 %v2053, 4294901760
        %2055 = vmatpush1.msra.mxu0 %v2054
        %2056 = vmatprep.subr.mxu0 0.0
        %v2057 = vand.u32 %v1545, 4294901760
        %v2058 = vsub.f32 %v1545, %v2057
        %v2059 = vand.u32 %v2058, 4294901760
        %2060 = vmatpush1.msra.mxu0 %v2059
        %2061 = vmatprep.subr.mxu0 0.0
        %2062 = vmatpush1.msra.mxu0 0.0
        %2063 = vmatprep.subr.mxu0 0.0
        %2064 = vmatpush1.msra.mxu0 0.0
        %2065 = vmatprep.subr.mxu0 0.0
        %2066 = vmatpush1.msra.mxu0 0.0
        %2067 = vmatprep.subr.mxu0 0.0
        %2068 = vmatpush1.msra.mxu0 0.0
        %2069 = vmatprep.subr.mxu0 0.0
        %2070 = vmatpush1.msra.mxu0 0.0
        %2071 = vmatprep.subr.mxu0 0.0
        %2072 = vmatpush1.msra.mxu0 0.0
        %2073 = vmatprep.subr.mxu0 0.0
        %2074 = vmatpush1.msra.mxu0 0.0
        %2075 = vmatprep.subr.mxu0 0.0
        %2076 = vmatpush1.msra.mxu0 0.0
        %2077 = vmatprep.subr.mxu0 0.0
        %2078 = vmatpush1.msra.mxu0 0.0
        %2079 = vmatprep.subr.mxu0 0.0
        %2080 = vmatpush1.msra.mxu0 0.0
        %2081 = vmatprep.subr.mxu0 0.0
        %2082 = vmatpush1.msra.mxu0 0.0
        %2083 = vmatprep.subr.mxu0 0.0
        %2084 = vmatpush1.msra.mxu0 0.0
        %2085 = vmatprep.subr.mxu0 0.0
        %2086 = vmatpush1.msra.mxu0 0.0
        %2087 = vmatprep.subr.mxu0 0.0
        %2088 = vmatpush1.msra.mxu0 0.0
        %2089 = vmatprep.subr.mxu0 0.0
        %2090 = vmatpush1.msra.mxu0 0.0
        %2091 = vmatprep.subr.mxu0 0.0
        %2092 = vmatpush1.msra.mxu0 0.0
        %2093 = vmatprep.mubr.f32.mxu0 0.0
        %v2094 = vand.u32 %v1528, 4294901760
        %2095 = vmatmul.mubr.f32.gmra.mrb[0].mxu0 %v2094
        %v2096 = vpop.f32.mrb[0].mxu0
        %v2097 = vadd.f32 %v1978, %v2096
        %v2098 = vpop.f32.mrb[0].mxu0
        %2099 = vdwg.mxu0
        %2100 = vmatprep.subr.mxu0 0.0
        %v2101 = vand.u32 %v1530, 4294901760
        %2102 = vmatpush1.msra.mxu0 %v2101
        %2103 = vmatprep.subr.mxu0 0.0
        %v2104 = vand.u32 %v1531, 4294901760
        %2105 = vmatpush1.msra.mxu0 %v2104
        %2106 = vmatprep.subr.mxu0 0.0
        %v2107 = vand.u32 %v1532, 4294901760
        %2108 = vmatpush1.msra.mxu0 %v2107
        %2109 = vmatprep.subr.mxu0 0.0
        %v2110 = vand.u32 %v1533, 4294901760
        %2111 = vmatpush1.msra.mxu0 %v2110
        %2112 = vmatprep.subr.mxu0 0.0
        %v2113 = vand.u32 %v1534, 4294901760
        %2114 = vmatpush1.msra.mxu0 %v2113
        %2115 = vmatprep.subr.mxu0 0.0
        %v2116 = vand.u32 %v1535, 4294901760
        %2117 = vmatpush1.msra.mxu0 %v2116
        %2118 = vmatprep.subr.mxu0 0.0
        %v2119 = vand.u32 %v1536, 4294901760
        %2120 = vmatpush1.msra.mxu0 %v2119
        %2121 = vmatprep.subr.mxu0 0.0
        %v2122 = vand.u32 %v1537, 4294901760
        %2123 = vmatpush1.msra.mxu0 %v2122
        %2124 = vmatprep.subr.mxu0 0.0
        %v2125 = vand.u32 %v1538, 4294901760
        %2126 = vmatpush1.msra.mxu0 %v2125
        %2127 = vmatprep.subr.mxu0 0.0
        %v2128 = vand.u32 %v1539, 4294901760
        %2129 = vmatpush1.msra.mxu0 %v2128
        %2130 = vmatprep.subr.mxu0 0.0
        %v2131 = vand.u32 %v1540, 4294901760
        %2132 = vmatpush1.msra.mxu0 %v2131
        %2133 = vmatprep.subr.mxu0 0.0
        %v2134 = vand.u32 %v1541, 4294901760
        %2135 = vmatpush1.msra.mxu0 %v2134
        %2136 = vmatprep.subr.mxu0 0.0
        %v2137 = vand.u32 %v1542, 4294901760
        %2138 = vmatpush1.msra.mxu0 %v2137
        %2139 = vmatprep.subr.mxu0 0.0
        %v2140 = vand.u32 %v1543, 4294901760
        %2141 = vmatpush1.msra.mxu0 %v2140
        %2142 = vmatprep.subr.mxu0 0.0
        %v2143 = vand.u32 %v1544, 4294901760
        %2144 = vmatpush1.msra.mxu0 %v2143
        %2145 = vmatprep.subr.mxu0 0.0
        %v2146 = vand.u32 %v1545, 4294901760
        %2147 = vmatpush1.msra.mxu0 %v2146
        %2148 = vmatprep.subr.mxu0 0.0
        %2149 = vmatpush1.msra.mxu0 0.0
        %2150 = vmatprep.subr.mxu0 0.0
        %2151 = vmatpush1.msra.mxu0 0.0
        %2152 = vmatprep.subr.mxu0 0.0
        %2153 = vmatpush1.msra.mxu0 0.0
        %2154 = vmatprep.subr.mxu0 0.0
        %2155 = vmatpush1.msra.mxu0 0.0
        %2156 = vmatprep.subr.mxu0 0.0
        %2157 = vmatpush1.msra.mxu0 0.0
        %2158 = vmatprep.subr.mxu0 0.0
        %2159 = vmatpush1.msra.mxu0 0.0
        %2160 = vmatprep.subr.mxu0 0.0
        %2161 = vmatpush1.msra.mxu0 0.0
        %2162 = vmatprep.subr.mxu0 0.0
        %2163 = vmatpush1.msra.mxu0 0.0
        %2164 = vmatprep.subr.mxu0 0.0
        %2165 = vmatpush1.msra.mxu0 0.0
        %2166 = vmatprep.subr.mxu0 0.0
        %2167 = vmatpush1.msra.mxu0 0.0
        %2168 = vmatprep.subr.mxu0 0.0
        %2169 = vmatpush1.msra.mxu0 0.0
        %2170 = vmatprep.subr.mxu0 0.0
        %2171 = vmatpush1.msra.mxu0 0.0
        %2172 = vmatprep.subr.mxu0 0.0
        %2173 = vmatpush1.msra.mxu0 0.0
        %2174 = vmatprep.subr.mxu0 0.0
        %2175 = vmatpush1.msra.mxu0 0.0
        %2176 = vmatprep.subr.mxu0 0.0
        %2177 = vmatpush1.msra.mxu0 0.0
        %2178 = vmatprep.subr.mxu0 0.0
        %2179 = vmatpush1.msra.mxu0 0.0
        %2180 = vmatprep.mubr.f32.mxu0 0.0
        %v2181 = vand.u32 %v1528, 4294901760
        %2182 = vmatmul.mubr.f32.gmra.mrb[0].mxu0 %v2181
        %v2183 = vpop.f32.mrb[0].mxu0
        %v2184 = vadd.f32 %v2097, %v2183
        %v2185 = vpop.f32.mrb[0].mxu0
        %2186 = vdwg.mxu0
        %s2187 = scalar_lea.vmem %s202, 16 [#allocation7]
        %2188 = vst [vmem:[%s2187] sm:$0xff] %v2184
        %s2189 = scalar_lea.vmem %s168, 24 [#allocation2]
        %v2190 = vld [vmem:[%s2189] sm:$0xff]
        %s2191 = scalar_lea.vmem %s177, 384 [#allocation5]
        %v2192 = vld [vmem:[%s2191] sm:$0xff]
        %v2193 = vld [vmem:[%s2191 + $0x8] sm:$0xff]
        %v2194 = vld [vmem:[%s2191 + $0x10] sm:$0xff]
        %v2195 = vld [vmem:[%s2191 + $0x18] sm:$0xff]
        %v2196 = vld [vmem:[%s2191 + $0x20] sm:$0xff]
        %v2197 = vld [vmem:[%s2191 + $0x28] sm:$0xff]
        %v2198 = vld [vmem:[%s2191 + $0x30] sm:$0xff]
        %v2199 = vld [vmem:[%s2191 + $0x38] sm:$0xff]
        %v2200 = vld [vmem:[%s2191 + $0x40] sm:$0xff]
        %v2201 = vld [vmem:[%s2191 + $0x48] sm:$0xff]
        %v2202 = vld [vmem:[%s2191 + $0x50] sm:$0xff]
        %v2203 = vld [vmem:[%s2191 + $0x58] sm:$0xff]
        %v2204 = vld [vmem:[%s2191 + $0x60] sm:$0xff]
        %v2205 = vld [vmem:[%s2191 + $0x68] sm:$0xff]
        %v2206 = vld [vmem:[%s2191 + $0x70] sm:$0xff]
        %v2207 = vld [vmem:[%s2191 + $0x78] sm:$0xff]
        %2208 = vmatprep.subr.mxu0 0.0
        %v2209 = vand.u32 %v2192, 4294901760
        %2210 = vmatpush1.msra.mxu0 %v2209
        %2211 = vmatprep.subr.mxu0 0.0
        %v2212 = vand.u32 %v2193, 4294901760
        %2213 = vmatpush1.msra.mxu0 %v2212
        %2214 = vmatprep.subr.mxu0 0.0
        %v2215 = vand.u32 %v2194, 4294901760
        %2216 = vmatpush1.msra.mxu0 %v2215
        %2217 = vmatprep.subr.mxu0 0.0
        %v2218 = vand.u32 %v2195, 4294901760
        %2219 = vmatpush1.msra.mxu0 %v2218
        %2220 = vmatprep.subr.mxu0 0.0
        %v2221 = vand.u32 %v2196, 4294901760
        %2222 = vmatpush1.msra.mxu0 %v2221
        %2223 = vmatprep.subr.mxu0 0.0
        %v2224 = vand.u32 %v2197, 4294901760
        %2225 = vmatpush1.msra.mxu0 %v2224
        %2226 = vmatprep.subr.mxu0 0.0
        %v2227 = vand.u32 %v2198, 4294901760
        %2228 = vmatpush1.msra.mxu0 %v2227
        %2229 = vmatprep.subr.mxu0 0.0
        %v2230 = vand.u32 %v2199, 4294901760
        %2231 = vmatpush1.msra.mxu0 %v2230
        %2232 = vmatprep.subr.mxu0 0.0
        %v2233 = vand.u32 %v2200, 4294901760
        %2234 = vmatpush1.msra.mxu0 %v2233
        %2235 = vmatprep.subr.mxu0 0.0
        %v2236 = vand.u32 %v2201, 4294901760
        %2237 = vmatpush1.msra.mxu0 %v2236
        %2238 = vmatprep.subr.mxu0 0.0
        %v2239 = vand.u32 %v2202, 4294901760
        %2240 = vmatpush1.msra.mxu0 %v2239
        %2241 = vmatprep.subr.mxu0 0.0
        %v2242 = vand.u32 %v2203, 4294901760
        %2243 = vmatpush1.msra.mxu0 %v2242
        %2244 = vmatprep.subr.mxu0 0.0
        %v2245 = vand.u32 %v2204, 4294901760
        %2246 = vmatpush1.msra.mxu0 %v2245
        %2247 = vmatprep.subr.mxu0 0.0
        %v2248 = vand.u32 %v2205, 4294901760
        %2249 = vmatpush1.msra.mxu0 %v2248
        %2250 = vmatprep.subr.mxu0 0.0
        %v2251 = vand.u32 %v2206, 4294901760
        %2252 = vmatpush1.msra.mxu0 %v2251
        %2253 = vmatprep.subr.mxu0 0.0
        %v2254 = vand.u32 %v2207, 4294901760
        %2255 = vmatpush1.msra.mxu0 %v2254
        %2256 = vmatprep.subr.mxu0 0.0
        %2257 = vmatpush1.msra.mxu0 0.0
        %2258 = vmatprep.subr.mxu0 0.0
        %2259 = vmatpush1.msra.mxu0 0.0
        %2260 = vmatprep.subr.mxu0 0.0
        %2261 = vmatpush1.msra.mxu0 0.0
        %2262 = vmatprep.subr.mxu0 0.0
        %2263 = vmatpush1.msra.mxu0 0.0
        %2264 = vmatprep.subr.mxu0 0.0
        %2265 = vmatpush1.msra.mxu0 0.0
        %2266 = vmatprep.subr.mxu0 0.0
        %2267 = vmatpush1.msra.mxu0 0.0
        %2268 = vmatprep.subr.mxu0 0.0
        %2269 = vmatpush1.msra.mxu0 0.0
        %2270 = vmatprep.subr.mxu0 0.0
        %2271 = vmatpush1.msra.mxu0 0.0
        %2272 = vmatprep.subr.mxu0 0.0
        %2273 = vmatpush1.msra.mxu0 0.0
        %2274 = vmatprep.subr.mxu0 0.0
        %2275 = vmatpush1.msra.mxu0 0.0
        %2276 = vmatprep.subr.mxu0 0.0
        %2277 = vmatpush1.msra.mxu0 0.0
        %2278 = vmatprep.subr.mxu0 0.0
        %2279 = vmatpush1.msra.mxu0 0.0
        %2280 = vmatprep.subr.mxu0 0.0
        %2281 = vmatpush1.msra.mxu0 0.0
        %2282 = vmatprep.subr.mxu0 0.0
        %2283 = vmatpush1.msra.mxu0 0.0
        %2284 = vmatprep.subr.mxu0 0.0
        %2285 = vmatpush1.msra.mxu0 0.0
        %2286 = vmatprep.subr.mxu0 0.0
        %2287 = vmatpush1.msra.mxu0 0.0
        %2288 = vmatprep.mubr.f32.mxu0 0.0
        %v2289 = vand.u32 %v2190, 4294901760
        %v2290 = vsub.f32 %v2190, %v2289
        %v2291 = vand.u32 %v2290, 4294901760
        %v2292 = vsub.f32 %v2290, %v2291
        %v2293 = vand.u32 %v2292, 4294901760
        %2294 = vmatmul.mubr.f32.gmra.mrb[0].mxu0 %v2293
        %v2295 = vpop.f32.mrb[0].mxu0
        %v2296 = vadd.f32 0.0, %v2295
        %v2297 = vpop.f32.mrb[0].mxu0
        %2298 = vdwg.mxu0
        %2299 = vmatprep.subr.mxu0 0.0
        %v2300 = vand.u32 %v2192, 4294901760
        %v2301 = vsub.f32 %v2192, %v2300
        %v2302 = vand.u32 %v2301, 4294901760
        %v2303 = vsub.f32 %v2301, %v2302
        %v2304 = vand.u32 %v2303, 4294901760
        %2305 = vmatpush1.msra.mxu0 %v2304
        %2306 = vmatprep.subr.mxu0 0.0
        %v2307 = vand.u32 %v2193, 4294901760
        %v2308 = vsub.f32 %v2193, %v2307
        %v2309 = vand.u32 %v2308, 4294901760
        %v2310 = vsub.f32 %v2308, %v2309
        %v2311 = vand.u32 %v2310, 4294901760
        %2312 = vmatpush1.msra.mxu0 %v2311
        %2313 = vmatprep.subr.mxu0 0.0
        %v2314 = vand.u32 %v2194, 4294901760
        %v2315 = vsub.f32 %v2194, %v2314
        %v2316 = vand.u32 %v2315, 4294901760
        %v2317 = vsub.f32 %v2315, %v2316
        %v2318 = vand.u32 %v2317, 4294901760
        %2319 = vmatpush1.msra.mxu0 %v2318
        %2320 = vmatprep.subr.mxu0 0.0
        %v2321 = vand.u32 %v2195, 4294901760
        %v2322 = vsub.f32 %v2195, %v2321
        %v2323 = vand.u32 %v2322, 4294901760
        %v2324 = vsub.f32 %v2322, %v2323
        %v2325 = vand.u32 %v2324, 4294901760
        %2326 = vmatpush1.msra.mxu0 %v2325
        %2327 = vmatprep.subr.mxu0 0.0
        %v2328 = vand.u32 %v2196, 4294901760
        %v2329 = vsub.f32 %v2196, %v2328
        %v2330 = vand.u32 %v2329, 4294901760
        %v2331 = vsub.f32 %v2329, %v2330
        %v2332 = vand.u32 %v2331, 4294901760
        %2333 = vmatpush1.msra.mxu0 %v2332
        %2334 = vmatprep.subr.mxu0 0.0
        %v2335 = vand.u32 %v2197, 4294901760
        %v2336 = vsub.f32 %v2197, %v2335
        %v2337 = vand.u32 %v2336, 4294901760
        %v2338 = vsub.f32 %v2336, %v2337
        %v2339 = vand.u32 %v2338, 4294901760
        %2340 = vmatpush1.msra.mxu0 %v2339
        %2341 = vmatprep.subr.mxu0 0.0
        %v2342 = vand.u32 %v2198, 4294901760
        %v2343 = vsub.f32 %v2198, %v2342
        %v2344 = vand.u32 %v2343, 4294901760
        %v2345 = vsub.f32 %v2343, %v2344
        %v2346 = vand.u32 %v2345, 4294901760
        %2347 = vmatpush1.msra.mxu0 %v2346
        %2348 = vmatprep.subr.mxu0 0.0
        %v2349 = vand.u32 %v2199, 4294901760
        %v2350 = vsub.f32 %v2199, %v2349
        %v2351 = vand.u32 %v2350, 4294901760
        %v2352 = vsub.f32 %v2350, %v2351
        %v2353 = vand.u32 %v2352, 4294901760
        %2354 = vmatpush1.msra.mxu0 %v2353
        %2355 = vmatprep.subr.mxu0 0.0
        %v2356 = vand.u32 %v2200, 4294901760
        %v2357 = vsub.f32 %v2200, %v2356
        %v2358 = vand.u32 %v2357, 4294901760
        %v2359 = vsub.f32 %v2357, %v2358
        %v2360 = vand.u32 %v2359, 4294901760
        %2361 = vmatpush1.msra.mxu0 %v2360
        %2362 = vmatprep.subr.mxu0 0.0
        %v2363 = vand.u32 %v2201, 4294901760
        %v2364 = vsub.f32 %v2201, %v2363
        %v2365 = vand.u32 %v2364, 4294901760
        %v2366 = vsub.f32 %v2364, %v2365
        %v2367 = vand.u32 %v2366, 4294901760
        %2368 = vmatpush1.msra.mxu0 %v2367
        %2369 = vmatprep.subr.mxu0 0.0
        %v2370 = vand.u32 %v2202, 4294901760
        %v2371 = vsub.f32 %v2202, %v2370
        %v2372 = vand.u32 %v2371, 4294901760
        %v2373 = vsub.f32 %v2371, %v2372
        %v2374 = vand.u32 %v2373, 4294901760
        %2375 = vmatpush1.msra.mxu0 %v2374
        %2376 = vmatprep.subr.mxu0 0.0
        %v2377 = vand.u32 %v2203, 4294901760
        %v2378 = vsub.f32 %v2203, %v2377
        %v2379 = vand.u32 %v2378, 4294901760
        %v2380 = vsub.f32 %v2378, %v2379
        %v2381 = vand.u32 %v2380, 4294901760
        %2382 = vmatpush1.msra.mxu0 %v2381
        %2383 = vmatprep.subr.mxu0 0.0
        %v2384 = vand.u32 %v2204, 4294901760
        %v2385 = vsub.f32 %v2204, %v2384
        %v2386 = vand.u32 %v2385, 4294901760
        %v2387 = vsub.f32 %v2385, %v2386
        %v2388 = vand.u32 %v2387, 4294901760
        %2389 = vmatpush1.msra.mxu0 %v2388
        %2390 = vmatprep.subr.mxu0 0.0
        %v2391 = vand.u32 %v2205, 4294901760
        %v2392 = vsub.f32 %v2205, %v2391
        %v2393 = vand.u32 %v2392, 4294901760
        %v2394 = vsub.f32 %v2392, %v2393
        %v2395 = vand.u32 %v2394, 4294901760
        %2396 = vmatpush1.msra.mxu0 %v2395
        %2397 = vmatprep.subr.mxu0 0.0
        %v2398 = vand.u32 %v2206, 4294901760
        %v2399 = vsub.f32 %v2206, %v2398
        %v2400 = vand.u32 %v2399, 4294901760
        %v2401 = vsub.f32 %v2399, %v2400
        %v2402 = vand.u32 %v2401, 4294901760
        %2403 = vmatpush1.msra.mxu0 %v2402
        %2404 = vmatprep.subr.mxu0 0.0
        %v2405 = vand.u32 %v2207, 4294901760
        %v2406 = vsub.f32 %v2207, %v2405
        %v2407 = vand.u32 %v2406, 4294901760
        %v2408 = vsub.f32 %v2406, %v2407
        %v2409 = vand.u32 %v2408, 4294901760
        %2410 = vmatpush1.msra.mxu0 %v2409
        %2411 = vmatprep.subr.mxu0 0.0
        %2412 = vmatpush1.msra.mxu0 0.0
        %2413 = vmatprep.subr.mxu0 0.0
        %2414 = vmatpush1.msra.mxu0 0.0
        %2415 = vmatprep.subr.mxu0 0.0
        %2416 = vmatpush1.msra.mxu0 0.0
        %2417 = vmatprep.subr.mxu0 0.0
        %2418 = vmatpush1.msra.mxu0 0.0
        %2419 = vmatprep.subr.mxu0 0.0
        %2420 = vmatpush1.msra.mxu0 0.0
        %2421 = vmatprep.subr.mxu0 0.0
        %2422 = vmatpush1.msra.mxu0 0.0
        %2423 = vmatprep.subr.mxu0 0.0
        %2424 = vmatpush1.msra.mxu0 0.0
        %2425 = vmatprep.subr.mxu0 0.0
        %2426 = vmatpush1.msra.mxu0 0.0
        %2427 = vmatprep.subr.mxu0 0.0
        %2428 = vmatpush1.msra.mxu0 0.0
        %2429 = vmatprep.subr.mxu0 0.0
        %2430 = vmatpush1.msra.mxu0 0.0
        %2431 = vmatprep.subr.mxu0 0.0
        %2432 = vmatpush1.msra.mxu0 0.0
        %2433 = vmatprep.subr.mxu0 0.0
        %2434 = vmatpush1.msra.mxu0 0.0
        %2435 = vmatprep.subr.mxu0 0.0
        %2436 = vmatpush1.msra.mxu0 0.0
        %2437 = vmatprep.subr.mxu0 0.0
        %2438 = vmatpush1.msra.mxu0 0.0
        %2439 = vmatprep.subr.mxu0 0.0
        %2440 = vmatpush1.msra.mxu0 0.0
        %2441 = vmatprep.subr.mxu0 0.0
        %2442 = vmatpush1.msra.mxu0 0.0
        %2443 = vmatprep.mubr.f32.mxu0 0.0
        %v2444 = vand.u32 %v2190, 4294901760
        %2445 = vmatmul.mubr.f32.gmra.mrb[0].mxu0 %v2444
        %v2446 = vpop.f32.mrb[0].mxu0
        %v2447 = vadd.f32 %v2296, %v2446
        %v2448 = vpop.f32.mrb[0].mxu0
        %2449 = vdwg.mxu0
        %2450 = vmatprep.subr.mxu0 0.0
        %v2451 = vand.u32 %v2192, 4294901760
        %v2452 = vsub.f32 %v2192, %v2451
        %2453 = vmatpush1.msra.mxu0 %v2452
        %2454 = vmatprep.subr.mxu0 0.0
        %v2455 = vand.u32 %v2193, 4294901760
        %v2456 = vsub.f32 %v2193, %v2455
        %2457 = vmatpush1.msra.mxu0 %v2456
        %2458 = vmatprep.subr.mxu0 0.0
        %v2459 = vand.u32 %v2194, 4294901760
        %v2460 = vsub.f32 %v2194, %v2459
        %2461 = vmatpush1.msra.mxu0 %v2460
        %2462 = vmatprep.subr.mxu0 0.0
        %v2463 = vand.u32 %v2195, 4294901760
        %v2464 = vsub.f32 %v2195, %v2463
        %2465 = vmatpush1.msra.mxu0 %v2464
        %2466 = vmatprep.subr.mxu0 0.0
        %v2467 = vand.u32 %v2196, 4294901760
        %v2468 = vsub.f32 %v2196, %v2467
        %2469 = vmatpush1.msra.mxu0 %v2468
        %2470 = vmatprep.subr.mxu0 0.0
        %v2471 = vand.u32 %v2197, 4294901760
        %v2472 = vsub.f32 %v2197, %v2471
        %2473 = vmatpush1.msra.mxu0 %v2472
        %2474 = vmatprep.subr.mxu0 0.0
        %v2475 = vand.u32 %v2198, 4294901760
        %v2476 = vsub.f32 %v2198, %v2475
        %2477 = vmatpush1.msra.mxu0 %v2476
        %2478 = vmatprep.subr.mxu0 0.0
        %v2479 = vand.u32 %v2199, 4294901760
        %v2480 = vsub.f32 %v2199, %v2479
        %2481 = vmatpush1.msra.mxu0 %v2480
        %2482 = vmatprep.subr.mxu0 0.0
        %v2483 = vand.u32 %v2200, 4294901760
        %v2484 = vsub.f32 %v2200, %v2483
        %2485 = vmatpush1.msra.mxu0 %v2484
        %2486 = vmatprep.subr.mxu0 0.0
        %v2487 = vand.u32 %v2201, 4294901760
        %v2488 = vsub.f32 %v2201, %v2487
        %2489 = vmatpush1.msra.mxu0 %v2488
        %2490 = vmatprep.subr.mxu0 0.0
        %v2491 = vand.u32 %v2202, 4294901760
        %v2492 = vsub.f32 %v2202, %v2491
        %2493 = vmatpush1.msra.mxu0 %v2492
        %2494 = vmatprep.subr.mxu0 0.0
        %v2495 = vand.u32 %v2203, 4294901760
        %v2496 = vsub.f32 %v2203, %v2495
        %2497 = vmatpush1.msra.mxu0 %v2496
        %2498 = vmatprep.subr.mxu0 0.0
        %v2499 = vand.u32 %v2204, 4294901760
        %v2500 = vsub.f32 %v2204, %v2499
        %2501 = vmatpush1.msra.mxu0 %v2500
        %2502 = vmatprep.subr.mxu0 0.0
        %v2503 = vand.u32 %v2205, 4294901760
        %v2504 = vsub.f32 %v2205, %v2503
        %2505 = vmatpush1.msra.mxu0 %v2504
        %2506 = vmatprep.subr.mxu0 0.0
        %v2507 = vand.u32 %v2206, 4294901760
        %v2508 = vsub.f32 %v2206, %v2507
        %2509 = vmatpush1.msra.mxu0 %v2508
        %2510 = vmatprep.subr.mxu0 0.0
        %v2511 = vand.u32 %v2207, 4294901760
        %v2512 = vsub.f32 %v2207, %v2511
        %2513 = vmatpush1.msra.mxu0 %v2512
        %2514 = vmatprep.subr.mxu0 0.0
        %2515 = vmatpush1.msra.mxu0 0.0
        %2516 = vmatprep.subr.mxu0 0.0
        %2517 = vmatpush1.msra.mxu0 0.0
        %2518 = vmatprep.subr.mxu0 0.0
        %2519 = vmatpush1.msra.mxu0 0.0
        %2520 = vmatprep.subr.mxu0 0.0
        %2521 = vmatpush1.msra.mxu0 0.0
        %2522 = vmatprep.subr.mxu0 0.0
        %2523 = vmatpush1.msra.mxu0 0.0
        %2524 = vmatprep.subr.mxu0 0.0
        %2525 = vmatpush1.msra.mxu0 0.0
        %2526 = vmatprep.subr.mxu0 0.0
        %2527 = vmatpush1.msra.mxu0 0.0
        %2528 = vmatprep.subr.mxu0 0.0
        %2529 = vmatpush1.msra.mxu0 0.0
        %2530 = vmatprep.subr.mxu0 0.0
        %2531 = vmatpush1.msra.mxu0 0.0
        %2532 = vmatprep.subr.mxu0 0.0
        %2533 = vmatpush1.msra.mxu0 0.0
        %2534 = vmatprep.subr.mxu0 0.0
        %2535 = vmatpush1.msra.mxu0 0.0
        %2536 = vmatprep.subr.mxu0 0.0
        %2537 = vmatpush1.msra.mxu0 0.0
        %2538 = vmatprep.subr.mxu0 0.0
        %2539 = vmatpush1.msra.mxu0 0.0
        %2540 = vmatprep.subr.mxu0 0.0
        %2541 = vmatpush1.msra.mxu0 0.0
        %2542 = vmatprep.subr.mxu0 0.0
        %2543 = vmatpush1.msra.mxu0 0.0
        %2544 = vmatprep.subr.mxu0 0.0
        %2545 = vmatpush1.msra.mxu0 0.0
        %2546 = vmatprep.mubr.f32.mxu0 0.0
        %v2547 = vand.u32 %v2190, 4294901760
        %v2548 = vsub.f32 %v2190, %v2547
        %2549 = vmatmul.mubr.f32.gmra.mrb[0].mxu0 %v2548
        %v2550 = vpop.f32.mrb[0].mxu0
        %v2551 = vadd.f32 %v2447, %v2550
        %v2552 = vpop.f32.mrb[0].mxu0
        %2553 = vdwg.mxu0
        %2554 = vmatprep.subr.mxu0 0.0
        %v2555 = vand.u32 %v2192, 4294901760
        %2556 = vmatpush1.msra.mxu0 %v2555
        %2557 = vmatprep.subr.mxu0 0.0
        %v2558 = vand.u32 %v2193, 4294901760
        %2559 = vmatpush1.msra.mxu0 %v2558
        %2560 = vmatprep.subr.mxu0 0.0
        %v2561 = vand.u32 %v2194, 4294901760
        %2562 = vmatpush1.msra.mxu0 %v2561
        %2563 = vmatprep.subr.mxu0 0.0
        %v2564 = vand.u32 %v2195, 4294901760
        %2565 = vmatpush1.msra.mxu0 %v2564
        %2566 = vmatprep.subr.mxu0 0.0
        %v2567 = vand.u32 %v2196, 4294901760
        %2568 = vmatpush1.msra.mxu0 %v2567
        %2569 = vmatprep.subr.mxu0 0.0
        %v2570 = vand.u32 %v2197, 4294901760
        %2571 = vmatpush1.msra.mxu0 %v2570
        %2572 = vmatprep.subr.mxu0 0.0
        %v2573 = vand.u32 %v2198, 4294901760
        %2574 = vmatpush1.msra.mxu0 %v2573
        %2575 = vmatprep.subr.mxu0 0.0
        %v2576 = vand.u32 %v2199, 4294901760
        %2577 = vmatpush1.msra.mxu0 %v2576
        %2578 = vmatprep.subr.mxu0 0.0
        %v2579 = vand.u32 %v2200, 4294901760
        %2580 = vmatpush1.msra.mxu0 %v2579
        %2581 = vmatprep.subr.mxu0 0.0
        %v2582 = vand.u32 %v2201, 4294901760
        %2583 = vmatpush1.msra.mxu0 %v2582
        %2584 = vmatprep.subr.mxu0 0.0
        %v2585 = vand.u32 %v2202, 4294901760
        %2586 = vmatpush1.msra.mxu0 %v2585
        %2587 = vmatprep.subr.mxu0 0.0
        %v2588 = vand.u32 %v2203, 4294901760
        %2589 = vmatpush1.msra.mxu0 %v2588
        %2590 = vmatprep.subr.mxu0 0.0
        %v2591 = vand.u32 %v2204, 4294901760
        %2592 = vmatpush1.msra.mxu0 %v2591
        %2593 = vmatprep.subr.mxu0 0.0
        %v2594 = vand.u32 %v2205, 4294901760
        %2595 = vmatpush1.msra.mxu0 %v2594
        %2596 = vmatprep.subr.mxu0 0.0
        %v2597 = vand.u32 %v2206, 4294901760
        %2598 = vmatpush1.msra.mxu0 %v2597
        %2599 = vmatprep.subr.mxu0 0.0
        %v2600 = vand.u32 %v2207, 4294901760
        %2601 = vmatpush1.msra.mxu0 %v2600
        %2602 = vmatprep.subr.mxu0 0.0
        %2603 = vmatpush1.msra.mxu0 0.0
        %2604 = vmatprep.subr.mxu0 0.0
        %2605 = vmatpush1.msra.mxu0 0.0
        %2606 = vmatprep.subr.mxu0 0.0
        %2607 = vmatpush1.msra.mxu0 0.0
        %2608 = vmatprep.subr.mxu0 0.0
        %2609 = vmatpush1.msra.mxu0 0.0
        %2610 = vmatprep.subr.mxu0 0.0
        %2611 = vmatpush1.msra.mxu0 0.0
        %2612 = vmatprep.subr.mxu0 0.0
        %2613 = vmatpush1.msra.mxu0 0.0
        %2614 = vmatprep.subr.mxu0 0.0
        %2615 = vmatpush1.msra.mxu0 0.0
        %2616 = vmatprep.subr.mxu0 0.0
        %2617 = vmatpush1.msra.mxu0 0.0
        %2618 = vmatprep.subr.mxu0 0.0
        %2619 = vmatpush1.msra.mxu0 0.0
        %2620 = vmatprep.subr.mxu0 0.0
        %2621 = vmatpush1.msra.mxu0 0.0
        %2622 = vmatprep.subr.mxu0 0.0
        %2623 = vmatpush1.msra.mxu0 0.0
        %2624 = vmatprep.subr.mxu0 0.0
        %2625 = vmatpush1.msra.mxu0 0.0
        %2626 = vmatprep.subr.mxu0 0.0
        %2627 = vmatpush1.msra.mxu0 0.0
        %2628 = vmatprep.subr.mxu0 0.0
        %2629 = vmatpush1.msra.mxu0 0.0
        %2630 = vmatprep.subr.mxu0 0.0
        %2631 = vmatpush1.msra.mxu0 0.0
        %2632 = vmatprep.subr.mxu0 0.0
        %2633 = vmatpush1.msra.mxu0 0.0
        %2634 = vmatprep.mubr.f32.mxu0 0.0
        %v2635 = vand.u32 %v2190, 4294901760
        %v2636 = vsub.f32 %v2190, %v2635
        %v2637 = vand.u32 %v2636, 4294901760
        %2638 = vmatmul.mubr.f32.gmra.mrb[0].mxu0 %v2637
        %v2639 = vpop.f32.mrb[0].mxu0
        %v2640 = vadd.f32 %v2551, %v2639
        %v2641 = vpop.f32.mrb[0].mxu0
        %2642 = vdwg.mxu0
        %2643 = vmatprep.subr.mxu0 0.0
        %v2644 = vand.u32 %v2192, 4294901760
        %v2645 = vsub.f32 %v2192, %v2644
        %v2646 = vand.u32 %v2645, 4294901760
        %2647 = vmatpush1.msra.mxu0 %v2646
        %2648 = vmatprep.subr.mxu0 0.0
        %v2649 = vand.u32 %v2193, 4294901760
        %v2650 = vsub.f32 %v2193, %v2649
        %v2651 = vand.u32 %v2650, 4294901760
        %2652 = vmatpush1.msra.mxu0 %v2651
        %2653 = vmatprep.subr.mxu0 0.0
        %v2654 = vand.u32 %v2194, 4294901760
        %v2655 = vsub.f32 %v2194, %v2654
        %v2656 = vand.u32 %v2655, 4294901760
        %2657 = vmatpush1.msra.mxu0 %v2656
        %2658 = vmatprep.subr.mxu0 0.0
        %v2659 = vand.u32 %v2195, 4294901760
        %v2660 = vsub.f32 %v2195, %v2659
        %v2661 = vand.u32 %v2660, 4294901760
        %2662 = vmatpush1.msra.mxu0 %v2661
        %2663 = vmatprep.subr.mxu0 0.0
        %v2664 = vand.u32 %v2196, 4294901760
        %v2665 = vsub.f32 %v2196, %v2664
        %v2666 = vand.u32 %v2665, 4294901760
        %2667 = vmatpush1.msra.mxu0 %v2666
        %2668 = vmatprep.subr.mxu0 0.0
        %v2669 = vand.u32 %v2197, 4294901760
        %v2670 = vsub.f32 %v2197, %v2669
        %v2671 = vand.u32 %v2670, 4294901760
        %2672 = vmatpush1.msra.mxu0 %v2671
        %2673 = vmatprep.subr.mxu0 0.0
        %v2674 = vand.u32 %v2198, 4294901760
        %v2675 = vsub.f32 %v2198, %v2674
        %v2676 = vand.u32 %v2675, 4294901760
        %2677 = vmatpush1.msra.mxu0 %v2676
        %2678 = vmatprep.subr.mxu0 0.0
        %v2679 = vand.u32 %v2199, 4294901760
        %v2680 = vsub.f32 %v2199, %v2679
        %v2681 = vand.u32 %v2680, 4294901760
        %2682 = vmatpush1.msra.mxu0 %v2681
        %2683 = vmatprep.subr.mxu0 0.0
        %v2684 = vand.u32 %v2200, 4294901760
        %v2685 = vsub.f32 %v2200, %v2684
        %v2686 = vand.u32 %v2685, 4294901760
        %2687 = vmatpush1.msra.mxu0 %v2686
        %2688 = vmatprep.subr.mxu0 0.0
        %v2689 = vand.u32 %v2201, 4294901760
        %v2690 = vsub.f32 %v2201, %v2689
        %v2691 = vand.u32 %v2690, 4294901760
        %2692 = vmatpush1.msra.mxu0 %v2691
        %2693 = vmatprep.subr.mxu0 0.0
        %v2694 = vand.u32 %v2202, 4294901760
        %v2695 = vsub.f32 %v2202, %v2694
        %v2696 = vand.u32 %v2695, 4294901760
        %2697 = vmatpush1.msra.mxu0 %v2696
        %2698 = vmatprep.subr.mxu0 0.0
        %v2699 = vand.u32 %v2203, 4294901760
        %v2700 = vsub.f32 %v2203, %v2699
        %v2701 = vand.u32 %v2700, 4294901760
        %2702 = vmatpush1.msra.mxu0 %v2701
        %2703 = vmatprep.subr.mxu0 0.0
        %v2704 = vand.u32 %v2204, 4294901760
        %v2705 = vsub.f32 %v2204, %v2704
        %v2706 = vand.u32 %v2705, 4294901760
        %2707 = vmatpush1.msra.mxu0 %v2706
        %2708 = vmatprep.subr.mxu0 0.0
        %v2709 = vand.u32 %v2205, 4294901760
        %v2710 = vsub.f32 %v2205, %v2709
        %v2711 = vand.u32 %v2710, 4294901760
        %2712 = vmatpush1.msra.mxu0 %v2711
        %2713 = vmatprep.subr.mxu0 0.0
        %v2714 = vand.u32 %v2206, 4294901760
        %v2715 = vsub.f32 %v2206, %v2714
        %v2716 = vand.u32 %v2715, 4294901760
        %2717 = vmatpush1.msra.mxu0 %v2716
        %2718 = vmatprep.subr.mxu0 0.0
        %v2719 = vand.u32 %v2207, 4294901760
        %v2720 = vsub.f32 %v2207, %v2719
        %v2721 = vand.u32 %v2720, 4294901760
        %2722 = vmatpush1.msra.mxu0 %v2721
        %2723 = vmatprep.subr.mxu0 0.0
        %2724 = vmatpush1.msra.mxu0 0.0
        %2725 = vmatprep.subr.mxu0 0.0
        %2726 = vmatpush1.msra.mxu0 0.0
        %2727 = vmatprep.subr.mxu0 0.0
        %2728 = vmatpush1.msra.mxu0 0.0
        %2729 = vmatprep.subr.mxu0 0.0
        %2730 = vmatpush1.msra.mxu0 0.0
        %2731 = vmatprep.subr.mxu0 0.0
        %2732 = vmatpush1.msra.mxu0 0.0
        %2733 = vmatprep.subr.mxu0 0.0
        %2734 = vmatpush1.msra.mxu0 0.0
        %2735 = vmatprep.subr.mxu0 0.0
        %2736 = vmatpush1.msra.mxu0 0.0
        %2737 = vmatprep.subr.mxu0 0.0
        %2738 = vmatpush1.msra.mxu0 0.0
        %2739 = vmatprep.subr.mxu0 0.0
        %2740 = vmatpush1.msra.mxu0 0.0
        %2741 = vmatprep.subr.mxu0 0.0
        %2742 = vmatpush1.msra.mxu0 0.0
        %2743 = vmatprep.subr.mxu0 0.0
        %2744 = vmatpush1.msra.mxu0 0.0
        %2745 = vmatprep.subr.mxu0 0.0
        %2746 = vmatpush1.msra.mxu0 0.0
        %2747 = vmatprep.subr.mxu0 0.0
        %2748 = vmatpush1.msra.mxu0 0.0
        %2749 = vmatprep.subr.mxu0 0.0
        %2750 = vmatpush1.msra.mxu0 0.0
        %2751 = vmatprep.subr.mxu0 0.0
        %2752 = vmatpush1.msra.mxu0 0.0
        %2753 = vmatprep.subr.mxu0 0.0
        %2754 = vmatpush1.msra.mxu0 0.0
        %2755 = vmatprep.mubr.f32.mxu0 0.0
        %v2756 = vand.u32 %v2190, 4294901760
        %2757 = vmatmul.mubr.f32.gmra.mrb[0].mxu0 %v2756
        %v2758 = vpop.f32.mrb[0].mxu0
        %v2759 = vadd.f32 %v2640, %v2758
        %v2760 = vpop.f32.mrb[0].mxu0
        %2761 = vdwg.mxu0
        %2762 = vmatprep.subr.mxu0 0.0
        %v2763 = vand.u32 %v2192, 4294901760
        %2764 = vmatpush1.msra.mxu0 %v2763
        %2765 = vmatprep.subr.mxu0 0.0
        %v2766 = vand.u32 %v2193, 4294901760
        %2767 = vmatpush1.msra.mxu0 %v2766
        %2768 = vmatprep.subr.mxu0 0.0
        %v2769 = vand.u32 %v2194, 4294901760
        %2770 = vmatpush1.msra.mxu0 %v2769
        %2771 = vmatprep.subr.mxu0 0.0
        %v2772 = vand.u32 %v2195, 4294901760
        %2773 = vmatpush1.msra.mxu0 %v2772
        %2774 = vmatprep.subr.mxu0 0.0
        %v2775 = vand.u32 %v2196, 4294901760
        %2776 = vmatpush1.msra.mxu0 %v2775
        %2777 = vmatprep.subr.mxu0 0.0
        %v2778 = vand.u32 %v2197, 4294901760
        %2779 = vmatpush1.msra.mxu0 %v2778
        %2780 = vmatprep.subr.mxu0 0.0
        %v2781 = vand.u32 %v2198, 4294901760
        %2782 = vmatpush1.msra.mxu0 %v2781
        %2783 = vmatprep.subr.mxu0 0.0
        %v2784 = vand.u32 %v2199, 4294901760
        %2785 = vmatpush1.msra.mxu0 %v2784
        %2786 = vmatprep.subr.mxu0 0.0
        %v2787 = vand.u32 %v2200, 4294901760
        %2788 = vmatpush1.msra.mxu0 %v2787
        %2789 = vmatprep.subr.mxu0 0.0
        %v2790 = vand.u32 %v2201, 4294901760
        %2791 = vmatpush1.msra.mxu0 %v2790
        %2792 = vmatprep.subr.mxu0 0.0
        %v2793 = vand.u32 %v2202, 4294901760
        %2794 = vmatpush1.msra.mxu0 %v2793
        %2795 = vmatprep.subr.mxu0 0.0
        %v2796 = vand.u32 %v2203, 4294901760
        %2797 = vmatpush1.msra.mxu0 %v2796
        %2798 = vmatprep.subr.mxu0 0.0
        %v2799 = vand.u32 %v2204, 4294901760
        %2800 = vmatpush1.msra.mxu0 %v2799
        %2801 = vmatprep.subr.mxu0 0.0
        %v2802 = vand.u32 %v2205, 4294901760
        %2803 = vmatpush1.msra.mxu0 %v2802
        %2804 = vmatprep.subr.mxu0 0.0
        %v2805 = vand.u32 %v2206, 4294901760
        %2806 = vmatpush1.msra.mxu0 %v2805
        %2807 = vmatprep.subr.mxu0 0.0
        %v2808 = vand.u32 %v2207, 4294901760
        %2809 = vmatpush1.msra.mxu0 %v2808
        %2810 = vmatprep.subr.mxu0 0.0
        %2811 = vmatpush1.msra.mxu0 0.0
        %2812 = vmatprep.subr.mxu0 0.0
        %2813 = vmatpush1.msra.mxu0 0.0
        %2814 = vmatprep.subr.mxu0 0.0
        %2815 = vmatpush1.msra.mxu0 0.0
        %2816 = vmatprep.subr.mxu0 0.0
        %2817 = vmatpush1.msra.mxu0 0.0
        %2818 = vmatprep.subr.mxu0 0.0
        %2819 = vmatpush1.msra.mxu0 0.0
        %2820 = vmatprep.subr.mxu0 0.0
        %2821 = vmatpush1.msra.mxu0 0.0
        %2822 = vmatprep.subr.mxu0 0.0
        %2823 = vmatpush1.msra.mxu0 0.0
        %2824 = vmatprep.subr.mxu0 0.0
        %2825 = vmatpush1.msra.mxu0 0.0
        %2826 = vmatprep.subr.mxu0 0.0
        %2827 = vmatpush1.msra.mxu0 0.0
        %2828 = vmatprep.subr.mxu0 0.0
        %2829 = vmatpush1.msra.mxu0 0.0
        %2830 = vmatprep.subr.mxu0 0.0
        %2831 = vmatpush1.msra.mxu0 0.0
        %2832 = vmatprep.subr.mxu0 0.0
        %2833 = vmatpush1.msra.mxu0 0.0
        %2834 = vmatprep.subr.mxu0 0.0
        %2835 = vmatpush1.msra.mxu0 0.0
        %2836 = vmatprep.subr.mxu0 0.0
        %2837 = vmatpush1.msra.mxu0 0.0
        %2838 = vmatprep.subr.mxu0 0.0
        %2839 = vmatpush1.msra.mxu0 0.0
        %2840 = vmatprep.subr.mxu0 0.0
        %2841 = vmatpush1.msra.mxu0 0.0
        %2842 = vmatprep.mubr.f32.mxu0 0.0
        %v2843 = vand.u32 %v2190, 4294901760
        %2844 = vmatmul.mubr.f32.gmra.mrb[0].mxu0 %v2843
        %v2845 = vpop.f32.mrb[0].mxu0
        %v2846 = vadd.f32 %v2759, %v2845
        %v2847 = vpop.f32.mrb[0].mxu0
        %2848 = vdwg.mxu0
        %s2849 = scalar_lea.vmem %s202, 24 [#allocation7]
        %2850 = vst [vmem:[%s2849] sm:$0xff] %v2846
        %s2851 = scalar_lea.vmem %s168, 32 [#allocation2]
        %v2852 = vld [vmem:[%s2851] sm:$0xff]
        %s2853 = scalar_lea.vmem %s177, 512 [#allocation5]
        %v2854 = vld [vmem:[%s2853] sm:$0xff]
        %v2855 = vld [vmem:[%s2853 + $0x8] sm:$0xff]
        %v2856 = vld [vmem:[%s2853 + $0x10] sm:$0xff]
        %v2857 = vld [vmem:[%s2853 + $0x18] sm:$0xff]
        %v2858 = vld [vmem:[%s2853 + $0x20] sm:$0xff]
        %v2859 = vld [vmem:[%s2853 + $0x28] sm:$0xff]
        %v2860 = vld [vmem:[%s2853 + $0x30] sm:$0xff]
        %v2861 = vld [vmem:[%s2853 + $0x38] sm:$0xff]
        %v2862 = vld [vmem:[%s2853 + $0x40] sm:$0xff]
        %v2863 = vld [vmem:[%s2853 + $0x48] sm:$0xff]
        %v2864 = vld [vmem:[%s2853 + $0x50] sm:$0xff]
        %v2865 = vld [vmem:[%s2853 + $0x58] sm:$0xff]
        %v2866 = vld [vmem:[%s2853 + $0x60] sm:$0xff]
        %v2867 = vld [vmem:[%s2853 + $0x68] sm:$0xff]
        %v2868 = vld [vmem:[%s2853 + $0x70] sm:$0xff]
        %v2869 = vld [vmem:[%s2853 + $0x78] sm:$0xff]
        %2870 = vmatprep.subr.mxu0 0.0
        %v2871 = vand.u32 %v2854, 4294901760
        %2872 = vmatpush1.msra.mxu0 %v2871
        %2873 = vmatprep.subr.mxu0 0.0
        %v2874 = vand.u32 %v2855, 4294901760
        %2875 = vmatpush1.msra.mxu0 %v2874
        %2876 = vmatprep.subr.mxu0 0.0
        %v2877 = vand.u32 %v2856, 4294901760
        %2878 = vmatpush1.msra.mxu0 %v2877
        %2879 = vmatprep.subr.mxu0 0.0
        %v2880 = vand.u32 %v2857, 4294901760
        %2881 = vmatpush1.msra.mxu0 %v2880
        %2882 = vmatprep.subr.mxu0 0.0
        %v2883 = vand.u32 %v2858, 4294901760
        %2884 = vmatpush1.msra.mxu0 %v2883
        %2885 = vmatprep.subr.mxu0 0.0
        %v2886 = vand.u32 %v2859, 4294901760
        %2887 = vmatpush1.msra.mxu0 %v2886
        %2888 = vmatprep.subr.mxu0 0.0
        %v2889 = vand.u32 %v2860, 4294901760
        %2890 = vmatpush1.msra.mxu0 %v2889
        %2891 = vmatprep.subr.mxu0 0.0
        %v2892 = vand.u32 %v2861, 4294901760
        %2893 = vmatpush1.msra.mxu0 %v2892
        %2894 = vmatprep.subr.mxu0 0.0
        %v2895 = vand.u32 %v2862, 4294901760
        %2896 = vmatpush1.msra.mxu0 %v2895
        %2897 = vmatprep.subr.mxu0 0.0
        %v2898 = vand.u32 %v2863, 4294901760
        %2899 = vmatpush1.msra.mxu0 %v2898
        %2900 = vmatprep.subr.mxu0 0.0
        %v2901 = vand.u32 %v2864, 4294901760
        %2902 = vmatpush1.msra.mxu0 %v2901
        %2903 = vmatprep.subr.mxu0 0.0
        %v2904 = vand.u32 %v2865, 4294901760
        %2905 = vmatpush1.msra.mxu0 %v2904
        %2906 = vmatprep.subr.mxu0 0.0
        %v2907 = vand.u32 %v2866, 4294901760
        %2908 = vmatpush1.msra.mxu0 %v2907
        %2909 = vmatprep.subr.mxu0 0.0
        %v2910 = vand.u32 %v2867, 4294901760
        %2911 = vmatpush1.msra.mxu0 %v2910
        %2912 = vmatprep.subr.mxu0 0.0
        %v2913 = vand.u32 %v2868, 4294901760
        %2914 = vmatpush1.msra.mxu0 %v2913
        %2915 = vmatprep.subr.mxu0 0.0
        %v2916 = vand.u32 %v2869, 4294901760
        %2917 = vmatpush1.msra.mxu0 %v2916
        %2918 = vmatprep.subr.mxu0 0.0
        %2919 = vmatpush1.msra.mxu0 0.0
        %2920 = vmatprep.subr.mxu0 0.0
        %2921 = vmatpush1.msra.mxu0 0.0
        %2922 = vmatprep.subr.mxu0 0.0
        %2923 = vmatpush1.msra.mxu0 0.0
        %2924 = vmatprep.subr.mxu0 0.0
        %2925 = vmatpush1.msra.mxu0 0.0
        %2926 = vmatprep.subr.mxu0 0.0
        %2927 = vmatpush1.msra.mxu0 0.0
        %2928 = vmatprep.subr.mxu0 0.0
        %2929 = vmatpush1.msra.mxu0 0.0
        %2930 = vmatprep.subr.mxu0 0.0
        %2931 = vmatpush1.msra.mxu0 0.0
        %2932 = vmatprep.subr.mxu0 0.0
        %2933 = vmatpush1.msra.mxu0 0.0
        %2934 = vmatprep.subr.mxu0 0.0
        %2935 = vmatpush1.msra.mxu0 0.0
        %2936 = vmatprep.subr.mxu0 0.0
        %2937 = vmatpush1.msra.mxu0 0.0
        %2938 = vmatprep.subr.mxu0 0.0
        %2939 = vmatpush1.msra.mxu0 0.0
        %2940 = vmatprep.subr.mxu0 0.0
        %2941 = vmatpush1.msra.mxu0 0.0
        %2942 = vmatprep.subr.mxu0 0.0
        %2943 = vmatpush1.msra.mxu0 0.0
        %2944 = vmatprep.subr.mxu0 0.0
        %2945 = vmatpush1.msra.mxu0 0.0
        %2946 = vmatprep.subr.mxu0 0.0
        %2947 = vmatpush1.msra.mxu0 0.0
        %2948 = vmatprep.subr.mxu0 0.0
        %2949 = vmatpush1.msra.mxu0 0.0
        %2950 = vmatprep.mubr.f32.mxu0 0.0
        %v2951 = vand.u32 %v2852, 4294901760
        %v2952 = vsub.f32 %v2852, %v2951
        %v2953 = vand.u32 %v2952, 4294901760
        %v2954 = vsub.f32 %v2952, %v2953
        %v2955 = vand.u32 %v2954, 4294901760
        %2956 = vmatmul.mubr.f32.gmra.mrb[0].mxu0 %v2955
        %v2957 = vpop.f32.mrb[0].mxu0
        %v2958 = vadd.f32 0.0, %v2957
        %v2959 = vpop.f32.mrb[0].mxu0
        %2960 = vdwg.mxu0
        %2961 = vmatprep.subr.mxu0 0.0
        %v2962 = vand.u32 %v2854, 4294901760
        %v2963 = vsub.f32 %v2854, %v2962
        %v2964 = vand.u32 %v2963, 4294901760
        %v2965 = vsub.f32 %v2963, %v2964
        %v2966 = vand.u32 %v2965, 4294901760
        %2967 = vmatpush1.msra.mxu0 %v2966
        %2968 = vmatprep.subr.mxu0 0.0
        %v2969 = vand.u32 %v2855, 4294901760
        %v2970 = vsub.f32 %v2855, %v2969
        %v2971 = vand.u32 %v2970, 4294901760
        %v2972 = vsub.f32 %v2970, %v2971
        %v2973 = vand.u32 %v2972, 4294901760
        %2974 = vmatpush1.msra.mxu0 %v2973
        %2975 = vmatprep.subr.mxu0 0.0
        %v2976 = vand.u32 %v2856, 4294901760
        %v2977 = vsub.f32 %v2856, %v2976
        %v2978 = vand.u32 %v2977, 4294901760
        %v2979 = vsub.f32 %v2977, %v2978
        %v2980 = vand.u32 %v2979, 4294901760
        %2981 = vmatpush1.msra.mxu0 %v2980
        %2982 = vmatprep.subr.mxu0 0.0
        %v2983 = vand.u32 %v2857, 4294901760
        %v2984 = vsub.f32 %v2857, %v2983
        %v2985 = vand.u32 %v2984, 4294901760
        %v2986 = vsub.f32 %v2984, %v2985
        %v2987 = vand.u32 %v2986, 4294901760
        %2988 = vmatpush1.msra.mxu0 %v2987
        %2989 = vmatprep.subr.mxu0 0.0
        %v2990 = vand.u32 %v2858, 4294901760
        %v2991 = vsub.f32 %v2858, %v2990
        %v2992 = vand.u32 %v2991, 4294901760
        %v2993 = vsub.f32 %v2991, %v2992
        %v2994 = vand.u32 %v2993, 4294901760
        %2995 = vmatpush1.msra.mxu0 %v2994
        %2996 = vmatprep.subr.mxu0 0.0
        %v2997 = vand.u32 %v2859, 4294901760
        %v2998 = vsub.f32 %v2859, %v2997
        %v2999 = vand.u32 %v2998, 4294901760
        %v3000 = vsub.f32 %v2998, %v2999
        %v3001 = vand.u32 %v3000, 4294901760
        %3002 = vmatpush1.msra.mxu0 %v3001
        %3003 = vmatprep.subr.mxu0 0.0
        %v3004 = vand.u32 %v2860, 4294901760
        %v3005 = vsub.f32 %v2860, %v3004
        %v3006 = vand.u32 %v3005, 4294901760
        %v3007 = vsub.f32 %v3005, %v3006
        %v3008 = vand.u32 %v3007, 4294901760
        %3009 = vmatpush1.msra.mxu0 %v3008
        %3010 = vmatprep.subr.mxu0 0.0
        %v3011 = vand.u32 %v2861, 4294901760
        %v3012 = vsub.f32 %v2861, %v3011
        %v3013 = vand.u32 %v3012, 4294901760
        %v3014 = vsub.f32 %v3012, %v3013
        %v3015 = vand.u32 %v3014, 4294901760
        %3016 = vmatpush1.msra.mxu0 %v3015
        %3017 = vmatprep.subr.mxu0 0.0
        %v3018 = vand.u32 %v2862, 4294901760
        %v3019 = vsub.f32 %v2862, %v3018
        %v3020 = vand.u32 %v3019, 4294901760
        %v3021 = vsub.f32 %v3019, %v3020
        %v3022 = vand.u32 %v3021, 4294901760
        %3023 = vmatpush1.msra.mxu0 %v3022
        %3024 = vmatprep.subr.mxu0 0.0
        %v3025 = vand.u32 %v2863, 4294901760
        %v3026 = vsub.f32 %v2863, %v3025
        %v3027 = vand.u32 %v3026, 4294901760
        %v3028 = vsub.f32 %v3026, %v3027
        %v3029 = vand.u32 %v3028, 4294901760
        %3030 = vmatpush1.msra.mxu0 %v3029
        %3031 = vmatprep.subr.mxu0 0.0
        %v3032 = vand.u32 %v2864, 4294901760
        %v3033 = vsub.f32 %v2864, %v3032
        %v3034 = vand.u32 %v3033, 4294901760
        %v3035 = vsub.f32 %v3033, %v3034
        %v3036 = vand.u32 %v3035, 4294901760
        %3037 = vmatpush1.msra.mxu0 %v3036
        %3038 = vmatprep.subr.mxu0 0.0
        %v3039 = vand.u32 %v2865, 4294901760
        %v3040 = vsub.f32 %v2865, %v3039
        %v3041 = vand.u32 %v3040, 4294901760
        %v3042 = vsub.f32 %v3040, %v3041
        %v3043 = vand.u32 %v3042, 4294901760
        %3044 = vmatpush1.msra.mxu0 %v3043
        %3045 = vmatprep.subr.mxu0 0.0
        %v3046 = vand.u32 %v2866, 4294901760
        %v3047 = vsub.f32 %v2866, %v3046
        %v3048 = vand.u32 %v3047, 4294901760
        %v3049 = vsub.f32 %v3047, %v3048
        %v3050 = vand.u32 %v3049, 4294901760
        %3051 = vmatpush1.msra.mxu0 %v3050
        %3052 = vmatprep.subr.mxu0 0.0
        %v3053 = vand.u32 %v2867, 4294901760
        %v3054 = vsub.f32 %v2867, %v3053
        %v3055 = vand.u32 %v3054, 4294901760
        %v3056 = vsub.f32 %v3054, %v3055
        %v3057 = vand.u32 %v3056, 4294901760
        %3058 = vmatpush1.msra.mxu0 %v3057
        %3059 = vmatprep.subr.mxu0 0.0
        %v3060 = vand.u32 %v2868, 4294901760
        %v3061 = vsub.f32 %v2868, %v3060
        %v3062 = vand.u32 %v3061, 4294901760
        %v3063 = vsub.f32 %v3061, %v3062
        %v3064 = vand.u32 %v3063, 4294901760
        %3065 = vmatpush1.msra.mxu0 %v3064
        %3066 = vmatprep.subr.mxu0 0.0
        %v3067 = vand.u32 %v2869, 4294901760
        %v3068 = vsub.f32 %v2869, %v3067
        %v3069 = vand.u32 %v3068, 4294901760
        %v3070 = vsub.f32 %v3068, %v3069
        %v3071 = vand.u32 %v3070, 4294901760
        %3072 = vmatpush1.msra.mxu0 %v3071
        %3073 = vmatprep.subr.mxu0 0.0
        %3074 = vmatpush1.msra.mxu0 0.0
        %3075 = vmatprep.subr.mxu0 0.0
        %3076 = vmatpush1.msra.mxu0 0.0
        %3077 = vmatprep.subr.mxu0 0.0
        %3078 = vmatpush1.msra.mxu0 0.0
        %3079 = vmatprep.subr.mxu0 0.0
        %3080 = vmatpush1.msra.mxu0 0.0
        %3081 = vmatprep.subr.mxu0 0.0
        %3082 = vmatpush1.msra.mxu0 0.0
        %3083 = vmatprep.subr.mxu0 0.0
        %3084 = vmatpush1.msra.mxu0 0.0
        %3085 = vmatprep.subr.mxu0 0.0
        %3086 = vmatpush1.msra.mxu0 0.0
        %3087 = vmatprep.subr.mxu0 0.0
        %3088 = vmatpush1.msra.mxu0 0.0
        %3089 = vmatprep.subr.mxu0 0.0
        %3090 = vmatpush1.msra.mxu0 0.0
        %3091 = vmatprep.subr.mxu0 0.0
        %3092 = vmatpush1.msra.mxu0 0.0
        %3093 = vmatprep.subr.mxu0 0.0
        %3094 = vmatpush1.msra.mxu0 0.0
        %3095 = vmatprep.subr.mxu0 0.0
        %3096 = vmatpush1.msra.mxu0 0.0
        %3097 = vmatprep.subr.mxu0 0.0
        %3098 = vmatpush1.msra.mxu0 0.0
        %3099 = vmatprep.subr.mxu0 0.0
        %3100 = vmatpush1.msra.mxu0 0.0
        %3101 = vmatprep.subr.mxu0 0.0
        %3102 = vmatpush1.msra.mxu0 0.0
        %3103 = vmatprep.subr.mxu0 0.0
        %3104 = vmatpush1.msra.mxu0 0.0
        %3105 = vmatprep.mubr.f32.mxu0 0.0
        %v3106 = vand.u32 %v2852, 4294901760
        %3107 = vmatmul.mubr.f32.gmra.mrb[0].mxu0 %v3106
        %v3108 = vpop.f32.mrb[0].mxu0
        %v3109 = vadd.f32 %v2958, %v3108
        %v3110 = vpop.f32.mrb[0].mxu0
        %3111 = vdwg.mxu0
        %3112 = vmatprep.subr.mxu0 0.0
        %v3113 = vand.u32 %v2854, 4294901760
        %v3114 = vsub.f32 %v2854, %v3113
        %3115 = vmatpush1.msra.mxu0 %v3114
        %3116 = vmatprep.subr.mxu0 0.0
        %v3117 = vand.u32 %v2855, 4294901760
        %v3118 = vsub.f32 %v2855, %v3117
        %3119 = vmatpush1.msra.mxu0 %v3118
        %3120 = vmatprep.subr.mxu0 0.0
        %v3121 = vand.u32 %v2856, 4294901760
        %v3122 = vsub.f32 %v2856, %v3121
        %3123 = vmatpush1.msra.mxu0 %v3122
        %3124 = vmatprep.subr.mxu0 0.0
        %v3125 = vand.u32 %v2857, 4294901760
        %v3126 = vsub.f32 %v2857, %v3125
        %3127 = vmatpush1.msra.mxu0 %v3126
        %3128 = vmatprep.subr.mxu0 0.0
        %v3129 = vand.u32 %v2858, 4294901760
        %v3130 = vsub.f32 %v2858, %v3129
        %3131 = vmatpush1.msra.mxu0 %v3130
        %3132 = vmatprep.subr.mxu0 0.0
        %v3133 = vand.u32 %v2859, 4294901760
        %v3134 = vsub.f32 %v2859, %v3133
        %3135 = vmatpush1.msra.mxu0 %v3134
        %3136 = vmatprep.subr.mxu0 0.0
        %v3137 = vand.u32 %v2860, 4294901760
        %v3138 = vsub.f32 %v2860, %v3137
        %3139 = vmatpush1.msra.mxu0 %v3138
        %3140 = vmatprep.subr.mxu0 0.0
        %v3141 = vand.u32 %v2861, 4294901760
        %v3142 = vsub.f32 %v2861, %v3141
        %3143 = vmatpush1.msra.mxu0 %v3142
        %3144 = vmatprep.subr.mxu0 0.0
        %v3145 = vand.u32 %v2862, 4294901760
        %v3146 = vsub.f32 %v2862, %v3145
        %3147 = vmatpush1.msra.mxu0 %v3146
        %3148 = vmatprep.subr.mxu0 0.0
        %v3149 = vand.u32 %v2863, 4294901760
        %v3150 = vsub.f32 %v2863, %v3149
        %3151 = vmatpush1.msra.mxu0 %v3150
        %3152 = vmatprep.subr.mxu0 0.0
        %v3153 = vand.u32 %v2864, 4294901760
        %v3154 = vsub.f32 %v2864, %v3153
        %3155 = vmatpush1.msra.mxu0 %v3154
        %3156 = vmatprep.subr.mxu0 0.0
        %v3157 = vand.u32 %v2865, 4294901760
        %v3158 = vsub.f32 %v2865, %v3157
        %3159 = vmatpush1.msra.mxu0 %v3158
        %3160 = vmatprep.subr.mxu0 0.0
        %v3161 = vand.u32 %v2866, 4294901760
        %v3162 = vsub.f32 %v2866, %v3161
        %3163 = vmatpush1.msra.mxu0 %v3162
        %3164 = vmatprep.subr.mxu0 0.0
        %v3165 = vand.u32 %v2867, 4294901760
        %v3166 = vsub.f32 %v2867, %v3165
        %3167 = vmatpush1.msra.mxu0 %v3166
        %3168 = vmatprep.subr.mxu0 0.0
        %v3169 = vand.u32 %v2868, 4294901760
        %v3170 = vsub.f32 %v2868, %v3169
        %3171 = vmatpush1.msra.mxu0 %v3170
        %3172 = vmatprep.subr.mxu0 0.0
        %v3173 = vand.u32 %v2869, 4294901760
        %v3174 = vsub.f32 %v2869, %v3173
        %3175 = vmatpush1.msra.mxu0 %v3174
        %3176 = vmatprep.subr.mxu0 0.0
        %3177 = vmatpush1.msra.mxu0 0.0
        %3178 = vmatprep.subr.mxu0 0.0
        %3179 = vmatpush1.msra.mxu0 0.0
        %3180 = vmatprep.subr.mxu0 0.0
        %3181 = vmatpush1.msra.mxu0 0.0
        %3182 = vmatprep.subr.mxu0 0.0
        %3183 = vmatpush1.msra.mxu0 0.0
        %3184 = vmatprep.subr.mxu0 0.0
        %3185 = vmatpush1.msra.mxu0 0.0
        %3186 = vmatprep.subr.mxu0 0.0
        %3187 = vmatpush1.msra.mxu0 0.0
        %3188 = vmatprep.subr.mxu0 0.0
        %3189 = vmatpush1.msra.mxu0 0.0
        %3190 = vmatprep.subr.mxu0 0.0
        %3191 = vmatpush1.msra.mxu0 0.0
        %3192 = vmatprep.subr.mxu0 0.0
        %3193 = vmatpush1.msra.mxu0 0.0
        %3194 = vmatprep.subr.mxu0 0.0
        %3195 = vmatpush1.msra.mxu0 0.0
        %3196 = vmatprep.subr.mxu0 0.0
        %3197 = vmatpush1.msra.mxu0 0.0
        %3198 = vmatprep.subr.mxu0 0.0
        %3199 = vmatpush1.msra.mxu0 0.0
        %3200 = vmatprep.subr.mxu0 0.0
        %3201 = vmatpush1.msra.mxu0 0.0
        %3202 = vmatprep.subr.mxu0 0.0
        %3203 = vmatpush1.msra.mxu0 0.0
        %3204 = vmatprep.subr.mxu0 0.0
        %3205 = vmatpush1.msra.mxu0 0.0
        %3206 = vmatprep.subr.mxu0 0.0
        %3207 = vmatpush1.msra.mxu0 0.0
        %3208 = vmatprep.mubr.f32.mxu0 0.0
        %v3209 = vand.u32 %v2852, 4294901760
        %v3210 = vsub.f32 %v2852, %v3209
        %3211 = vmatmul.mubr.f32.gmra.mrb[0].mxu0 %v3210
        %v3212 = vpop.f32.mrb[0].mxu0
        %v3213 = vadd.f32 %v3109, %v3212
        %v3214 = vpop.f32.mrb[0].mxu0
        %3215 = vdwg.mxu0
        %3216 = vmatprep.subr.mxu0 0.0
        %v3217 = vand.u32 %v2854, 4294901760
        %3218 = vmatpush1.msra.mxu0 %v3217
        %3219 = vmatprep.subr.mxu0 0.0
        %v3220 = vand.u32 %v2855, 4294901760
        %3221 = vmatpush1.msra.mxu0 %v3220
        %3222 = vmatprep.subr.mxu0 0.0
        %v3223 = vand.u32 %v2856, 4294901760
        %3224 = vmatpush1.msra.mxu0 %v3223
        %3225 = vmatprep.subr.mxu0 0.0
        %v3226 = vand.u32 %v2857, 4294901760
        %3227 = vmatpush1.msra.mxu0 %v3226
        %3228 = vmatprep.subr.mxu0 0.0
        %v3229 = vand.u32 %v2858, 4294901760
        %3230 = vmatpush1.msra.mxu0 %v3229
        %3231 = vmatprep.subr.mxu0 0.0
        %v3232 = vand.u32 %v2859, 4294901760
        %3233 = vmatpush1.msra.mxu0 %v3232
        %3234 = vmatprep.subr.mxu0 0.0
        %v3235 = vand.u32 %v2860, 4294901760
        %3236 = vmatpush1.msra.mxu0 %v3235
        %3237 = vmatprep.subr.mxu0 0.0
        %v3238 = vand.u32 %v2861, 4294901760
        %3239 = vmatpush1.msra.mxu0 %v3238
        %3240 = vmatprep.subr.mxu0 0.0
        %v3241 = vand.u32 %v2862, 4294901760
        %3242 = vmatpush1.msra.mxu0 %v3241
        %3243 = vmatprep.subr.mxu0 0.0
        %v3244 = vand.u32 %v2863, 4294901760
        %3245 = vmatpush1.msra.mxu0 %v3244
        %3246 = vmatprep.subr.mxu0 0.0
        %v3247 = vand.u32 %v2864, 4294901760
        %3248 = vmatpush1.msra.mxu0 %v3247
        %3249 = vmatprep.subr.mxu0 0.0
        %v3250 = vand.u32 %v2865, 4294901760
        %3251 = vmatpush1.msra.mxu0 %v3250
        %3252 = vmatprep.subr.mxu0 0.0
        %v3253 = vand.u32 %v2866, 4294901760
        %3254 = vmatpush1.msra.mxu0 %v3253
        %3255 = vmatprep.subr.mxu0 0.0
        %v3256 = vand.u32 %v2867, 4294901760
        %3257 = vmatpush1.msra.mxu0 %v3256
        %3258 = vmatprep.subr.mxu0 0.0
        %v3259 = vand.u32 %v2868, 4294901760
        %3260 = vmatpush1.msra.mxu0 %v3259
        %3261 = vmatprep.subr.mxu0 0.0
        %v3262 = vand.u32 %v2869, 4294901760
        %3263 = vmatpush1.msra.mxu0 %v3262
        %3264 = vmatprep.subr.mxu0 0.0
        %3265 = vmatpush1.msra.mxu0 0.0
        %3266 = vmatprep.subr.mxu0 0.0
        %3267 = vmatpush1.msra.mxu0 0.0
        %3268 = vmatprep.subr.mxu0 0.0
        %3269 = vmatpush1.msra.mxu0 0.0
        %3270 = vmatprep.subr.mxu0 0.0
        %3271 = vmatpush1.msra.mxu0 0.0
        %3272 = vmatprep.subr.mxu0 0.0
        %3273 = vmatpush1.msra.mxu0 0.0
        %3274 = vmatprep.subr.mxu0 0.0
        %3275 = vmatpush1.msra.mxu0 0.0
        %3276 = vmatprep.subr.mxu0 0.0
        %3277 = vmatpush1.msra.mxu0 0.0
        %3278 = vmatprep.subr.mxu0 0.0
        %3279 = vmatpush1.msra.mxu0 0.0
        %3280 = vmatprep.subr.mxu0 0.0
        %3281 = vmatpush1.msra.mxu0 0.0
        %3282 = vmatprep.subr.mxu0 0.0
        %3283 = vmatpush1.msra.mxu0 0.0
        %3284 = vmatprep.subr.mxu0 0.0
        %3285 = vmatpush1.msra.mxu0 0.0
        %3286 = vmatprep.subr.mxu0 0.0
        %3287 = vmatpush1.msra.mxu0 0.0
        %3288 = vmatprep.subr.mxu0 0.0
        %3289 = vmatpush1.msra.mxu0 0.0
        %3290 = vmatprep.subr.mxu0 0.0
        %3291 = vmatpush1.msra.mxu0 0.0
        %3292 = vmatprep.subr.mxu0 0.0
        %3293 = vmatpush1.msra.mxu0 0.0
        %3294 = vmatprep.subr.mxu0 0.0
        %3295 = vmatpush1.msra.mxu0 0.0
        %3296 = vmatprep.mubr.f32.mxu0 0.0
        %v3297 = vand.u32 %v2852, 4294901760
        %v3298 = vsub.f32 %v2852, %v3297
        %v3299 = vand.u32 %v3298, 4294901760
        %3300 = vmatmul.mubr.f32.gmra.mrb[0].mxu0 %v3299
        %v3301 = vpop.f32.mrb[0].mxu0
        %v3302 = vadd.f32 %v3213, %v3301
        %v3303 = vpop.f32.mrb[0].mxu0
        %3304 = vdwg.mxu0
        %3305 = vmatprep.subr.mxu0 0.0
        %v3306 = vand.u32 %v2854, 4294901760
        %v3307 = vsub.f32 %v2854, %v3306
        %v3308 = vand.u32 %v3307, 4294901760
        %3309 = vmatpush1.msra.mxu0 %v3308
        %3310 = vmatprep.subr.mxu0 0.0
        %v3311 = vand.u32 %v2855, 4294901760
        %v3312 = vsub.f32 %v2855, %v3311
        %v3313 = vand.u32 %v3312, 4294901760
        %3314 = vmatpush1.msra.mxu0 %v3313
        %3315 = vmatprep.subr.mxu0 0.0
        %v3316 = vand.u32 %v2856, 4294901760
        %v3317 = vsub.f32 %v2856, %v3316
        %v3318 = vand.u32 %v3317, 4294901760
        %3319 = vmatpush1.msra.mxu0 %v3318
        %3320 = vmatprep.subr.mxu0 0.0
        %v3321 = vand.u32 %v2857, 4294901760
        %v3322 = vsub.f32 %v2857, %v3321
        %v3323 = vand.u32 %v3322, 4294901760
        %3324 = vmatpush1.msra.mxu0 %v3323
        %3325 = vmatprep.subr.mxu0 0.0
        %v3326 = vand.u32 %v2858, 4294901760
        %v3327 = vsub.f32 %v2858, %v3326
        %v3328 = vand.u32 %v3327, 4294901760
        %3329 = vmatpush1.msra.mxu0 %v3328
        %3330 = vmatprep.subr.mxu0 0.0
        %v3331 = vand.u32 %v2859, 4294901760
        %v3332 = vsub.f32 %v2859, %v3331
        %v3333 = vand.u32 %v3332, 4294901760
        %3334 = vmatpush1.msra.mxu0 %v3333
        %3335 = vmatprep.subr.mxu0 0.0
        %v3336 = vand.u32 %v2860, 4294901760
        %v3337 = vsub.f32 %v2860, %v3336
        %v3338 = vand.u32 %v3337, 4294901760
        %3339 = vmatpush1.msra.mxu0 %v3338
        %3340 = vmatprep.subr.mxu0 0.0
        %v3341 = vand.u32 %v2861, 4294901760
        %v3342 = vsub.f32 %v2861, %v3341
        %v3343 = vand.u32 %v3342, 4294901760
        %3344 = vmatpush1.msra.mxu0 %v3343
        %3345 = vmatprep.subr.mxu0 0.0
        %v3346 = vand.u32 %v2862, 4294901760
        %v3347 = vsub.f32 %v2862, %v3346
        %v3348 = vand.u32 %v3347, 4294901760
        %3349 = vmatpush1.msra.mxu0 %v3348
        %3350 = vmatprep.subr.mxu0 0.0
        %v3351 = vand.u32 %v2863, 4294901760
        %v3352 = vsub.f32 %v2863, %v3351
        %v3353 = vand.u32 %v3352, 4294901760
        %3354 = vmatpush1.msra.mxu0 %v3353
        %3355 = vmatprep.subr.mxu0 0.0
        %v3356 = vand.u32 %v2864, 4294901760
        %v3357 = vsub.f32 %v2864, %v3356
        %v3358 = vand.u32 %v3357, 4294901760
        %3359 = vmatpush1.msra.mxu0 %v3358
        %3360 = vmatprep.subr.mxu0 0.0
        %v3361 = vand.u32 %v2865, 4294901760
        %v3362 = vsub.f32 %v2865, %v3361
        %v3363 = vand.u32 %v3362, 4294901760
        %3364 = vmatpush1.msra.mxu0 %v3363
        %3365 = vmatprep.subr.mxu0 0.0
        %v3366 = vand.u32 %v2866, 4294901760
        %v3367 = vsub.f32 %v2866, %v3366
        %v3368 = vand.u32 %v3367, 4294901760
        %3369 = vmatpush1.msra.mxu0 %v3368
        %3370 = vmatprep.subr.mxu0 0.0
        %v3371 = vand.u32 %v2867, 4294901760
        %v3372 = vsub.f32 %v2867, %v3371
        %v3373 = vand.u32 %v3372, 4294901760
        %3374 = vmatpush1.msra.mxu0 %v3373
        %3375 = vmatprep.subr.mxu0 0.0
        %v3376 = vand.u32 %v2868, 4294901760
        %v3377 = vsub.f32 %v2868, %v3376
        %v3378 = vand.u32 %v3377, 4294901760
        %3379 = vmatpush1.msra.mxu0 %v3378
        %3380 = vmatprep.subr.mxu0 0.0
        %v3381 = vand.u32 %v2869, 4294901760
        %v3382 = vsub.f32 %v2869, %v3381
        %v3383 = vand.u32 %v3382, 4294901760
        %3384 = vmatpush1.msra.mxu0 %v3383
        %3385 = vmatprep.subr.mxu0 0.0
        %3386 = vmatpush1.msra.mxu0 0.0
        %3387 = vmatprep.subr.mxu0 0.0
        %3388 = vmatpush1.msra.mxu0 0.0
        %3389 = vmatprep.subr.mxu0 0.0
        %3390 = vmatpush1.msra.mxu0 0.0
        %3391 = vmatprep.subr.mxu0 0.0
        %3392 = vmatpush1.msra.mxu0 0.0
        %3393 = vmatprep.subr.mxu0 0.0
        %3394 = vmatpush1.msra.mxu0 0.0
        %3395 = vmatprep.subr.mxu0 0.0
        %3396 = vmatpush1.msra.mxu0 0.0
        %3397 = vmatprep.subr.mxu0 0.0
        %3398 = vmatpush1.msra.mxu0 0.0
        %3399 = vmatprep.subr.mxu0 0.0
        %3400 = vmatpush1.msra.mxu0 0.0
        %3401 = vmatprep.subr.mxu0 0.0
        %3402 = vmatpush1.msra.mxu0 0.0
        %3403 = vmatprep.subr.mxu0 0.0
        %3404 = vmatpush1.msra.mxu0 0.0
        %3405 = vmatprep.subr.mxu0 0.0
        %3406 = vmatpush1.msra.mxu0 0.0
        %3407 = vmatprep.subr.mxu0 0.0
        %3408 = vmatpush1.msra.mxu0 0.0
        %3409 = vmatprep.subr.mxu0 0.0
        %3410 = vmatpush1.msra.mxu0 0.0
        %3411 = vmatprep.subr.mxu0 0.0
        %3412 = vmatpush1.msra.mxu0 0.0
        %3413 = vmatprep.subr.mxu0 0.0
        %3414 = vmatpush1.msra.mxu0 0.0
        %3415 = vmatprep.subr.mxu0 0.0
        %3416 = vmatpush1.msra.mxu0 0.0
        %3417 = vmatprep.mubr.f32.mxu0 0.0
        %v3418 = vand.u32 %v2852, 4294901760
        %3419 = vmatmul.mubr.f32.gmra.mrb[0].mxu0 %v3418
        %v3420 = vpop.f32.mrb[0].mxu0
        %v3421 = vadd.f32 %v3302, %v3420
        %v3422 = vpop.f32.mrb[0].mxu0
        %3423 = vdwg.mxu0
        %3424 = vmatprep.subr.mxu0 0.0
        %v3425 = vand.u32 %v2854, 4294901760
        %3426 = vmatpush1.msra.mxu0 %v3425
        %3427 = vmatprep.subr.mxu0 0.0
        %v3428 = vand.u32 %v2855, 4294901760
        %3429 = vmatpush1.msra.mxu0 %v3428
        %3430 = vmatprep.subr.mxu0 0.0
        %v3431 = vand.u32 %v2856, 4294901760
        %3432 = vmatpush1.msra.mxu0 %v3431
        %3433 = vmatprep.subr.mxu0 0.0
        %v3434 = vand.u32 %v2857, 4294901760
        %3435 = vmatpush1.msra.mxu0 %v3434
        %3436 = vmatprep.subr.mxu0 0.0
        %v3437 = vand.u32 %v2858, 4294901760
        %3438 = vmatpush1.msra.mxu0 %v3437
        %3439 = vmatprep.subr.mxu0 0.0
        %v3440 = vand.u32 %v2859, 4294901760
        %3441 = vmatpush1.msra.mxu0 %v3440
        %3442 = vmatprep.subr.mxu0 0.0
        %v3443 = vand.u32 %v2860, 4294901760
        %3444 = vmatpush1.msra.mxu0 %v3443
        %3445 = vmatprep.subr.mxu0 0.0
        %v3446 = vand.u32 %v2861, 4294901760
        %3447 = vmatpush1.msra.mxu0 %v3446
        %3448 = vmatprep.subr.mxu0 0.0
        %v3449 = vand.u32 %v2862, 4294901760
        %3450 = vmatpush1.msra.mxu0 %v3449
        %3451 = vmatprep.subr.mxu0 0.0
        %v3452 = vand.u32 %v2863, 4294901760
        %3453 = vmatpush1.msra.mxu0 %v3452
        %3454 = vmatprep.subr.mxu0 0.0
        %v3455 = vand.u32 %v2864, 4294901760
        %3456 = vmatpush1.msra.mxu0 %v3455
        %3457 = vmatprep.subr.mxu0 0.0
        %v3458 = vand.u32 %v2865, 4294901760
        %3459 = vmatpush1.msra.mxu0 %v3458
        %3460 = vmatprep.subr.mxu0 0.0
        %v3461 = vand.u32 %v2866, 4294901760
        %3462 = vmatpush1.msra.mxu0 %v3461
        %3463 = vmatprep.subr.mxu0 0.0
        %v3464 = vand.u32 %v2867, 4294901760
        %3465 = vmatpush1.msra.mxu0 %v3464
        %3466 = vmatprep.subr.mxu0 0.0
        %v3467 = vand.u32 %v2868, 4294901760
        %3468 = vmatpush1.msra.mxu0 %v3467
        %3469 = vmatprep.subr.mxu0 0.0
        %v3470 = vand.u32 %v2869, 4294901760
        %3471 = vmatpush1.msra.mxu0 %v3470
        %3472 = vmatprep.subr.mxu0 0.0
        %3473 = vmatpush1.msra.mxu0 0.0
        %3474 = vmatprep.subr.mxu0 0.0
        %3475 = vmatpush1.msra.mxu0 0.0
        %3476 = vmatprep.subr.mxu0 0.0
        %3477 = vmatpush1.msra.mxu0 0.0
        %3478 = vmatprep.subr.mxu0 0.0
        %3479 = vmatpush1.msra.mxu0 0.0
        %3480 = vmatprep.subr.mxu0 0.0
        %3481 = vmatpush1.msra.mxu0 0.0
        %3482 = vmatprep.subr.mxu0 0.0
        %3483 = vmatpush1.msra.mxu0 0.0
        %3484 = vmatprep.subr.mxu0 0.0
        %3485 = vmatpush1.msra.mxu0 0.0
        %3486 = vmatprep.subr.mxu0 0.0
        %3487 = vmatpush1.msra.mxu0 0.0
        %3488 = vmatprep.subr.mxu0 0.0
        %3489 = vmatpush1.msra.mxu0 0.0
        %3490 = vmatprep.subr.mxu0 0.0
        %3491 = vmatpush1.msra.mxu0 0.0
        %3492 = vmatprep.subr.mxu0 0.0
        %3493 = vmatpush1.msra.mxu0 0.0
        %3494 = vmatprep.subr.mxu0 0.0
        %3495 = vmatpush1.msra.mxu0 0.0
        %3496 = vmatprep.subr.mxu0 0.0
        %3497 = vmatpush1.msra.mxu0 0.0
        %3498 = vmatprep.subr.mxu0 0.0
        %3499 = vmatpush1.msra.mxu0 0.0
        %3500 = vmatprep.subr.mxu0 0.0
        %3501 = vmatpush1.msra.mxu0 0.0
        %3502 = vmatprep.subr.mxu0 0.0
        %3503 = vmatpush1.msra.mxu0 0.0
        %3504 = vmatprep.mubr.f32.mxu0 0.0
        %v3505 = vand.u32 %v2852, 4294901760
        %3506 = vmatmul.mubr.f32.gmra.mrb[0].mxu0 %v3505
        %v3507 = vpop.f32.mrb[0].mxu0
        %v3508 = vadd.f32 %v3421, %v3507
        %v3509 = vpop.f32.mrb[0].mxu0
        %3510 = vdwg.mxu0
        %s3511 = scalar_lea.vmem %s202, 32 [#allocation7]
        %3512 = vst [vmem:[%s3511] sm:$0xff] %v3508
        %s3513 = scalar_lea.vmem %s168, 40 [#allocation2]
        %v3514 = vld [vmem:[%s3513] sm:$0xff]
        %s3515 = scalar_lea.vmem %s177, 640 [#allocation5]
        %v3516 = vld [vmem:[%s3515] sm:$0xff]
        %v3517 = vld [vmem:[%s3515 + $0x8] sm:$0xff]
        %v3518 = vld [vmem:[%s3515 + $0x10] sm:$0xff]
        %v3519 = vld [vmem:[%s3515 + $0x18] sm:$0xff]
        %v3520 = vld [vmem:[%s3515 + $0x20] sm:$0xff]
        %v3521 = vld [vmem:[%s3515 + $0x28] sm:$0xff]
        %v3522 = vld [vmem:[%s3515 + $0x30] sm:$0xff]
        %v3523 = vld [vmem:[%s3515 + $0x38] sm:$0xff]
        %v3524 = vld [vmem:[%s3515 + $0x40] sm:$0xff]
        %v3525 = vld [vmem:[%s3515 + $0x48] sm:$0xff]
        %v3526 = vld [vmem:[%s3515 + $0x50] sm:$0xff]
        %v3527 = vld [vmem:[%s3515 + $0x58] sm:$0xff]
        %v3528 = vld [vmem:[%s3515 + $0x60] sm:$0xff]
        %v3529 = vld [vmem:[%s3515 + $0x68] sm:$0xff]
        %v3530 = vld [vmem:[%s3515 + $0x70] sm:$0xff]
        %v3531 = vld [vmem:[%s3515 + $0x78] sm:$0xff]
        %3532 = vmatprep.subr.mxu0 0.0
        %v3533 = vand.u32 %v3516, 4294901760
        %3534 = vmatpush1.msra.mxu0 %v3533
        %3535 = vmatprep.subr.mxu0 0.0
        %v3536 = vand.u32 %v3517, 4294901760
        %3537 = vmatpush1.msra.mxu0 %v3536
        %3538 = vmatprep.subr.mxu0 0.0
        %v3539 = vand.u32 %v3518, 4294901760
        %3540 = vmatpush1.msra.mxu0 %v3539
        %3541 = vmatprep.subr.mxu0 0.0
        %v3542 = vand.u32 %v3519, 4294901760
        %3543 = vmatpush1.msra.mxu0 %v3542
        %3544 = vmatprep.subr.mxu0 0.0
        %v3545 = vand.u32 %v3520, 4294901760
        %3546 = vmatpush1.msra.mxu0 %v3545
        %3547 = vmatprep.subr.mxu0 0.0
        %v3548 = vand.u32 %v3521, 4294901760
        %3549 = vmatpush1.msra.mxu0 %v3548
        %3550 = vmatprep.subr.mxu0 0.0
        %v3551 = vand.u32 %v3522, 4294901760
        %3552 = vmatpush1.msra.mxu0 %v3551
        %3553 = vmatprep.subr.mxu0 0.0
        %v3554 = vand.u32 %v3523, 4294901760
        %3555 = vmatpush1.msra.mxu0 %v3554
        %3556 = vmatprep.subr.mxu0 0.0
        %v3557 = vand.u32 %v3524, 4294901760
        %3558 = vmatpush1.msra.mxu0 %v3557
        %3559 = vmatprep.subr.mxu0 0.0
        %v3560 = vand.u32 %v3525, 4294901760
        %3561 = vmatpush1.msra.mxu0 %v3560
        %3562 = vmatprep.subr.mxu0 0.0
        %v3563 = vand.u32 %v3526, 4294901760
        %3564 = vmatpush1.msra.mxu0 %v3563
        %3565 = vmatprep.subr.mxu0 0.0
        %v3566 = vand.u32 %v3527, 4294901760
        %3567 = vmatpush1.msra.mxu0 %v3566
        %3568 = vmatprep.subr.mxu0 0.0
        %v3569 = vand.u32 %v3528, 4294901760
        %3570 = vmatpush1.msra.mxu0 %v3569
        %3571 = vmatprep.subr.mxu0 0.0
        %v3572 = vand.u32 %v3529, 4294901760
        %3573 = vmatpush1.msra.mxu0 %v3572
        %3574 = vmatprep.subr.mxu0 0.0
        %v3575 = vand.u32 %v3530, 4294901760
        %3576 = vmatpush1.msra.mxu0 %v3575
        %3577 = vmatprep.subr.mxu0 0.0
        %v3578 = vand.u32 %v3531, 4294901760
        %3579 = vmatpush1.msra.mxu0 %v3578
        %3580 = vmatprep.subr.mxu0 0.0
        %3581 = vmatpush1.msra.mxu0 0.0
        %3582 = vmatprep.subr.mxu0 0.0
        %3583 = vmatpush1.msra.mxu0 0.0
        %3584 = vmatprep.subr.mxu0 0.0
        %3585 = vmatpush1.msra.mxu0 0.0
        %3586 = vmatprep.subr.mxu0 0.0
        %3587 = vmatpush1.msra.mxu0 0.0
        %3588 = vmatprep.subr.mxu0 0.0
        %3589 = vmatpush1.msra.mxu0 0.0
        %3590 = vmatprep.subr.mxu0 0.0
        %3591 = vmatpush1.msra.mxu0 0.0
        %3592 = vmatprep.subr.mxu0 0.0
        %3593 = vmatpush1.msra.mxu0 0.0
        %3594 = vmatprep.subr.mxu0 0.0
        %3595 = vmatpush1.msra.mxu0 0.0
        %3596 = vmatprep.subr.mxu0 0.0
        %3597 = vmatpush1.msra.mxu0 0.0
        %3598 = vmatprep.subr.mxu0 0.0
        %3599 = vmatpush1.msra.mxu0 0.0
        %3600 = vmatprep.subr.mxu0 0.0
        %3601 = vmatpush1.msra.mxu0 0.0
        %3602 = vmatprep.subr.mxu0 0.0
        %3603 = vmatpush1.msra.mxu0 0.0
        %3604 = vmatprep.subr.mxu0 0.0
        %3605 = vmatpush1.msra.mxu0 0.0
        %3606 = vmatprep.subr.mxu0 0.0
        %3607 = vmatpush1.msra.mxu0 0.0
        %3608 = vmatprep.subr.mxu0 0.0
        %3609 = vmatpush1.msra.mxu0 0.0
        %3610 = vmatprep.subr.mxu0 0.0
        %3611 = vmatpush1.msra.mxu0 0.0
        %3612 = vmatprep.mubr.f32.mxu0 0.0
        %v3613 = vand.u32 %v3514, 4294901760
        %v3614 = vsub.f32 %v3514, %v3613
        %v3615 = vand.u32 %v3614, 4294901760
        %v3616 = vsub.f32 %v3614, %v3615
        %v3617 = vand.u32 %v3616, 4294901760
        %3618 = vmatmul.mubr.f32.gmra.mrb[0].mxu0 %v3617
        %v3619 = vpop.f32.mrb[0].mxu0
        %v3620 = vadd.f32 0.0, %v3619
        %v3621 = vpop.f32.mrb[0].mxu0
        %3622 = vdwg.mxu0
        %3623 = vmatprep.subr.mxu0 0.0
        %v3624 = vand.u32 %v3516, 4294901760
        %v3625 = vsub.f32 %v3516, %v3624
        %v3626 = vand.u32 %v3625, 4294901760
        %v3627 = vsub.f32 %v3625, %v3626
        %v3628 = vand.u32 %v3627, 4294901760
        %3629 = vmatpush1.msra.mxu0 %v3628
        %3630 = vmatprep.subr.mxu0 0.0
        %v3631 = vand.u32 %v3517, 4294901760
        %v3632 = vsub.f32 %v3517, %v3631
        %v3633 = vand.u32 %v3632, 4294901760
        %v3634 = vsub.f32 %v3632, %v3633
        %v3635 = vand.u32 %v3634, 4294901760
        %3636 = vmatpush1.msra.mxu0 %v3635
        %3637 = vmatprep.subr.mxu0 0.0
        %v3638 = vand.u32 %v3518, 4294901760
        %v3639 = vsub.f32 %v3518, %v3638
        %v3640 = vand.u32 %v3639, 4294901760
        %v3641 = vsub.f32 %v3639, %v3640
        %v3642 = vand.u32 %v3641, 4294901760
        %3643 = vmatpush1.msra.mxu0 %v3642
        %3644 = vmatprep.subr.mxu0 0.0
        %v3645 = vand.u32 %v3519, 4294901760
        %v3646 = vsub.f32 %v3519, %v3645
        %v3647 = vand.u32 %v3646, 4294901760
        %v3648 = vsub.f32 %v3646, %v3647
        %v3649 = vand.u32 %v3648, 4294901760
        %3650 = vmatpush1.msra.mxu0 %v3649
        %3651 = vmatprep.subr.mxu0 0.0
        %v3652 = vand.u32 %v3520, 4294901760
        %v3653 = vsub.f32 %v3520, %v3652
        %v3654 = vand.u32 %v3653, 4294901760
        %v3655 = vsub.f32 %v3653, %v3654
        %v3656 = vand.u32 %v3655, 4294901760
        %3657 = vmatpush1.msra.mxu0 %v3656
        %3658 = vmatprep.subr.mxu0 0.0
        %v3659 = vand.u32 %v3521, 4294901760
        %v3660 = vsub.f32 %v3521, %v3659
        %v3661 = vand.u32 %v3660, 4294901760
        %v3662 = vsub.f32 %v3660, %v3661
        %v3663 = vand.u32 %v3662, 4294901760
        %3664 = vmatpush1.msra.mxu0 %v3663
        %3665 = vmatprep.subr.mxu0 0.0
        %v3666 = vand.u32 %v3522, 4294901760
        %v3667 = vsub.f32 %v3522, %v3666
        %v3668 = vand.u32 %v3667, 4294901760
        %v3669 = vsub.f32 %v3667, %v3668
        %v3670 = vand.u32 %v3669, 4294901760
        %3671 = vmatpush1.msra.mxu0 %v3670
        %3672 = vmatprep.subr.mxu0 0.0
        %v3673 = vand.u32 %v3523, 4294901760
        %v3674 = vsub.f32 %v3523, %v3673
        %v3675 = vand.u32 %v3674, 4294901760
        %v3676 = vsub.f32 %v3674, %v3675
        %v3677 = vand.u32 %v3676, 4294901760
        %3678 = vmatpush1.msra.mxu0 %v3677
        %3679 = vmatprep.subr.mxu0 0.0
        %v3680 = vand.u32 %v3524, 4294901760
        %v3681 = vsub.f32 %v3524, %v3680
        %v3682 = vand.u32 %v3681, 4294901760
        %v3683 = vsub.f32 %v3681, %v3682
        %v3684 = vand.u32 %v3683, 4294901760
        %3685 = vmatpush1.msra.mxu0 %v3684
        %3686 = vmatprep.subr.mxu0 0.0
        %v3687 = vand.u32 %v3525, 4294901760
        %v3688 = vsub.f32 %v3525, %v3687
        %v3689 = vand.u32 %v3688, 4294901760
        %v3690 = vsub.f32 %v3688, %v3689
        %v3691 = vand.u32 %v3690, 4294901760
        %3692 = vmatpush1.msra.mxu0 %v3691
        %3693 = vmatprep.subr.mxu0 0.0
        %v3694 = vand.u32 %v3526, 4294901760
        %v3695 = vsub.f32 %v3526, %v3694
        %v3696 = vand.u32 %v3695, 4294901760
        %v3697 = vsub.f32 %v3695, %v3696
        %v3698 = vand.u32 %v3697, 4294901760
        %3699 = vmatpush1.msra.mxu0 %v3698
        %3700 = vmatprep.subr.mxu0 0.0
        %v3701 = vand.u32 %v3527, 4294901760
        %v3702 = vsub.f32 %v3527, %v3701
        %v3703 = vand.u32 %v3702, 4294901760
        %v3704 = vsub.f32 %v3702, %v3703
        %v3705 = vand.u32 %v3704, 4294901760
        %3706 = vmatpush1.msra.mxu0 %v3705
        %3707 = vmatprep.subr.mxu0 0.0
        %v3708 = vand.u32 %v3528, 4294901760
        %v3709 = vsub.f32 %v3528, %v3708
        %v3710 = vand.u32 %v3709, 4294901760
        %v3711 = vsub.f32 %v3709, %v3710
        %v3712 = vand.u32 %v3711, 4294901760
        %3713 = vmatpush1.msra.mxu0 %v3712
        %3714 = vmatprep.subr.mxu0 0.0
        %v3715 = vand.u32 %v3529, 4294901760
        %v3716 = vsub.f32 %v3529, %v3715
        %v3717 = vand.u32 %v3716, 4294901760
        %v3718 = vsub.f32 %v3716, %v3717
        %v3719 = vand.u32 %v3718, 4294901760
        %3720 = vmatpush1.msra.mxu0 %v3719
        %3721 = vmatprep.subr.mxu0 0.0
        %v3722 = vand.u32 %v3530, 4294901760
        %v3723 = vsub.f32 %v3530, %v3722
        %v3724 = vand.u32 %v3723, 4294901760
        %v3725 = vsub.f32 %v3723, %v3724
        %v3726 = vand.u32 %v3725, 4294901760
        %3727 = vmatpush1.msra.mxu0 %v3726
        %3728 = vmatprep.subr.mxu0 0.0
        %v3729 = vand.u32 %v3531, 4294901760
        %v3730 = vsub.f32 %v3531, %v3729
        %v3731 = vand.u32 %v3730, 4294901760
        %v3732 = vsub.f32 %v3730, %v3731
        %v3733 = vand.u32 %v3732, 4294901760
        %3734 = vmatpush1.msra.mxu0 %v3733
        %3735 = vmatprep.subr.mxu0 0.0
        %3736 = vmatpush1.msra.mxu0 0.0
        %3737 = vmatprep.subr.mxu0 0.0
        %3738 = vmatpush1.msra.mxu0 0.0
        %3739 = vmatprep.subr.mxu0 0.0
        %3740 = vmatpush1.msra.mxu0 0.0
        %3741 = vmatprep.subr.mxu0 0.0
        %3742 = vmatpush1.msra.mxu0 0.0
        %3743 = vmatprep.subr.mxu0 0.0
        %3744 = vmatpush1.msra.mxu0 0.0
        %3745 = vmatprep.subr.mxu0 0.0
        %3746 = vmatpush1.msra.mxu0 0.0
        %3747 = vmatprep.subr.mxu0 0.0
        %3748 = vmatpush1.msra.mxu0 0.0
        %3749 = vmatprep.subr.mxu0 0.0
        %3750 = vmatpush1.msra.mxu0 0.0
        %3751 = vmatprep.subr.mxu0 0.0
        %3752 = vmatpush1.msra.mxu0 0.0
        %3753 = vmatprep.subr.mxu0 0.0
        %3754 = vmatpush1.msra.mxu0 0.0
        %3755 = vmatprep.subr.mxu0 0.0
        %3756 = vmatpush1.msra.mxu0 0.0
        %3757 = vmatprep.subr.mxu0 0.0
        %3758 = vmatpush1.msra.mxu0 0.0
        %3759 = vmatprep.subr.mxu0 0.0
        %3760 = vmatpush1.msra.mxu0 0.0
        %3761 = vmatprep.subr.mxu0 0.0
        %3762 = vmatpush1.msra.mxu0 0.0
        %3763 = vmatprep.subr.mxu0 0.0
        %3764 = vmatpush1.msra.mxu0 0.0
        %3765 = vmatprep.subr.mxu0 0.0
        %3766 = vmatpush1.msra.mxu0 0.0
        %3767 = vmatprep.mubr.f32.mxu0 0.0
        %v3768 = vand.u32 %v3514, 4294901760
        %3769 = vmatmul.mubr.f32.gmra.mrb[0].mxu0 %v3768
        %v3770 = vpop.f32.mrb[0].mxu0
        %v3771 = vadd.f32 %v3620, %v3770
        %v3772 = vpop.f32.mrb[0].mxu0
        %3773 = vdwg.mxu0
        %3774 = vmatprep.subr.mxu0 0.0
        %v3775 = vand.u32 %v3516, 4294901760
        %v3776 = vsub.f32 %v3516, %v3775
        %3777 = vmatpush1.msra.mxu0 %v3776
        %3778 = vmatprep.subr.mxu0 0.0
        %v3779 = vand.u32 %v3517, 4294901760
        %v3780 = vsub.f32 %v3517, %v3779
        %3781 = vmatpush1.msra.mxu0 %v3780
        %3782 = vmatprep.subr.mxu0 0.0
        %v3783 = vand.u32 %v3518, 4294901760
        %v3784 = vsub.f32 %v3518, %v3783
        %3785 = vmatpush1.msra.mxu0 %v3784
        %3786 = vmatprep.subr.mxu0 0.0
        %v3787 = vand.u32 %v3519, 4294901760
        %v3788 = vsub.f32 %v3519, %v3787
        %3789 = vmatpush1.msra.mxu0 %v3788
        %3790 = vmatprep.subr.mxu0 0.0
        %v3791 = vand.u32 %v3520, 4294901760
        %v3792 = vsub.f32 %v3520, %v3791
        %3793 = vmatpush1.msra.mxu0 %v3792
        %3794 = vmatprep.subr.mxu0 0.0
        %v3795 = vand.u32 %v3521, 4294901760
        %v3796 = vsub.f32 %v3521, %v3795
        %3797 = vmatpush1.msra.mxu0 %v3796
        %3798 = vmatprep.subr.mxu0 0.0
        %v3799 = vand.u32 %v3522, 4294901760
        %v3800 = vsub.f32 %v3522, %v3799
        %3801 = vmatpush1.msra.mxu0 %v3800
        %3802 = vmatprep.subr.mxu0 0.0
        %v3803 = vand.u32 %v3523, 4294901760
        %v3804 = vsub.f32 %v3523, %v3803
        %3805 = vmatpush1.msra.mxu0 %v3804
        %3806 = vmatprep.subr.mxu0 0.0
        %v3807 = vand.u32 %v3524, 4294901760
        %v3808 = vsub.f32 %v3524, %v3807
        %3809 = vmatpush1.msra.mxu0 %v3808
        %3810 = vmatprep.subr.mxu0 0.0
        %v3811 = vand.u32 %v3525, 4294901760
        %v3812 = vsub.f32 %v3525, %v3811
        %3813 = vmatpush1.msra.mxu0 %v3812
        %3814 = vmatprep.subr.mxu0 0.0
        %v3815 = vand.u32 %v3526, 4294901760
        %v3816 = vsub.f32 %v3526, %v3815
        %3817 = vmatpush1.msra.mxu0 %v3816
        %3818 = vmatprep.subr.mxu0 0.0
        %v3819 = vand.u32 %v3527, 4294901760
        %v3820 = vsub.f32 %v3527, %v3819
        %3821 = vmatpush1.msra.mxu0 %v3820
        %3822 = vmatprep.subr.mxu0 0.0
        %v3823 = vand.u32 %v3528, 4294901760
        %v3824 = vsub.f32 %v3528, %v3823
        %3825 = vmatpush1.msra.mxu0 %v3824
        %3826 = vmatprep.subr.mxu0 0.0
        %v3827 = vand.u32 %v3529, 4294901760
        %v3828 = vsub.f32 %v3529, %v3827
        %3829 = vmatpush1.msra.mxu0 %v3828
        %3830 = vmatprep.subr.mxu0 0.0
        %v3831 = vand.u32 %v3530, 4294901760
        %v3832 = vsub.f32 %v3530, %v3831
        %3833 = vmatpush1.msra.mxu0 %v3832
        %3834 = vmatprep.subr.mxu0 0.0
        %v3835 = vand.u32 %v3531, 4294901760
        %v3836 = vsub.f32 %v3531, %v3835
        %3837 = vmatpush1.msra.mxu0 %v3836
        %3838 = vmatprep.subr.mxu0 0.0
        %3839 = vmatpush1.msra.mxu0 0.0
        %3840 = vmatprep.subr.mxu0 0.0
        %3841 = vmatpush1.msra.mxu0 0.0
        %3842 = vmatprep.subr.mxu0 0.0
        %3843 = vmatpush1.msra.mxu0 0.0
        %3844 = vmatprep.subr.mxu0 0.0
        %3845 = vmatpush1.msra.mxu0 0.0
        %3846 = vmatprep.subr.mxu0 0.0
        %3847 = vmatpush1.msra.mxu0 0.0
        %3848 = vmatprep.subr.mxu0 0.0
        %3849 = vmatpush1.msra.mxu0 0.0
        %3850 = vmatprep.subr.mxu0 0.0
        %3851 = vmatpush1.msra.mxu0 0.0
        %3852 = vmatprep.subr.mxu0 0.0
        %3853 = vmatpush1.msra.mxu0 0.0
        %3854 = vmatprep.subr.mxu0 0.0
        %3855 = vmatpush1.msra.mxu0 0.0
        %3856 = vmatprep.subr.mxu0 0.0
        %3857 = vmatpush1.msra.mxu0 0.0
        %3858 = vmatprep.subr.mxu0 0.0
        %3859 = vmatpush1.msra.mxu0 0.0
        %3860 = vmatprep.subr.mxu0 0.0
        %3861 = vmatpush1.msra.mxu0 0.0
        %3862 = vmatprep.subr.mxu0 0.0
        %3863 = vmatpush1.msra.mxu0 0.0
        %3864 = vmatprep.subr.mxu0 0.0
        %3865 = vmatpush1.msra.mxu0 0.0
        %3866 = vmatprep.subr.mxu0 0.0
        %3867 = vmatpush1.msra.mxu0 0.0
        %3868 = vmatprep.subr.mxu0 0.0
        %3869 = vmatpush1.msra.mxu0 0.0
        %3870 = vmatprep.mubr.f32.mxu0 0.0
        %v3871 = vand.u32 %v3514, 4294901760
        %v3872 = vsub.f32 %v3514, %v3871
        %3873 = vmatmul.mubr.f32.gmra.mrb[0].mxu0 %v3872
        %v3874 = vpop.f32.mrb[0].mxu0
        %v3875 = vadd.f32 %v3771, %v3874
        %v3876 = vpop.f32.mrb[0].mxu0
        %3877 = vdwg.mxu0
        %3878 = vmatprep.subr.mxu0 0.0
        %v3879 = vand.u32 %v3516, 4294901760
        %3880 = vmatpush1.msra.mxu0 %v3879
        %3881 = vmatprep.subr.mxu0 0.0
        %v3882 = vand.u32 %v3517, 4294901760
        %3883 = vmatpush1.msra.mxu0 %v3882
        %3884 = vmatprep.subr.mxu0 0.0
        %v3885 = vand.u32 %v3518, 4294901760
        %3886 = vmatpush1.msra.mxu0 %v3885
        %3887 = vmatprep.subr.mxu0 0.0
        %v3888 = vand.u32 %v3519, 4294901760
        %3889 = vmatpush1.msra.mxu0 %v3888
        %3890 = vmatprep.subr.mxu0 0.0
        %v3891 = vand.u32 %v3520, 4294901760
        %3892 = vmatpush1.msra.mxu0 %v3891
        %3893 = vmatprep.subr.mxu0 0.0
        %v3894 = vand.u32 %v3521, 4294901760
        %3895 = vmatpush1.msra.mxu0 %v3894
        %3896 = vmatprep.subr.mxu0 0.0
        %v3897 = vand.u32 %v3522, 4294901760
        %3898 = vmatpush1.msra.mxu0 %v3897
        %3899 = vmatprep.subr.mxu0 0.0
        %v3900 = vand.u32 %v3523, 4294901760
        %3901 = vmatpush1.msra.mxu0 %v3900
        %3902 = vmatprep.subr.mxu0 0.0
        %v3903 = vand.u32 %v3524, 4294901760
        %3904 = vmatpush1.msra.mxu0 %v3903
        %3905 = vmatprep.subr.mxu0 0.0
        %v3906 = vand.u32 %v3525, 4294901760
        %3907 = vmatpush1.msra.mxu0 %v3906
        %3908 = vmatprep.subr.mxu0 0.0
        %v3909 = vand.u32 %v3526, 4294901760
        %3910 = vmatpush1.msra.mxu0 %v3909
        %3911 = vmatprep.subr.mxu0 0.0
        %v3912 = vand.u32 %v3527, 4294901760
        %3913 = vmatpush1.msra.mxu0 %v3912
        %3914 = vmatprep.subr.mxu0 0.0
        %v3915 = vand.u32 %v3528, 4294901760
        %3916 = vmatpush1.msra.mxu0 %v3915
        %3917 = vmatprep.subr.mxu0 0.0
        %v3918 = vand.u32 %v3529, 4294901760
        %3919 = vmatpush1.msra.mxu0 %v3918
        %3920 = vmatprep.subr.mxu0 0.0
        %v3921 = vand.u32 %v3530, 4294901760
        %3922 = vmatpush1.msra.mxu0 %v3921
        %3923 = vmatprep.subr.mxu0 0.0
        %v3924 = vand.u32 %v3531, 4294901760
        %3925 = vmatpush1.msra.mxu0 %v3924
        %3926 = vmatprep.subr.mxu0 0.0
        %3927 = vmatpush1.msra.mxu0 0.0
        %3928 = vmatprep.subr.mxu0 0.0
        %3929 = vmatpush1.msra.mxu0 0.0
        %3930 = vmatprep.subr.mxu0 0.0
        %3931 = vmatpush1.msra.mxu0 0.0
        %3932 = vmatprep.subr.mxu0 0.0
        %3933 = vmatpush1.msra.mxu0 0.0
        %3934 = vmatprep.subr.mxu0 0.0
        %3935 = vmatpush1.msra.mxu0 0.0
        %3936 = vmatprep.subr.mxu0 0.0
        %3937 = vmatpush1.msra.mxu0 0.0
        %3938 = vmatprep.subr.mxu0 0.0
        %3939 = vmatpush1.msra.mxu0 0.0
        %3940 = vmatprep.subr.mxu0 0.0
        %3941 = vmatpush1.msra.mxu0 0.0
        %3942 = vmatprep.subr.mxu0 0.0
        %3943 = vmatpush1.msra.mxu0 0.0
        %3944 = vmatprep.subr.mxu0 0.0
        %3945 = vmatpush1.msra.mxu0 0.0
        %3946 = vmatprep.subr.mxu0 0.0
        %3947 = vmatpush1.msra.mxu0 0.0
        %3948 = vmatprep.subr.mxu0 0.0
        %3949 = vmatpush1.msra.mxu0 0.0
        %3950 = vmatprep.subr.mxu0 0.0
        %3951 = vmatpush1.msra.mxu0 0.0
        %3952 = vmatprep.subr.mxu0 0.0
        %3953 = vmatpush1.msra.mxu0 0.0
        %3954 = vmatprep.subr.mxu0 0.0
        %3955 = vmatpush1.msra.mxu0 0.0
        %3956 = vmatprep.subr.mxu0 0.0
        %3957 = vmatpush1.msra.mxu0 0.0
        %3958 = vmatprep.mubr.f32.mxu0 0.0
        %v3959 = vand.u32 %v3514, 4294901760
        %v3960 = vsub.f32 %v3514, %v3959
        %v3961 = vand.u32 %v3960, 4294901760
        %3962 = vmatmul.mubr.f32.gmra.mrb[0].mxu0 %v3961
        %v3963 = vpop.f32.mrb[0].mxu0
        %v3964 = vadd.f32 %v3875, %v3963
        %v3965 = vpop.f32.mrb[0].mxu0
        %3966 = vdwg.mxu0
        %3967 = vmatprep.subr.mxu0 0.0
        %v3968 = vand.u32 %v3516, 4294901760
        %v3969 = vsub.f32 %v3516, %v3968
        %v3970 = vand.u32 %v3969, 4294901760
        %3971 = vmatpush1.msra.mxu0 %v3970
        %3972 = vmatprep.subr.mxu0 0.0
        %v3973 = vand.u32 %v3517, 4294901760
        %v3974 = vsub.f32 %v3517, %v3973
        %v3975 = vand.u32 %v3974, 4294901760
        %3976 = vmatpush1.msra.mxu0 %v3975
        %3977 = vmatprep.subr.mxu0 0.0
        %v3978 = vand.u32 %v3518, 4294901760
        %v3979 = vsub.f32 %v3518, %v3978
        %v3980 = vand.u32 %v3979, 4294901760
        %3981 = vmatpush1.msra.mxu0 %v3980
        %3982 = vmatprep.subr.mxu0 0.0
        %v3983 = vand.u32 %v3519, 4294901760
        %v3984 = vsub.f32 %v3519, %v3983
        %v3985 = vand.u32 %v3984, 4294901760
        %3986 = vmatpush1.msra.mxu0 %v3985
        %3987 = vmatprep.subr.mxu0 0.0
        %v3988 = vand.u32 %v3520, 4294901760
        %v3989 = vsub.f32 %v3520, %v3988
        %v3990 = vand.u32 %v3989, 4294901760
        %3991 = vmatpush1.msra.mxu0 %v3990
        %3992 = vmatprep.subr.mxu0 0.0
        %v3993 = vand.u32 %v3521, 4294901760
        %v3994 = vsub.f32 %v3521, %v3993
        %v3995 = vand.u32 %v3994, 4294901760
        %3996 = vmatpush1.msra.mxu0 %v3995
        %3997 = vmatprep.subr.mxu0 0.0
        %v3998 = vand.u32 %v3522, 4294901760
        %v3999 = vsub.f32 %v3522, %v3998
        %v4000 = vand.u32 %v3999, 4294901760
        %4001 = vmatpush1.msra.mxu0 %v4000
        %4002 = vmatprep.subr.mxu0 0.0
        %v4003 = vand.u32 %v3523, 4294901760
        %v4004 = vsub.f32 %v3523, %v4003
        %v4005 = vand.u32 %v4004, 4294901760
        %4006 = vmatpush1.msra.mxu0 %v4005
        %4007 = vmatprep.subr.mxu0 0.0
        %v4008 = vand.u32 %v3524, 4294901760
        %v4009 = vsub.f32 %v3524, %v4008
        %v4010 = vand.u32 %v4009, 4294901760
        %4011 = vmatpush1.msra.mxu0 %v4010
        %4012 = vmatprep.subr.mxu0 0.0
        %v4013 = vand.u32 %v3525, 4294901760
        %v4014 = vsub.f32 %v3525, %v4013
        %v4015 = vand.u32 %v4014, 4294901760
        %4016 = vmatpush1.msra.mxu0 %v4015
        %4017 = vmatprep.subr.mxu0 0.0
        %v4018 = vand.u32 %v3526, 4294901760
        %v4019 = vsub.f32 %v3526, %v4018
        %v4020 = vand.u32 %v4019, 4294901760
        %4021 = vmatpush1.msra.mxu0 %v4020
        %4022 = vmatprep.subr.mxu0 0.0
        %v4023 = vand.u32 %v3527, 4294901760
        %v4024 = vsub.f32 %v3527, %v4023
        %v4025 = vand.u32 %v4024, 4294901760
        %4026 = vmatpush1.msra.mxu0 %v4025
        %4027 = vmatprep.subr.mxu0 0.0
        %v4028 = vand.u32 %v3528, 4294901760
        %v4029 = vsub.f32 %v3528, %v4028
        %v4030 = vand.u32 %v4029, 4294901760
        %4031 = vmatpush1.msra.mxu0 %v4030
        %4032 = vmatprep.subr.mxu0 0.0
        %v4033 = vand.u32 %v3529, 4294901760
        %v4034 = vsub.f32 %v3529, %v4033
        %v4035 = vand.u32 %v4034, 4294901760
        %4036 = vmatpush1.msra.mxu0 %v4035
        %4037 = vmatprep.subr.mxu0 0.0
        %v4038 = vand.u32 %v3530, 4294901760
        %v4039 = vsub.f32 %v3530, %v4038
        %v4040 = vand.u32 %v4039, 4294901760
        %4041 = vmatpush1.msra.mxu0 %v4040
        %4042 = vmatprep.subr.mxu0 0.0
        %v4043 = vand.u32 %v3531, 4294901760
        %v4044 = vsub.f32 %v3531, %v4043
        %v4045 = vand.u32 %v4044, 4294901760
        %4046 = vmatpush1.msra.mxu0 %v4045
        %4047 = vmatprep.subr.mxu0 0.0
        %4048 = vmatpush1.msra.mxu0 0.0
        %4049 = vmatprep.subr.mxu0 0.0
        %4050 = vmatpush1.msra.mxu0 0.0
        %4051 = vmatprep.subr.mxu0 0.0
        %4052 = vmatpush1.msra.mxu0 0.0
        %4053 = vmatprep.subr.mxu0 0.0
        %4054 = vmatpush1.msra.mxu0 0.0
        %4055 = vmatprep.subr.mxu0 0.0
        %4056 = vmatpush1.msra.mxu0 0.0
        %4057 = vmatprep.subr.mxu0 0.0
        %4058 = vmatpush1.msra.mxu0 0.0
        %4059 = vmatprep.subr.mxu0 0.0
        %4060 = vmatpush1.msra.mxu0 0.0
        %4061 = vmatprep.subr.mxu0 0.0
        %4062 = vmatpush1.msra.mxu0 0.0
        %4063 = vmatprep.subr.mxu0 0.0
        %4064 = vmatpush1.msra.mxu0 0.0
        %4065 = vmatprep.subr.mxu0 0.0
        %4066 = vmatpush1.msra.mxu0 0.0
        %4067 = vmatprep.subr.mxu0 0.0
        %4068 = vmatpush1.msra.mxu0 0.0
        %4069 = vmatprep.subr.mxu0 0.0
        %4070 = vmatpush1.msra.mxu0 0.0
        %4071 = vmatprep.subr.mxu0 0.0
        %4072 = vmatpush1.msra.mxu0 0.0
        %4073 = vmatprep.subr.mxu0 0.0
        %4074 = vmatpush1.msra.mxu0 0.0
        %4075 = vmatprep.subr.mxu0 0.0
        %4076 = vmatpush1.msra.mxu0 0.0
        %4077 = vmatprep.subr.mxu0 0.0
        %4078 = vmatpush1.msra.mxu0 0.0
        %4079 = vmatprep.mubr.f32.mxu0 0.0
        %v4080 = vand.u32 %v3514, 4294901760
        %4081 = vmatmul.mubr.f32.gmra.mrb[0].mxu0 %v4080
        %v4082 = vpop.f32.mrb[0].mxu0
        %v4083 = vadd.f32 %v3964, %v4082
        %v4084 = vpop.f32.mrb[0].mxu0
        %4085 = vdwg.mxu0
        %4086 = vmatprep.subr.mxu0 0.0
        %v4087 = vand.u32 %v3516, 4294901760
        %4088 = vmatpush1.msra.mxu0 %v4087
        %4089 = vmatprep.subr.mxu0 0.0
        %v4090 = vand.u32 %v3517, 4294901760
        %4091 = vmatpush1.msra.mxu0 %v4090
        %4092 = vmatprep.subr.mxu0 0.0
        %v4093 = vand.u32 %v3518, 4294901760
        %4094 = vmatpush1.msra.mxu0 %v4093
        %4095 = vmatprep.subr.mxu0 0.0
        %v4096 = vand.u32 %v3519, 4294901760
        %4097 = vmatpush1.msra.mxu0 %v4096
        %4098 = vmatprep.subr.mxu0 0.0
        %v4099 = vand.u32 %v3520, 4294901760
        %4100 = vmatpush1.msra.mxu0 %v4099
        %4101 = vmatprep.subr.mxu0 0.0
        %v4102 = vand.u32 %v3521, 4294901760
        %4103 = vmatpush1.msra.mxu0 %v4102
        %4104 = vmatprep.subr.mxu0 0.0
        %v4105 = vand.u32 %v3522, 4294901760
        %4106 = vmatpush1.msra.mxu0 %v4105
        %4107 = vmatprep.subr.mxu0 0.0
        %v4108 = vand.u32 %v3523, 4294901760
        %4109 = vmatpush1.msra.mxu0 %v4108
        %4110 = vmatprep.subr.mxu0 0.0
        %v4111 = vand.u32 %v3524, 4294901760
        %4112 = vmatpush1.msra.mxu0 %v4111
        %4113 = vmatprep.subr.mxu0 0.0
        %v4114 = vand.u32 %v3525, 4294901760
        %4115 = vmatpush1.msra.mxu0 %v4114
        %4116 = vmatprep.subr.mxu0 0.0
        %v4117 = vand.u32 %v3526, 4294901760
        %4118 = vmatpush1.msra.mxu0 %v4117
        %4119 = vmatprep.subr.mxu0 0.0
        %v4120 = vand.u32 %v3527, 4294901760
        %4121 = vmatpush1.msra.mxu0 %v4120
        %4122 = vmatprep.subr.mxu0 0.0
        %v4123 = vand.u32 %v3528, 4294901760
        %4124 = vmatpush1.msra.mxu0 %v4123
        %4125 = vmatprep.subr.mxu0 0.0
        %v4126 = vand.u32 %v3529, 4294901760
        %4127 = vmatpush1.msra.mxu0 %v4126
        %4128 = vmatprep.subr.mxu0 0.0
        %v4129 = vand.u32 %v3530, 4294901760
        %4130 = vmatpush1.msra.mxu0 %v4129
        %4131 = vmatprep.subr.mxu0 0.0
        %v4132 = vand.u32 %v3531, 4294901760
        %4133 = vmatpush1.msra.mxu0 %v4132
        %4134 = vmatprep.subr.mxu0 0.0
        %4135 = vmatpush1.msra.mxu0 0.0
        %4136 = vmatprep.subr.mxu0 0.0
        %4137 = vmatpush1.msra.mxu0 0.0
        %4138 = vmatprep.subr.mxu0 0.0
        %4139 = vmatpush1.msra.mxu0 0.0
        %4140 = vmatprep.subr.mxu0 0.0
        %4141 = vmatpush1.msra.mxu0 0.0
        %4142 = vmatprep.subr.mxu0 0.0
        %4143 = vmatpush1.msra.mxu0 0.0
        %4144 = vmatprep.subr.mxu0 0.0
        %4145 = vmatpush1.msra.mxu0 0.0
        %4146 = vmatprep.subr.mxu0 0.0
        %4147 = vmatpush1.msra.mxu0 0.0
        %4148 = vmatprep.subr.mxu0 0.0
        %4149 = vmatpush1.msra.mxu0 0.0
        %4150 = vmatprep.subr.mxu0 0.0
        %4151 = vmatpush1.msra.mxu0 0.0
        %4152 = vmatprep.subr.mxu0 0.0
        %4153 = vmatpush1.msra.mxu0 0.0
        %4154 = vmatprep.subr.mxu0 0.0
        %4155 = vmatpush1.msra.mxu0 0.0
        %4156 = vmatprep.subr.mxu0 0.0
        %4157 = vmatpush1.msra.mxu0 0.0
        %4158 = vmatprep.subr.mxu0 0.0
        %4159 = vmatpush1.msra.mxu0 0.0
        %4160 = vmatprep.subr.mxu0 0.0
        %4161 = vmatpush1.msra.mxu0 0.0
        %4162 = vmatprep.subr.mxu0 0.0
        %4163 = vmatpush1.msra.mxu0 0.0
        %4164 = vmatprep.subr.mxu0 0.0
        %4165 = vmatpush1.msra.mxu0 0.0
        %4166 = vmatprep.mubr.f32.mxu0 0.0
        %v4167 = vand.u32 %v3514, 4294901760
        %4168 = vmatmul.mubr.f32.gmra.mrb[0].mxu0 %v4167
        %v4169 = vpop.f32.mrb[0].mxu0
        %v4170 = vadd.f32 %v4083, %v4169
        %v4171 = vpop.f32.mrb[0].mxu0
        %4172 = vdwg.mxu0
        %s4173 = scalar_lea.vmem %s202, 40 [#allocation7]
        %4174 = vst [vmem:[%s4173] sm:$0xff] %v4170
        %s4175 = scalar_lea.vmem %s168, 48 [#allocation2]
        %v4176 = vld [vmem:[%s4175] sm:$0xff]
        %s4177 = scalar_lea.vmem %s177, 768 [#allocation5]
        %v4178 = vld [vmem:[%s4177] sm:$0xff]
        %v4179 = vld [vmem:[%s4177 + $0x8] sm:$0xff]
        %v4180 = vld [vmem:[%s4177 + $0x10] sm:$0xff]
        %v4181 = vld [vmem:[%s4177 + $0x18] sm:$0xff]
        %v4182 = vld [vmem:[%s4177 + $0x20] sm:$0xff]
        %v4183 = vld [vmem:[%s4177 + $0x28] sm:$0xff]
        %v4184 = vld [vmem:[%s4177 + $0x30] sm:$0xff]
        %v4185 = vld [vmem:[%s4177 + $0x38] sm:$0xff]
        %v4186 = vld [vmem:[%s4177 + $0x40] sm:$0xff]
        %v4187 = vld [vmem:[%s4177 + $0x48] sm:$0xff]
        %v4188 = vld [vmem:[%s4177 + $0x50] sm:$0xff]
        %v4189 = vld [vmem:[%s4177 + $0x58] sm:$0xff]
        %v4190 = vld [vmem:[%s4177 + $0x60] sm:$0xff]
        %v4191 = vld [vmem:[%s4177 + $0x68] sm:$0xff]
        %v4192 = vld [vmem:[%s4177 + $0x70] sm:$0xff]
        %v4193 = vld [vmem:[%s4177 + $0x78] sm:$0xff]
        %4194 = vmatprep.subr.mxu0 0.0
        %v4195 = vand.u32 %v4178, 4294901760
        %4196 = vmatpush1.msra.mxu0 %v4195
        %4197 = vmatprep.subr.mxu0 0.0
        %v4198 = vand.u32 %v4179, 4294901760
        %4199 = vmatpush1.msra.mxu0 %v4198
        %4200 = vmatprep.subr.mxu0 0.0
        %v4201 = vand.u32 %v4180, 4294901760
        %4202 = vmatpush1.msra.mxu0 %v4201
        %4203 = vmatprep.subr.mxu0 0.0
        %v4204 = vand.u32 %v4181, 4294901760
        %4205 = vmatpush1.msra.mxu0 %v4204
        %4206 = vmatprep.subr.mxu0 0.0
        %v4207 = vand.u32 %v4182, 4294901760
        %4208 = vmatpush1.msra.mxu0 %v4207
        %4209 = vmatprep.subr.mxu0 0.0
        %v4210 = vand.u32 %v4183, 4294901760
        %4211 = vmatpush1.msra.mxu0 %v4210
        %4212 = vmatprep.subr.mxu0 0.0
        %v4213 = vand.u32 %v4184, 4294901760
        %4214 = vmatpush1.msra.mxu0 %v4213
        %4215 = vmatprep.subr.mxu0 0.0
        %v4216 = vand.u32 %v4185, 4294901760
        %4217 = vmatpush1.msra.mxu0 %v4216
        %4218 = vmatprep.subr.mxu0 0.0
        %v4219 = vand.u32 %v4186, 4294901760
        %4220 = vmatpush1.msra.mxu0 %v4219
        %4221 = vmatprep.subr.mxu0 0.0
        %v4222 = vand.u32 %v4187, 4294901760
        %4223 = vmatpush1.msra.mxu0 %v4222
        %4224 = vmatprep.subr.mxu0 0.0
        %v4225 = vand.u32 %v4188, 4294901760
        %4226 = vmatpush1.msra.mxu0 %v4225
        %4227 = vmatprep.subr.mxu0 0.0
        %v4228 = vand.u32 %v4189, 4294901760
        %4229 = vmatpush1.msra.mxu0 %v4228
        %4230 = vmatprep.subr.mxu0 0.0
        %v4231 = vand.u32 %v4190, 4294901760
        %4232 = vmatpush1.msra.mxu0 %v4231
        %4233 = vmatprep.subr.mxu0 0.0
        %v4234 = vand.u32 %v4191, 4294901760
        %4235 = vmatpush1.msra.mxu0 %v4234
        %4236 = vmatprep.subr.mxu0 0.0
        %v4237 = vand.u32 %v4192, 4294901760
        %4238 = vmatpush1.msra.mxu0 %v4237
        %4239 = vmatprep.subr.mxu0 0.0
        %v4240 = vand.u32 %v4193, 4294901760
        %4241 = vmatpush1.msra.mxu0 %v4240
        %4242 = vmatprep.subr.mxu0 0.0
        %4243 = vmatpush1.msra.mxu0 0.0
        %4244 = vmatprep.subr.mxu0 0.0
        %4245 = vmatpush1.msra.mxu0 0.0
        %4246 = vmatprep.subr.mxu0 0.0
        %4247 = vmatpush1.msra.mxu0 0.0
        %4248 = vmatprep.subr.mxu0 0.0
        %4249 = vmatpush1.msra.mxu0 0.0
        %4250 = vmatprep.subr.mxu0 0.0
        %4251 = vmatpush1.msra.mxu0 0.0
        %4252 = vmatprep.subr.mxu0 0.0
        %4253 = vmatpush1.msra.mxu0 0.0
        %4254 = vmatprep.subr.mxu0 0.0
        %4255 = vmatpush1.msra.mxu0 0.0
        %4256 = vmatprep.subr.mxu0 0.0
        %4257 = vmatpush1.msra.mxu0 0.0
        %4258 = vmatprep.subr.mxu0 0.0
        %4259 = vmatpush1.msra.mxu0 0.0
        %4260 = vmatprep.subr.mxu0 0.0
        %4261 = vmatpush1.msra.mxu0 0.0
        %4262 = vmatprep.subr.mxu0 0.0
        %4263 = vmatpush1.msra.mxu0 0.0
        %4264 = vmatprep.subr.mxu0 0.0
        %4265 = vmatpush1.msra.mxu0 0.0
        %4266 = vmatprep.subr.mxu0 0.0
        %4267 = vmatpush1.msra.mxu0 0.0
        %4268 = vmatprep.subr.mxu0 0.0
        %4269 = vmatpush1.msra.mxu0 0.0
        %4270 = vmatprep.subr.mxu0 0.0
        %4271 = vmatpush1.msra.mxu0 0.0
        %4272 = vmatprep.subr.mxu0 0.0
        %4273 = vmatpush1.msra.mxu0 0.0
        %4274 = vmatprep.mubr.f32.mxu0 0.0
        %v4275 = vand.u32 %v4176, 4294901760
        %v4276 = vsub.f32 %v4176, %v4275
        %v4277 = vand.u32 %v4276, 4294901760
        %v4278 = vsub.f32 %v4276, %v4277
        %v4279 = vand.u32 %v4278, 4294901760
        %4280 = vmatmul.mubr.f32.gmra.mrb[0].mxu0 %v4279
        %v4281 = vpop.f32.mrb[0].mxu0
        %v4282 = vadd.f32 0.0, %v4281
        %v4283 = vpop.f32.mrb[0].mxu0
        %4284 = vdwg.mxu0
        %4285 = vmatprep.subr.mxu0 0.0
        %v4286 = vand.u32 %v4178, 4294901760
        %v4287 = vsub.f32 %v4178, %v4286
        %v4288 = vand.u32 %v4287, 4294901760
        %v4289 = vsub.f32 %v4287, %v4288
        %v4290 = vand.u32 %v4289, 4294901760
        %4291 = vmatpush1.msra.mxu0 %v4290
        %4292 = vmatprep.subr.mxu0 0.0
        %v4293 = vand.u32 %v4179, 4294901760
        %v4294 = vsub.f32 %v4179, %v4293
        %v4295 = vand.u32 %v4294, 4294901760
        %v4296 = vsub.f32 %v4294, %v4295
        %v4297 = vand.u32 %v4296, 4294901760
        %4298 = vmatpush1.msra.mxu0 %v4297
        %4299 = vmatprep.subr.mxu0 0.0
        %v4300 = vand.u32 %v4180, 4294901760
        %v4301 = vsub.f32 %v4180, %v4300
        %v4302 = vand.u32 %v4301, 4294901760
        %v4303 = vsub.f32 %v4301, %v4302
        %v4304 = vand.u32 %v4303, 4294901760
        %4305 = vmatpush1.msra.mxu0 %v4304
        %4306 = vmatprep.subr.mxu0 0.0
        %v4307 = vand.u32 %v4181, 4294901760
        %v4308 = vsub.f32 %v4181, %v4307
        %v4309 = vand.u32 %v4308, 4294901760
        %v4310 = vsub.f32 %v4308, %v4309
        %v4311 = vand.u32 %v4310, 4294901760
        %4312 = vmatpush1.msra.mxu0 %v4311
        %4313 = vmatprep.subr.mxu0 0.0
        %v4314 = vand.u32 %v4182, 4294901760
        %v4315 = vsub.f32 %v4182, %v4314
        %v4316 = vand.u32 %v4315, 4294901760
        %v4317 = vsub.f32 %v4315, %v4316
        %v4318 = vand.u32 %v4317, 4294901760
        %4319 = vmatpush1.msra.mxu0 %v4318
        %4320 = vmatprep.subr.mxu0 0.0
        %v4321 = vand.u32 %v4183, 4294901760
        %v4322 = vsub.f32 %v4183, %v4321
        %v4323 = vand.u32 %v4322, 4294901760
        %v4324 = vsub.f32 %v4322, %v4323
        %v4325 = vand.u32 %v4324, 4294901760
        %4326 = vmatpush1.msra.mxu0 %v4325
        %4327 = vmatprep.subr.mxu0 0.0
        %v4328 = vand.u32 %v4184, 4294901760
        %v4329 = vsub.f32 %v4184, %v4328
        %v4330 = vand.u32 %v4329, 4294901760
        %v4331 = vsub.f32 %v4329, %v4330
        %v4332 = vand.u32 %v4331, 4294901760
        %4333 = vmatpush1.msra.mxu0 %v4332
        %4334 = vmatprep.subr.mxu0 0.0
        %v4335 = vand.u32 %v4185, 4294901760
        %v4336 = vsub.f32 %v4185, %v4335
        %v4337 = vand.u32 %v4336, 4294901760
        %v4338 = vsub.f32 %v4336, %v4337
        %v4339 = vand.u32 %v4338, 4294901760
        %4340 = vmatpush1.msra.mxu0 %v4339
        %4341 = vmatprep.subr.mxu0 0.0
        %v4342 = vand.u32 %v4186, 4294901760
        %v4343 = vsub.f32 %v4186, %v4342
        %v4344 = vand.u32 %v4343, 4294901760
        %v4345 = vsub.f32 %v4343, %v4344
        %v4346 = vand.u32 %v4345, 4294901760
        %4347 = vmatpush1.msra.mxu0 %v4346
        %4348 = vmatprep.subr.mxu0 0.0
        %v4349 = vand.u32 %v4187, 4294901760
        %v4350 = vsub.f32 %v4187, %v4349
        %v4351 = vand.u32 %v4350, 4294901760
        %v4352 = vsub.f32 %v4350, %v4351
        %v4353 = vand.u32 %v4352, 4294901760
        %4354 = vmatpush1.msra.mxu0 %v4353
        %4355 = vmatprep.subr.mxu0 0.0
        %v4356 = vand.u32 %v4188, 4294901760
        %v4357 = vsub.f32 %v4188, %v4356
        %v4358 = vand.u32 %v4357, 4294901760
        %v4359 = vsub.f32 %v4357, %v4358
        %v4360 = vand.u32 %v4359, 4294901760
        %4361 = vmatpush1.msra.mxu0 %v4360
        %4362 = vmatprep.subr.mxu0 0.0
        %v4363 = vand.u32 %v4189, 4294901760
        %v4364 = vsub.f32 %v4189, %v4363
        %v4365 = vand.u32 %v4364, 4294901760
        %v4366 = vsub.f32 %v4364, %v4365
        %v4367 = vand.u32 %v4366, 4294901760
        %4368 = vmatpush1.msra.mxu0 %v4367
        %4369 = vmatprep.subr.mxu0 0.0
        %v4370 = vand.u32 %v4190, 4294901760
        %v4371 = vsub.f32 %v4190, %v4370
        %v4372 = vand.u32 %v4371, 4294901760
        %v4373 = vsub.f32 %v4371, %v4372
        %v4374 = vand.u32 %v4373, 4294901760
        %4375 = vmatpush1.msra.mxu0 %v4374
        %4376 = vmatprep.subr.mxu0 0.0
        %v4377 = vand.u32 %v4191, 4294901760
        %v4378 = vsub.f32 %v4191, %v4377
        %v4379 = vand.u32 %v4378, 4294901760
        %v4380 = vsub.f32 %v4378, %v4379
        %v4381 = vand.u32 %v4380, 4294901760
        %4382 = vmatpush1.msra.mxu0 %v4381
        %4383 = vmatprep.subr.mxu0 0.0
        %v4384 = vand.u32 %v4192, 4294901760
        %v4385 = vsub.f32 %v4192, %v4384
        %v4386 = vand.u32 %v4385, 4294901760
        %v4387 = vsub.f32 %v4385, %v4386
        %v4388 = vand.u32 %v4387, 4294901760
        %4389 = vmatpush1.msra.mxu0 %v4388
        %4390 = vmatprep.subr.mxu0 0.0
        %v4391 = vand.u32 %v4193, 4294901760
        %v4392 = vsub.f32 %v4193, %v4391
        %v4393 = vand.u32 %v4392, 4294901760
        %v4394 = vsub.f32 %v4392, %v4393
        %v4395 = vand.u32 %v4394, 4294901760
        %4396 = vmatpush1.msra.mxu0 %v4395
        %4397 = vmatprep.subr.mxu0 0.0
        %4398 = vmatpush1.msra.mxu0 0.0
        %4399 = vmatprep.subr.mxu0 0.0
        %4400 = vmatpush1.msra.mxu0 0.0
        %4401 = vmatprep.subr.mxu0 0.0
        %4402 = vmatpush1.msra.mxu0 0.0
        %4403 = vmatprep.subr.mxu0 0.0
        %4404 = vmatpush1.msra.mxu0 0.0
        %4405 = vmatprep.subr.mxu0 0.0
        %4406 = vmatpush1.msra.mxu0 0.0
        %4407 = vmatprep.subr.mxu0 0.0
        %4408 = vmatpush1.msra.mxu0 0.0
        %4409 = vmatprep.subr.mxu0 0.0
        %4410 = vmatpush1.msra.mxu0 0.0
        %4411 = vmatprep.subr.mxu0 0.0
        %4412 = vmatpush1.msra.mxu0 0.0
        %4413 = vmatprep.subr.mxu0 0.0
        %4414 = vmatpush1.msra.mxu0 0.0
        %4415 = vmatprep.subr.mxu0 0.0
        %4416 = vmatpush1.msra.mxu0 0.0
        %4417 = vmatprep.subr.mxu0 0.0
        %4418 = vmatpush1.msra.mxu0 0.0
        %4419 = vmatprep.subr.mxu0 0.0
        %4420 = vmatpush1.msra.mxu0 0.0
        %4421 = vmatprep.subr.mxu0 0.0
        %4422 = vmatpush1.msra.mxu0 0.0
        %4423 = vmatprep.subr.mxu0 0.0
        %4424 = vmatpush1.msra.mxu0 0.0
        %4425 = vmatprep.subr.mxu0 0.0
        %4426 = vmatpush1.msra.mxu0 0.0
        %4427 = vmatprep.subr.mxu0 0.0
        %4428 = vmatpush1.msra.mxu0 0.0
        %4429 = vmatprep.mubr.f32.mxu0 0.0
        %v4430 = vand.u32 %v4176, 4294901760
        %4431 = vmatmul.mubr.f32.gmra.mrb[0].mxu0 %v4430
        %v4432 = vpop.f32.mrb[0].mxu0
        %v4433 = vadd.f32 %v4282, %v4432
        %v4434 = vpop.f32.mrb[0].mxu0
        %4435 = vdwg.mxu0
        %4436 = vmatprep.subr.mxu0 0.0
        %v4437 = vand.u32 %v4178, 4294901760
        %v4438 = vsub.f32 %v4178, %v4437
        %4439 = vmatpush1.msra.mxu0 %v4438
        %4440 = vmatprep.subr.mxu0 0.0
        %v4441 = vand.u32 %v4179, 4294901760
        %v4442 = vsub.f32 %v4179, %v4441
        %4443 = vmatpush1.msra.mxu0 %v4442
        %4444 = vmatprep.subr.mxu0 0.0
        %v4445 = vand.u32 %v4180, 4294901760
        %v4446 = vsub.f32 %v4180, %v4445
        %4447 = vmatpush1.msra.mxu0 %v4446
        %4448 = vmatprep.subr.mxu0 0.0
        %v4449 = vand.u32 %v4181, 4294901760
        %v4450 = vsub.f32 %v4181, %v4449
        %4451 = vmatpush1.msra.mxu0 %v4450
        %4452 = vmatprep.subr.mxu0 0.0
        %v4453 = vand.u32 %v4182, 4294901760
        %v4454 = vsub.f32 %v4182, %v4453
        %4455 = vmatpush1.msra.mxu0 %v4454
        %4456 = vmatprep.subr.mxu0 0.0
        %v4457 = vand.u32 %v4183, 4294901760
        %v4458 = vsub.f32 %v4183, %v4457
        %4459 = vmatpush1.msra.mxu0 %v4458
        %4460 = vmatprep.subr.mxu0 0.0
        %v4461 = vand.u32 %v4184, 4294901760
        %v4462 = vsub.f32 %v4184, %v4461
        %4463 = vmatpush1.msra.mxu0 %v4462
        %4464 = vmatprep.subr.mxu0 0.0
        %v4465 = vand.u32 %v4185, 4294901760
        %v4466 = vsub.f32 %v4185, %v4465
        %4467 = vmatpush1.msra.mxu0 %v4466
        %4468 = vmatprep.subr.mxu0 0.0
        %v4469 = vand.u32 %v4186, 4294901760
        %v4470 = vsub.f32 %v4186, %v4469
        %4471 = vmatpush1.msra.mxu0 %v4470
        %4472 = vmatprep.subr.mxu0 0.0
        %v4473 = vand.u32 %v4187, 4294901760
        %v4474 = vsub.f32 %v4187, %v4473
        %4475 = vmatpush1.msra.mxu0 %v4474
        %4476 = vmatprep.subr.mxu0 0.0
        %v4477 = vand.u32 %v4188, 4294901760
        %v4478 = vsub.f32 %v4188, %v4477
        %4479 = vmatpush1.msra.mxu0 %v4478
        %4480 = vmatprep.subr.mxu0 0.0
        %v4481 = vand.u32 %v4189, 4294901760
        %v4482 = vsub.f32 %v4189, %v4481
        %4483 = vmatpush1.msra.mxu0 %v4482
        %4484 = vmatprep.subr.mxu0 0.0
        %v4485 = vand.u32 %v4190, 4294901760
        %v4486 = vsub.f32 %v4190, %v4485
        %4487 = vmatpush1.msra.mxu0 %v4486
        %4488 = vmatprep.subr.mxu0 0.0
        %v4489 = vand.u32 %v4191, 4294901760
        %v4490 = vsub.f32 %v4191, %v4489
        %4491 = vmatpush1.msra.mxu0 %v4490
        %4492 = vmatprep.subr.mxu0 0.0
        %v4493 = vand.u32 %v4192, 4294901760
        %v4494 = vsub.f32 %v4192, %v4493
        %4495 = vmatpush1.msra.mxu0 %v4494
        %4496 = vmatprep.subr.mxu0 0.0
        %v4497 = vand.u32 %v4193, 4294901760
        %v4498 = vsub.f32 %v4193, %v4497
        %4499 = vmatpush1.msra.mxu0 %v4498
        %4500 = vmatprep.subr.mxu0 0.0
        %4501 = vmatpush1.msra.mxu0 0.0
        %4502 = vmatprep.subr.mxu0 0.0
        %4503 = vmatpush1.msra.mxu0 0.0
        %4504 = vmatprep.subr.mxu0 0.0
        %4505 = vmatpush1.msra.mxu0 0.0
        %4506 = vmatprep.subr.mxu0 0.0
        %4507 = vmatpush1.msra.mxu0 0.0
        %4508 = vmatprep.subr.mxu0 0.0
        %4509 = vmatpush1.msra.mxu0 0.0
        %4510 = vmatprep.subr.mxu0 0.0
        %4511 = vmatpush1.msra.mxu0 0.0
        %4512 = vmatprep.subr.mxu0 0.0
        %4513 = vmatpush1.msra.mxu0 0.0
        %4514 = vmatprep.subr.mxu0 0.0
        %4515 = vmatpush1.msra.mxu0 0.0
        %4516 = vmatprep.subr.mxu0 0.0
        %4517 = vmatpush1.msra.mxu0 0.0
        %4518 = vmatprep.subr.mxu0 0.0
        %4519 = vmatpush1.msra.mxu0 0.0
        %4520 = vmatprep.subr.mxu0 0.0
        %4521 = vmatpush1.msra.mxu0 0.0
        %4522 = vmatprep.subr.mxu0 0.0
        %4523 = vmatpush1.msra.mxu0 0.0
        %4524 = vmatprep.subr.mxu0 0.0
        %4525 = vmatpush1.msra.mxu0 0.0
        %4526 = vmatprep.subr.mxu0 0.0
        %4527 = vmatpush1.msra.mxu0 0.0
        %4528 = vmatprep.subr.mxu0 0.0
        %4529 = vmatpush1.msra.mxu0 0.0
        %4530 = vmatprep.subr.mxu0 0.0
        %4531 = vmatpush1.msra.mxu0 0.0
        %4532 = vmatprep.mubr.f32.mxu0 0.0
        %v4533 = vand.u32 %v4176, 4294901760
        %v4534 = vsub.f32 %v4176, %v4533
        %4535 = vmatmul.mubr.f32.gmra.mrb[0].mxu0 %v4534
        %v4536 = vpop.f32.mrb[0].mxu0
        %v4537 = vadd.f32 %v4433, %v4536
        %v4538 = vpop.f32.mrb[0].mxu0
        %4539 = vdwg.mxu0
        %4540 = vmatprep.subr.mxu0 0.0
        %v4541 = vand.u32 %v4178, 4294901760
        %4542 = vmatpush1.msra.mxu0 %v4541
        %4543 = vmatprep.subr.mxu0 0.0
        %v4544 = vand.u32 %v4179, 4294901760
        %4545 = vmatpush1.msra.mxu0 %v4544
        %4546 = vmatprep.subr.mxu0 0.0
        %v4547 = vand.u32 %v4180, 4294901760
        %4548 = vmatpush1.msra.mxu0 %v4547
        %4549 = vmatprep.subr.mxu0 0.0
        %v4550 = vand.u32 %v4181, 4294901760
        %4551 = vmatpush1.msra.mxu0 %v4550
        %4552 = vmatprep.subr.mxu0 0.0
        %v4553 = vand.u32 %v4182, 4294901760
        %4554 = vmatpush1.msra.mxu0 %v4553
        %4555 = vmatprep.subr.mxu0 0.0
        %v4556 = vand.u32 %v4183, 4294901760
        %4557 = vmatpush1.msra.mxu0 %v4556
        %4558 = vmatprep.subr.mxu0 0.0
        %v4559 = vand.u32 %v4184, 4294901760
        %4560 = vmatpush1.msra.mxu0 %v4559
        %4561 = vmatprep.subr.mxu0 0.0
        %v4562 = vand.u32 %v4185, 4294901760
        %4563 = vmatpush1.msra.mxu0 %v4562
        %4564 = vmatprep.subr.mxu0 0.0
        %v4565 = vand.u32 %v4186, 4294901760
        %4566 = vmatpush1.msra.mxu0 %v4565
        %4567 = vmatprep.subr.mxu0 0.0
        %v4568 = vand.u32 %v4187, 4294901760
        %4569 = vmatpush1.msra.mxu0 %v4568
        %4570 = vmatprep.subr.mxu0 0.0
        %v4571 = vand.u32 %v4188, 4294901760
        %4572 = vmatpush1.msra.mxu0 %v4571
        %4573 = vmatprep.subr.mxu0 0.0
        %v4574 = vand.u32 %v4189, 4294901760
        %4575 = vmatpush1.msra.mxu0 %v4574
        %4576 = vmatprep.subr.mxu0 0.0
        %v4577 = vand.u32 %v4190, 4294901760
        %4578 = vmatpush1.msra.mxu0 %v4577
        %4579 = vmatprep.subr.mxu0 0.0
        %v4580 = vand.u32 %v4191, 4294901760
        %4581 = vmatpush1.msra.mxu0 %v4580
        %4582 = vmatprep.subr.mxu0 0.0
        %v4583 = vand.u32 %v4192, 4294901760
        %4584 = vmatpush1.msra.mxu0 %v4583
        %4585 = vmatprep.subr.mxu0 0.0
        %v4586 = vand.u32 %v4193, 4294901760
        %4587 = vmatpush1.msra.mxu0 %v4586
        %4588 = vmatprep.subr.mxu0 0.0
        %4589 = vmatpush1.msra.mxu0 0.0
        %4590 = vmatprep.subr.mxu0 0.0
        %4591 = vmatpush1.msra.mxu0 0.0
        %4592 = vmatprep.subr.mxu0 0.0
        %4593 = vmatpush1.msra.mxu0 0.0
        %4594 = vmatprep.subr.mxu0 0.0
        %4595 = vmatpush1.msra.mxu0 0.0
        %4596 = vmatprep.subr.mxu0 0.0
        %4597 = vmatpush1.msra.mxu0 0.0
        %4598 = vmatprep.subr.mxu0 0.0
        %4599 = vmatpush1.msra.mxu0 0.0
        %4600 = vmatprep.subr.mxu0 0.0
        %4601 = vmatpush1.msra.mxu0 0.0
        %4602 = vmatprep.subr.mxu0 0.0
        %4603 = vmatpush1.msra.mxu0 0.0
        %4604 = vmatprep.subr.mxu0 0.0
        %4605 = vmatpush1.msra.mxu0 0.0
        %4606 = vmatprep.subr.mxu0 0.0
        %4607 = vmatpush1.msra.mxu0 0.0
        %4608 = vmatprep.subr.mxu0 0.0
        %4609 = vmatpush1.msra.mxu0 0.0
        %4610 = vmatprep.subr.mxu0 0.0
        %4611 = vmatpush1.msra.mxu0 0.0
        %4612 = vmatprep.subr.mxu0 0.0
        %4613 = vmatpush1.msra.mxu0 0.0
        %4614 = vmatprep.subr.mxu0 0.0
        %4615 = vmatpush1.msra.mxu0 0.0
        %4616 = vmatprep.subr.mxu0 0.0
        %4617 = vmatpush1.msra.mxu0 0.0
        %4618 = vmatprep.subr.mxu0 0.0
        %4619 = vmatpush1.msra.mxu0 0.0
        %4620 = vmatprep.mubr.f32.mxu0 0.0
        %v4621 = vand.u32 %v4176, 4294901760
        %v4622 = vsub.f32 %v4176, %v4621
        %v4623 = vand.u32 %v4622, 4294901760
        %4624 = vmatmul.mubr.f32.gmra.mrb[0].mxu0 %v4623
        %v4625 = vpop.f32.mrb[0].mxu0
        %v4626 = vadd.f32 %v4537, %v4625
        %v4627 = vpop.f32.mrb[0].mxu0
        %4628 = vdwg.mxu0
        %4629 = vmatprep.subr.mxu0 0.0
        %v4630 = vand.u32 %v4178, 4294901760
        %v4631 = vsub.f32 %v4178, %v4630
        %v4632 = vand.u32 %v4631, 4294901760
        %4633 = vmatpush1.msra.mxu0 %v4632
        %4634 = vmatprep.subr.mxu0 0.0
        %v4635 = vand.u32 %v4179, 4294901760
        %v4636 = vsub.f32 %v4179, %v4635
        %v4637 = vand.u32 %v4636, 4294901760
        %4638 = vmatpush1.msra.mxu0 %v4637
        %4639 = vmatprep.subr.mxu0 0.0
        %v4640 = vand.u32 %v4180, 4294901760
        %v4641 = vsub.f32 %v4180, %v4640
        %v4642 = vand.u32 %v4641, 4294901760
        %4643 = vmatpush1.msra.mxu0 %v4642
        %4644 = vmatprep.subr.mxu0 0.0
        %v4645 = vand.u32 %v4181, 4294901760
        %v4646 = vsub.f32 %v4181, %v4645
        %v4647 = vand.u32 %v4646, 4294901760
        %4648 = vmatpush1.msra.mxu0 %v4647
        %4649 = vmatprep.subr.mxu0 0.0
        %v4650 = vand.u32 %v4182, 4294901760
        %v4651 = vsub.f32 %v4182, %v4650
        %v4652 = vand.u32 %v4651, 4294901760
        %4653 = vmatpush1.msra.mxu0 %v4652
        %4654 = vmatprep.subr.mxu0 0.0
        %v4655 = vand.u32 %v4183, 4294901760
        %v4656 = vsub.f32 %v4183, %v4655
        %v4657 = vand.u32 %v4656, 4294901760
        %4658 = vmatpush1.msra.mxu0 %v4657
        %4659 = vmatprep.subr.mxu0 0.0
        %v4660 = vand.u32 %v4184, 4294901760
        %v4661 = vsub.f32 %v4184, %v4660
        %v4662 = vand.u32 %v4661, 4294901760
        %4663 = vmatpush1.msra.mxu0 %v4662
        %4664 = vmatprep.subr.mxu0 0.0
        %v4665 = vand.u32 %v4185, 4294901760
        %v4666 = vsub.f32 %v4185, %v4665
        %v4667 = vand.u32 %v4666, 4294901760
        %4668 = vmatpush1.msra.mxu0 %v4667
        %4669 = vmatprep.subr.mxu0 0.0
        %v4670 = vand.u32 %v4186, 4294901760
        %v4671 = vsub.f32 %v4186, %v4670
        %v4672 = vand.u32 %v4671, 4294901760
        %4673 = vmatpush1.msra.mxu0 %v4672
        %4674 = vmatprep.subr.mxu0 0.0
        %v4675 = vand.u32 %v4187, 4294901760
        %v4676 = vsub.f32 %v4187, %v4675
        %v4677 = vand.u32 %v4676, 4294901760
        %4678 = vmatpush1.msra.mxu0 %v4677
        %4679 = vmatprep.subr.mxu0 0.0
        %v4680 = vand.u32 %v4188, 4294901760
        %v4681 = vsub.f32 %v4188, %v4680
        %v4682 = vand.u32 %v4681, 4294901760
        %4683 = vmatpush1.msra.mxu0 %v4682
        %4684 = vmatprep.subr.mxu0 0.0
        %v4685 = vand.u32 %v4189, 4294901760
        %v4686 = vsub.f32 %v4189, %v4685
        %v4687 = vand.u32 %v4686, 4294901760
        %4688 = vmatpush1.msra.mxu0 %v4687
        %4689 = vmatprep.subr.mxu0 0.0
        %v4690 = vand.u32 %v4190, 4294901760
        %v4691 = vsub.f32 %v4190, %v4690
        %v4692 = vand.u32 %v4691, 4294901760
        %4693 = vmatpush1.msra.mxu0 %v4692
        %4694 = vmatprep.subr.mxu0 0.0
        %v4695 = vand.u32 %v4191, 4294901760
        %v4696 = vsub.f32 %v4191, %v4695
        %v4697 = vand.u32 %v4696, 4294901760
        %4698 = vmatpush1.msra.mxu0 %v4697
        %4699 = vmatprep.subr.mxu0 0.0
        %v4700 = vand.u32 %v4192, 4294901760
        %v4701 = vsub.f32 %v4192, %v4700
        %v4702 = vand.u32 %v4701, 4294901760
        %4703 = vmatpush1.msra.mxu0 %v4702
        %4704 = vmatprep.subr.mxu0 0.0
        %v4705 = vand.u32 %v4193, 4294901760
        %v4706 = vsub.f32 %v4193, %v4705
        %v4707 = vand.u32 %v4706, 4294901760
        %4708 = vmatpush1.msra.mxu0 %v4707
        %4709 = vmatprep.subr.mxu0 0.0
        %4710 = vmatpush1.msra.mxu0 0.0
        %4711 = vmatprep.subr.mxu0 0.0
        %4712 = vmatpush1.msra.mxu0 0.0
        %4713 = vmatprep.subr.mxu0 0.0
        %4714 = vmatpush1.msra.mxu0 0.0
        %4715 = vmatprep.subr.mxu0 0.0
        %4716 = vmatpush1.msra.mxu0 0.0
        %4717 = vmatprep.subr.mxu0 0.0
        %4718 = vmatpush1.msra.mxu0 0.0
        %4719 = vmatprep.subr.mxu0 0.0
        %4720 = vmatpush1.msra.mxu0 0.0
        %4721 = vmatprep.subr.mxu0 0.0
        %4722 = vmatpush1.msra.mxu0 0.0
        %4723 = vmatprep.subr.mxu0 0.0
        %4724 = vmatpush1.msra.mxu0 0.0
        %4725 = vmatprep.subr.mxu0 0.0
        %4726 = vmatpush1.msra.mxu0 0.0
        %4727 = vmatprep.subr.mxu0 0.0
        %4728 = vmatpush1.msra.mxu0 0.0
        %4729 = vmatprep.subr.mxu0 0.0
        %4730 = vmatpush1.msra.mxu0 0.0
        %4731 = vmatprep.subr.mxu0 0.0
        %4732 = vmatpush1.msra.mxu0 0.0
        %4733 = vmatprep.subr.mxu0 0.0
        %4734 = vmatpush1.msra.mxu0 0.0
        %4735 = vmatprep.subr.mxu0 0.0
        %4736 = vmatpush1.msra.mxu0 0.0
        %4737 = vmatprep.subr.mxu0 0.0
        %4738 = vmatpush1.msra.mxu0 0.0
        %4739 = vmatprep.subr.mxu0 0.0
        %4740 = vmatpush1.msra.mxu0 0.0
        %4741 = vmatprep.mubr.f32.mxu0 0.0
        %v4742 = vand.u32 %v4176, 4294901760
        %4743 = vmatmul.mubr.f32.gmra.mrb[0].mxu0 %v4742
        %v4744 = vpop.f32.mrb[0].mxu0
        %v4745 = vadd.f32 %v4626, %v4744
        %v4746 = vpop.f32.mrb[0].mxu0
        %4747 = vdwg.mxu0
        %4748 = vmatprep.subr.mxu0 0.0
        %v4749 = vand.u32 %v4178, 4294901760
        %4750 = vmatpush1.msra.mxu0 %v4749
        %4751 = vmatprep.subr.mxu0 0.0
        %v4752 = vand.u32 %v4179, 4294901760
        %4753 = vmatpush1.msra.mxu0 %v4752
        %4754 = vmatprep.subr.mxu0 0.0
        %v4755 = vand.u32 %v4180, 4294901760
        %4756 = vmatpush1.msra.mxu0 %v4755
        %4757 = vmatprep.subr.mxu0 0.0
        %v4758 = vand.u32 %v4181, 4294901760
        %4759 = vmatpush1.msra.mxu0 %v4758
        %4760 = vmatprep.subr.mxu0 0.0
        %v4761 = vand.u32 %v4182, 4294901760
        %4762 = vmatpush1.msra.mxu0 %v4761
        %4763 = vmatprep.subr.mxu0 0.0
        %v4764 = vand.u32 %v4183, 4294901760
        %4765 = vmatpush1.msra.mxu0 %v4764
        %4766 = vmatprep.subr.mxu0 0.0
        %v4767 = vand.u32 %v4184, 4294901760
        %4768 = vmatpush1.msra.mxu0 %v4767
        %4769 = vmatprep.subr.mxu0 0.0
        %v4770 = vand.u32 %v4185, 4294901760
        %4771 = vmatpush1.msra.mxu0 %v4770
        %4772 = vmatprep.subr.mxu0 0.0
        %v4773 = vand.u32 %v4186, 4294901760
        %4774 = vmatpush1.msra.mxu0 %v4773
        %4775 = vmatprep.subr.mxu0 0.0
        %v4776 = vand.u32 %v4187, 4294901760
        %4777 = vmatpush1.msra.mxu0 %v4776
        %4778 = vmatprep.subr.mxu0 0.0
        %v4779 = vand.u32 %v4188, 4294901760
        %4780 = vmatpush1.msra.mxu0 %v4779
        %4781 = vmatprep.subr.mxu0 0.0
        %v4782 = vand.u32 %v4189, 4294901760
        %4783 = vmatpush1.msra.mxu0 %v4782
        %4784 = vmatprep.subr.mxu0 0.0
        %v4785 = vand.u32 %v4190, 4294901760
        %4786 = vmatpush1.msra.mxu0 %v4785
        %4787 = vmatprep.subr.mxu0 0.0
        %v4788 = vand.u32 %v4191, 4294901760
        %4789 = vmatpush1.msra.mxu0 %v4788
        %4790 = vmatprep.subr.mxu0 0.0
        %v4791 = vand.u32 %v4192, 4294901760
        %4792 = vmatpush1.msra.mxu0 %v4791
        %4793 = vmatprep.subr.mxu0 0.0
        %v4794 = vand.u32 %v4193, 4294901760
        %4795 = vmatpush1.msra.mxu0 %v4794
        %4796 = vmatprep.subr.mxu0 0.0
        %4797 = vmatpush1.msra.mxu0 0.0
        %4798 = vmatprep.subr.mxu0 0.0
        %4799 = vmatpush1.msra.mxu0 0.0
        %4800 = vmatprep.subr.mxu0 0.0
        %4801 = vmatpush1.msra.mxu0 0.0
        %4802 = vmatprep.subr.mxu0 0.0
        %4803 = vmatpush1.msra.mxu0 0.0
        %4804 = vmatprep.subr.mxu0 0.0
        %4805 = vmatpush1.msra.mxu0 0.0
        %4806 = vmatprep.subr.mxu0 0.0
        %4807 = vmatpush1.msra.mxu0 0.0
        %4808 = vmatprep.subr.mxu0 0.0
        %4809 = vmatpush1.msra.mxu0 0.0
        %4810 = vmatprep.subr.mxu0 0.0
        %4811 = vmatpush1.msra.mxu0 0.0
        %4812 = vmatprep.subr.mxu0 0.0
        %4813 = vmatpush1.msra.mxu0 0.0
        %4814 = vmatprep.subr.mxu0 0.0
        %4815 = vmatpush1.msra.mxu0 0.0
        %4816 = vmatprep.subr.mxu0 0.0
        %4817 = vmatpush1.msra.mxu0 0.0
        %4818 = vmatprep.subr.mxu0 0.0
        %4819 = vmatpush1.msra.mxu0 0.0
        %4820 = vmatprep.subr.mxu0 0.0
        %4821 = vmatpush1.msra.mxu0 0.0
        %4822 = vmatprep.subr.mxu0 0.0
        %4823 = vmatpush1.msra.mxu0 0.0
        %4824 = vmatprep.subr.mxu0 0.0
        %4825 = vmatpush1.msra.mxu0 0.0
        %4826 = vmatprep.subr.mxu0 0.0
        %4827 = vmatpush1.msra.mxu0 0.0
        %4828 = vmatprep.mubr.f32.mxu0 0.0
        %v4829 = vand.u32 %v4176, 4294901760
        %4830 = vmatmul.mubr.f32.gmra.mrb[0].mxu0 %v4829
        %v4831 = vpop.f32.mrb[0].mxu0
        %v4832 = vadd.f32 %v4745, %v4831
        %v4833 = vpop.f32.mrb[0].mxu0
        %4834 = vdwg.mxu0
        %s4835 = scalar_lea.vmem %s202, 48 [#allocation7]
        %4836 = vst [vmem:[%s4835] sm:$0xff] %v4832
        %s4837 = scalar_lea.vmem %s168, 56 [#allocation2]
        %v4838 = vld [vmem:[%s4837] sm:$0xff]
        %s4839 = scalar_lea.vmem %s177, 896 [#allocation5]
        %v4840 = vld [vmem:[%s4839] sm:$0xff]
        %v4841 = vld [vmem:[%s4839 + $0x8] sm:$0xff]
        %v4842 = vld [vmem:[%s4839 + $0x10] sm:$0xff]
        %v4843 = vld [vmem:[%s4839 + $0x18] sm:$0xff]
        %v4844 = vld [vmem:[%s4839 + $0x20] sm:$0xff]
        %v4845 = vld [vmem:[%s4839 + $0x28] sm:$0xff]
        %v4846 = vld [vmem:[%s4839 + $0x30] sm:$0xff]
        %v4847 = vld [vmem:[%s4839 + $0x38] sm:$0xff]
        %v4848 = vld [vmem:[%s4839 + $0x40] sm:$0xff]
        %v4849 = vld [vmem:[%s4839 + $0x48] sm:$0xff]
        %v4850 = vld [vmem:[%s4839 + $0x50] sm:$0xff]
        %v4851 = vld [vmem:[%s4839 + $0x58] sm:$0xff]
        %v4852 = vld [vmem:[%s4839 + $0x60] sm:$0xff]
        %v4853 = vld [vmem:[%s4839 + $0x68] sm:$0xff]
        %v4854 = vld [vmem:[%s4839 + $0x70] sm:$0xff]
        %v4855 = vld [vmem:[%s4839 + $0x78] sm:$0xff]
        %4856 = vmatprep.subr.mxu0 0.0
        %v4857 = vand.u32 %v4840, 4294901760
        %4858 = vmatpush1.msra.mxu0 %v4857
        %4859 = vmatprep.subr.mxu0 0.0
        %v4860 = vand.u32 %v4841, 4294901760
        %4861 = vmatpush1.msra.mxu0 %v4860
        %4862 = vmatprep.subr.mxu0 0.0
        %v4863 = vand.u32 %v4842, 4294901760
        %4864 = vmatpush1.msra.mxu0 %v4863
        %4865 = vmatprep.subr.mxu0 0.0
        %v4866 = vand.u32 %v4843, 4294901760
        %4867 = vmatpush1.msra.mxu0 %v4866
        %4868 = vmatprep.subr.mxu0 0.0
        %v4869 = vand.u32 %v4844, 4294901760
        %4870 = vmatpush1.msra.mxu0 %v4869
        %4871 = vmatprep.subr.mxu0 0.0
        %v4872 = vand.u32 %v4845, 4294901760
        %4873 = vmatpush1.msra.mxu0 %v4872
        %4874 = vmatprep.subr.mxu0 0.0
        %v4875 = vand.u32 %v4846, 4294901760
        %4876 = vmatpush1.msra.mxu0 %v4875
        %4877 = vmatprep.subr.mxu0 0.0
        %v4878 = vand.u32 %v4847, 4294901760
        %4879 = vmatpush1.msra.mxu0 %v4878
        %4880 = vmatprep.subr.mxu0 0.0
        %v4881 = vand.u32 %v4848, 4294901760
        %4882 = vmatpush1.msra.mxu0 %v4881
        %4883 = vmatprep.subr.mxu0 0.0
        %v4884 = vand.u32 %v4849, 4294901760
        %4885 = vmatpush1.msra.mxu0 %v4884
        %4886 = vmatprep.subr.mxu0 0.0
        %v4887 = vand.u32 %v4850, 4294901760
        %4888 = vmatpush1.msra.mxu0 %v4887
        %4889 = vmatprep.subr.mxu0 0.0
        %v4890 = vand.u32 %v4851, 4294901760
        %4891 = vmatpush1.msra.mxu0 %v4890
        %4892 = vmatprep.subr.mxu0 0.0
        %v4893 = vand.u32 %v4852, 4294901760
        %4894 = vmatpush1.msra.mxu0 %v4893
        %4895 = vmatprep.subr.mxu0 0.0
        %v4896 = vand.u32 %v4853, 4294901760
        %4897 = vmatpush1.msra.mxu0 %v4896
        %4898 = vmatprep.subr.mxu0 0.0
        %v4899 = vand.u32 %v4854, 4294901760
        %4900 = vmatpush1.msra.mxu0 %v4899
        %4901 = vmatprep.subr.mxu0 0.0
        %v4902 = vand.u32 %v4855, 4294901760
        %4903 = vmatpush1.msra.mxu0 %v4902
        %4904 = vmatprep.subr.mxu0 0.0
        %4905 = vmatpush1.msra.mxu0 0.0
        %4906 = vmatprep.subr.mxu0 0.0
        %4907 = vmatpush1.msra.mxu0 0.0
        %4908 = vmatprep.subr.mxu0 0.0
        %4909 = vmatpush1.msra.mxu0 0.0
        %4910 = vmatprep.subr.mxu0 0.0
        %4911 = vmatpush1.msra.mxu0 0.0
        %4912 = vmatprep.subr.mxu0 0.0
        %4913 = vmatpush1.msra.mxu0 0.0
        %4914 = vmatprep.subr.mxu0 0.0
        %4915 = vmatpush1.msra.mxu0 0.0
        %4916 = vmatprep.subr.mxu0 0.0
        %4917 = vmatpush1.msra.mxu0 0.0
        %4918 = vmatprep.subr.mxu0 0.0
        %4919 = vmatpush1.msra.mxu0 0.0
        %4920 = vmatprep.subr.mxu0 0.0
        %4921 = vmatpush1.msra.mxu0 0.0
        %4922 = vmatprep.subr.mxu0 0.0
        %4923 = vmatpush1.msra.mxu0 0.0
        %4924 = vmatprep.subr.mxu0 0.0
        %4925 = vmatpush1.msra.mxu0 0.0
        %4926 = vmatprep.subr.mxu0 0.0
        %4927 = vmatpush1.msra.mxu0 0.0
        %4928 = vmatprep.subr.mxu0 0.0
        %4929 = vmatpush1.msra.mxu0 0.0
        %4930 = vmatprep.subr.mxu0 0.0
        %4931 = vmatpush1.msra.mxu0 0.0
        %4932 = vmatprep.subr.mxu0 0.0
        %4933 = vmatpush1.msra.mxu0 0.0
        %4934 = vmatprep.subr.mxu0 0.0
        %4935 = vmatpush1.msra.mxu0 0.0
        %4936 = vmatprep.mubr.f32.mxu0 0.0
        %v4937 = vand.u32 %v4838, 4294901760
        %v4938 = vsub.f32 %v4838, %v4937
        %v4939 = vand.u32 %v4938, 4294901760
        %v4940 = vsub.f32 %v4938, %v4939
        %v4941 = vand.u32 %v4940, 4294901760
        %4942 = vmatmul.mubr.f32.gmra.mrb[0].mxu0 %v4941
        %v4943 = vpop.f32.mrb[0].mxu0
        %v4944 = vadd.f32 0.0, %v4943
        %v4945 = vpop.f32.mrb[0].mxu0
        %4946 = vdwg.mxu0
        %4947 = vmatprep.subr.mxu0 0.0
        %v4948 = vand.u32 %v4840, 4294901760
        %v4949 = vsub.f32 %v4840, %v4948
        %v4950 = vand.u32 %v4949, 4294901760
        %v4951 = vsub.f32 %v4949, %v4950
        %v4952 = vand.u32 %v4951, 4294901760
        %4953 = vmatpush1.msra.mxu0 %v4952
        %4954 = vmatprep.subr.mxu0 0.0
        %v4955 = vand.u32 %v4841, 4294901760
        %v4956 = vsub.f32 %v4841, %v4955
        %v4957 = vand.u32 %v4956, 4294901760
        %v4958 = vsub.f32 %v4956, %v4957
        %v4959 = vand.u32 %v4958, 4294901760
        %4960 = vmatpush1.msra.mxu0 %v4959
        %4961 = vmatprep.subr.mxu0 0.0
        %v4962 = vand.u32 %v4842, 4294901760
        %v4963 = vsub.f32 %v4842, %v4962
        %v4964 = vand.u32 %v4963, 4294901760
        %v4965 = vsub.f32 %v4963, %v4964
        %v4966 = vand.u32 %v4965, 4294901760
        %4967 = vmatpush1.msra.mxu0 %v4966
        %4968 = vmatprep.subr.mxu0 0.0
        %v4969 = vand.u32 %v4843, 4294901760
        %v4970 = vsub.f32 %v4843, %v4969
        %v4971 = vand.u32 %v4970, 4294901760
        %v4972 = vsub.f32 %v4970, %v4971
        %v4973 = vand.u32 %v4972, 4294901760
        %4974 = vmatpush1.msra.mxu0 %v4973
        %4975 = vmatprep.subr.mxu0 0.0
        %v4976 = vand.u32 %v4844, 4294901760
        %v4977 = vsub.f32 %v4844, %v4976
        %v4978 = vand.u32 %v4977, 4294901760
        %v4979 = vsub.f32 %v4977, %v4978
        %v4980 = vand.u32 %v4979, 4294901760
        %4981 = vmatpush1.msra.mxu0 %v4980
        %4982 = vmatprep.subr.mxu0 0.0
        %v4983 = vand.u32 %v4845, 4294901760
        %v4984 = vsub.f32 %v4845, %v4983
        %v4985 = vand.u32 %v4984, 4294901760
        %v4986 = vsub.f32 %v4984, %v4985
        %v4987 = vand.u32 %v4986, 4294901760
        %4988 = vmatpush1.msra.mxu0 %v4987
        %4989 = vmatprep.subr.mxu0 0.0
        %v4990 = vand.u32 %v4846, 4294901760
        %v4991 = vsub.f32 %v4846, %v4990
        %v4992 = vand.u32 %v4991, 4294901760
        %v4993 = vsub.f32 %v4991, %v4992
        %v4994 = vand.u32 %v4993, 4294901760
        %4995 = vmatpush1.msra.mxu0 %v4994
        %4996 = vmatprep.subr.mxu0 0.0
        %v4997 = vand.u32 %v4847, 4294901760
        %v4998 = vsub.f32 %v4847, %v4997
        %v4999 = vand.u32 %v4998, 4294901760
        %v5000 = vsub.f32 %v4998, %v4999
        %v5001 = vand.u32 %v5000, 4294901760
        %5002 = vmatpush1.msra.mxu0 %v5001
        %5003 = vmatprep.subr.mxu0 0.0
        %v5004 = vand.u32 %v4848, 4294901760
        %v5005 = vsub.f32 %v4848, %v5004
        %v5006 = vand.u32 %v5005, 4294901760
        %v5007 = vsub.f32 %v5005, %v5006
        %v5008 = vand.u32 %v5007, 4294901760
        %5009 = vmatpush1.msra.mxu0 %v5008
        %5010 = vmatprep.subr.mxu0 0.0
        %v5011 = vand.u32 %v4849, 4294901760
        %v5012 = vsub.f32 %v4849, %v5011
        %v5013 = vand.u32 %v5012, 4294901760
        %v5014 = vsub.f32 %v5012, %v5013
        %v5015 = vand.u32 %v5014, 4294901760
        %5016 = vmatpush1.msra.mxu0 %v5015
        %5017 = vmatprep.subr.mxu0 0.0
        %v5018 = vand.u32 %v4850, 4294901760
        %v5019 = vsub.f32 %v4850, %v5018
        %v5020 = vand.u32 %v5019, 4294901760
        %v5021 = vsub.f32 %v5019, %v5020
        %v5022 = vand.u32 %v5021, 4294901760
        %5023 = vmatpush1.msra.mxu0 %v5022
        %5024 = vmatprep.subr.mxu0 0.0
        %v5025 = vand.u32 %v4851, 4294901760
        %v5026 = vsub.f32 %v4851, %v5025
        %v5027 = vand.u32 %v5026, 4294901760
        %v5028 = vsub.f32 %v5026, %v5027
        %v5029 = vand.u32 %v5028, 4294901760
        %5030 = vmatpush1.msra.mxu0 %v5029
        %5031 = vmatprep.subr.mxu0 0.0
        %v5032 = vand.u32 %v4852, 4294901760
        %v5033 = vsub.f32 %v4852, %v5032
        %v5034 = vand.u32 %v5033, 4294901760
        %v5035 = vsub.f32 %v5033, %v5034
        %v5036 = vand.u32 %v5035, 4294901760
        %5037 = vmatpush1.msra.mxu0 %v5036
        %5038 = vmatprep.subr.mxu0 0.0
        %v5039 = vand.u32 %v4853, 4294901760
        %v5040 = vsub.f32 %v4853, %v5039
        %v5041 = vand.u32 %v5040, 4294901760
        %v5042 = vsub.f32 %v5040, %v5041
        %v5043 = vand.u32 %v5042, 4294901760
        %5044 = vmatpush1.msra.mxu0 %v5043
        %5045 = vmatprep.subr.mxu0 0.0
        %v5046 = vand.u32 %v4854, 4294901760
        %v5047 = vsub.f32 %v4854, %v5046
        %v5048 = vand.u32 %v5047, 4294901760
        %v5049 = vsub.f32 %v5047, %v5048
        %v5050 = vand.u32 %v5049, 4294901760
        %5051 = vmatpush1.msra.mxu0 %v5050
        %5052 = vmatprep.subr.mxu0 0.0
        %v5053 = vand.u32 %v4855, 4294901760
        %v5054 = vsub.f32 %v4855, %v5053
        %v5055 = vand.u32 %v5054, 4294901760
        %v5056 = vsub.f32 %v5054, %v5055
        %v5057 = vand.u32 %v5056, 4294901760
        %5058 = vmatpush1.msra.mxu0 %v5057
        %5059 = vmatprep.subr.mxu0 0.0
        %5060 = vmatpush1.msra.mxu0 0.0
        %5061 = vmatprep.subr.mxu0 0.0
        %5062 = vmatpush1.msra.mxu0 0.0
        %5063 = vmatprep.subr.mxu0 0.0
        %5064 = vmatpush1.msra.mxu0 0.0
        %5065 = vmatprep.subr.mxu0 0.0
        %5066 = vmatpush1.msra.mxu0 0.0
        %5067 = vmatprep.subr.mxu0 0.0
        %5068 = vmatpush1.msra.mxu0 0.0
        %5069 = vmatprep.subr.mxu0 0.0
        %5070 = vmatpush1.msra.mxu0 0.0
        %5071 = vmatprep.subr.mxu0 0.0
        %5072 = vmatpush1.msra.mxu0 0.0
        %5073 = vmatprep.subr.mxu0 0.0
        %5074 = vmatpush1.msra.mxu0 0.0
        %5075 = vmatprep.subr.mxu0 0.0
        %5076 = vmatpush1.msra.mxu0 0.0
        %5077 = vmatprep.subr.mxu0 0.0
        %5078 = vmatpush1.msra.mxu0 0.0
        %5079 = vmatprep.subr.mxu0 0.0
        %5080 = vmatpush1.msra.mxu0 0.0
        %5081 = vmatprep.subr.mxu0 0.0
        %5082 = vmatpush1.msra.mxu0 0.0
        %5083 = vmatprep.subr.mxu0 0.0
        %5084 = vmatpush1.msra.mxu0 0.0
        %5085 = vmatprep.subr.mxu0 0.0
        %5086 = vmatpush1.msra.mxu0 0.0
        %5087 = vmatprep.subr.mxu0 0.0
        %5088 = vmatpush1.msra.mxu0 0.0
        %5089 = vmatprep.subr.mxu0 0.0
        %5090 = vmatpush1.msra.mxu0 0.0
        %5091 = vmatprep.mubr.f32.mxu0 0.0
        %v5092 = vand.u32 %v4838, 4294901760
        %5093 = vmatmul.mubr.f32.gmra.mrb[0].mxu0 %v5092
        %v5094 = vpop.f32.mrb[0].mxu0
        %v5095 = vadd.f32 %v4944, %v5094
        %v5096 = vpop.f32.mrb[0].mxu0
        %5097 = vdwg.mxu0
        %5098 = vmatprep.subr.mxu0 0.0
        %v5099 = vand.u32 %v4840, 4294901760
        %v5100 = vsub.f32 %v4840, %v5099
        %5101 = vmatpush1.msra.mxu0 %v5100
        %5102 = vmatprep.subr.mxu0 0.0
        %v5103 = vand.u32 %v4841, 4294901760
        %v5104 = vsub.f32 %v4841, %v5103
        %5105 = vmatpush1.msra.mxu0 %v5104
        %5106 = vmatprep.subr.mxu0 0.0
        %v5107 = vand.u32 %v4842, 4294901760
        %v5108 = vsub.f32 %v4842, %v5107
        %5109 = vmatpush1.msra.mxu0 %v5108
        %5110 = vmatprep.subr.mxu0 0.0
        %v5111 = vand.u32 %v4843, 4294901760
        %v5112 = vsub.f32 %v4843, %v5111
        %5113 = vmatpush1.msra.mxu0 %v5112
        %5114 = vmatprep.subr.mxu0 0.0
        %v5115 = vand.u32 %v4844, 4294901760
        %v5116 = vsub.f32 %v4844, %v5115
        %5117 = vmatpush1.msra.mxu0 %v5116
        %5118 = vmatprep.subr.mxu0 0.0
        %v5119 = vand.u32 %v4845, 4294901760
        %v5120 = vsub.f32 %v4845, %v5119
        %5121 = vmatpush1.msra.mxu0 %v5120
        %5122 = vmatprep.subr.mxu0 0.0
        %v5123 = vand.u32 %v4846, 4294901760
        %v5124 = vsub.f32 %v4846, %v5123
        %5125 = vmatpush1.msra.mxu0 %v5124
        %5126 = vmatprep.subr.mxu0 0.0
        %v5127 = vand.u32 %v4847, 4294901760
        %v5128 = vsub.f32 %v4847, %v5127
        %5129 = vmatpush1.msra.mxu0 %v5128
        %5130 = vmatprep.subr.mxu0 0.0
        %v5131 = vand.u32 %v4848, 4294901760
        %v5132 = vsub.f32 %v4848, %v5131
        %5133 = vmatpush1.msra.mxu0 %v5132
        %5134 = vmatprep.subr.mxu0 0.0
        %v5135 = vand.u32 %v4849, 4294901760
        %v5136 = vsub.f32 %v4849, %v5135
        %5137 = vmatpush1.msra.mxu0 %v5136
        %5138 = vmatprep.subr.mxu0 0.0
        %v5139 = vand.u32 %v4850, 4294901760
        %v5140 = vsub.f32 %v4850, %v5139
        %5141 = vmatpush1.msra.mxu0 %v5140
        %5142 = vmatprep.subr.mxu0 0.0
        %v5143 = vand.u32 %v4851, 4294901760
        %v5144 = vsub.f32 %v4851, %v5143
        %5145 = vmatpush1.msra.mxu0 %v5144
        %5146 = vmatprep.subr.mxu0 0.0
        %v5147 = vand.u32 %v4852, 4294901760
        %v5148 = vsub.f32 %v4852, %v5147
        %5149 = vmatpush1.msra.mxu0 %v5148
        %5150 = vmatprep.subr.mxu0 0.0
        %v5151 = vand.u32 %v4853, 4294901760
        %v5152 = vsub.f32 %v4853, %v5151
        %5153 = vmatpush1.msra.mxu0 %v5152
        %5154 = vmatprep.subr.mxu0 0.0
        %v5155 = vand.u32 %v4854, 4294901760
        %v5156 = vsub.f32 %v4854, %v5155
        %5157 = vmatpush1.msra.mxu0 %v5156
        %5158 = vmatprep.subr.mxu0 0.0
        %v5159 = vand.u32 %v4855, 4294901760
        %v5160 = vsub.f32 %v4855, %v5159
        %5161 = vmatpush1.msra.mxu0 %v5160
        %5162 = vmatprep.subr.mxu0 0.0
        %5163 = vmatpush1.msra.mxu0 0.0
        %5164 = vmatprep.subr.mxu0 0.0
        %5165 = vmatpush1.msra.mxu0 0.0
        %5166 = vmatprep.subr.mxu0 0.0
        %5167 = vmatpush1.msra.mxu0 0.0
        %5168 = vmatprep.subr.mxu0 0.0
        %5169 = vmatpush1.msra.mxu0 0.0
        %5170 = vmatprep.subr.mxu0 0.0
        %5171 = vmatpush1.msra.mxu0 0.0
        %5172 = vmatprep.subr.mxu0 0.0
        %5173 = vmatpush1.msra.mxu0 0.0
        %5174 = vmatprep.subr.mxu0 0.0
        %5175 = vmatpush1.msra.mxu0 0.0
        %5176 = vmatprep.subr.mxu0 0.0
        %5177 = vmatpush1.msra.mxu0 0.0
        %5178 = vmatprep.subr.mxu0 0.0
        %5179 = vmatpush1.msra.mxu0 0.0
        %5180 = vmatprep.subr.mxu0 0.0
        %5181 = vmatpush1.msra.mxu0 0.0
        %5182 = vmatprep.subr.mxu0 0.0
        %5183 = vmatpush1.msra.mxu0 0.0
        %5184 = vmatprep.subr.mxu0 0.0
        %5185 = vmatpush1.msra.mxu0 0.0
        %5186 = vmatprep.subr.mxu0 0.0
        %5187 = vmatpush1.msra.mxu0 0.0
        %5188 = vmatprep.subr.mxu0 0.0
        %5189 = vmatpush1.msra.mxu0 0.0
        %5190 = vmatprep.subr.mxu0 0.0
        %5191 = vmatpush1.msra.mxu0 0.0
        %5192 = vmatprep.subr.mxu0 0.0
        %5193 = vmatpush1.msra.mxu0 0.0
        %5194 = vmatprep.mubr.f32.mxu0 0.0
        %v5195 = vand.u32 %v4838, 4294901760
        %v5196 = vsub.f32 %v4838, %v5195
        %5197 = vmatmul.mubr.f32.gmra.mrb[0].mxu0 %v5196
        %v5198 = vpop.f32.mrb[0].mxu0
        %v5199 = vadd.f32 %v5095, %v5198
        %v5200 = vpop.f32.mrb[0].mxu0
        %5201 = vdwg.mxu0
        %5202 = vmatprep.subr.mxu0 0.0
        %v5203 = vand.u32 %v4840, 4294901760
        %5204 = vmatpush1.msra.mxu0 %v5203
        %5205 = vmatprep.subr.mxu0 0.0
        %v5206 = vand.u32 %v4841, 4294901760
        %5207 = vmatpush1.msra.mxu0 %v5206
        %5208 = vmatprep.subr.mxu0 0.0
        %v5209 = vand.u32 %v4842, 4294901760
        %5210 = vmatpush1.msra.mxu0 %v5209
        %5211 = vmatprep.subr.mxu0 0.0
        %v5212 = vand.u32 %v4843, 4294901760
        %5213 = vmatpush1.msra.mxu0 %v5212
        %5214 = vmatprep.subr.mxu0 0.0
        %v5215 = vand.u32 %v4844, 4294901760
        %5216 = vmatpush1.msra.mxu0 %v5215
        %5217 = vmatprep.subr.mxu0 0.0
        %v5218 = vand.u32 %v4845, 4294901760
        %5219 = vmatpush1.msra.mxu0 %v5218
        %5220 = vmatprep.subr.mxu0 0.0
        %v5221 = vand.u32 %v4846, 4294901760
        %5222 = vmatpush1.msra.mxu0 %v5221
        %5223 = vmatprep.subr.mxu0 0.0
        %v5224 = vand.u32 %v4847, 4294901760
        %5225 = vmatpush1.msra.mxu0 %v5224
        %5226 = vmatprep.subr.mxu0 0.0
        %v5227 = vand.u32 %v4848, 4294901760
        %5228 = vmatpush1.msra.mxu0 %v5227
        %5229 = vmatprep.subr.mxu0 0.0
        %v5230 = vand.u32 %v4849, 4294901760
        %5231 = vmatpush1.msra.mxu0 %v5230
        %5232 = vmatprep.subr.mxu0 0.0
        %v5233 = vand.u32 %v4850, 4294901760
        %5234 = vmatpush1.msra.mxu0 %v5233
        %5235 = vmatprep.subr.mxu0 0.0
        %v5236 = vand.u32 %v4851, 4294901760
        %5237 = vmatpush1.msra.mxu0 %v5236
        %5238 = vmatprep.subr.mxu0 0.0
        %v5239 = vand.u32 %v4852, 4294901760
        %5240 = vmatpush1.msra.mxu0 %v5239
        %5241 = vmatprep.subr.mxu0 0.0
        %v5242 = vand.u32 %v4853, 4294901760
        %5243 = vmatpush1.msra.mxu0 %v5242
        %5244 = vmatprep.subr.mxu0 0.0
        %v5245 = vand.u32 %v4854, 4294901760
        %5246 = vmatpush1.msra.mxu0 %v5245
        %5247 = vmatprep.subr.mxu0 0.0
        %v5248 = vand.u32 %v4855, 4294901760
        %5249 = vmatpush1.msra.mxu0 %v5248
        %5250 = vmatprep.subr.mxu0 0.0
        %5251 = vmatpush1.msra.mxu0 0.0
        %5252 = vmatprep.subr.mxu0 0.0
        %5253 = vmatpush1.msra.mxu0 0.0
        %5254 = vmatprep.subr.mxu0 0.0
        %5255 = vmatpush1.msra.mxu0 0.0
        %5256 = vmatprep.subr.mxu0 0.0
        %5257 = vmatpush1.msra.mxu0 0.0
        %5258 = vmatprep.subr.mxu0 0.0
        %5259 = vmatpush1.msra.mxu0 0.0
        %5260 = vmatprep.subr.mxu0 0.0
        %5261 = vmatpush1.msra.mxu0 0.0
        %5262 = vmatprep.subr.mxu0 0.0
        %5263 = vmatpush1.msra.mxu0 0.0
        %5264 = vmatprep.subr.mxu0 0.0
        %5265 = vmatpush1.msra.mxu0 0.0
        %5266 = vmatprep.subr.mxu0 0.0
        %5267 = vmatpush1.msra.mxu0 0.0
        %5268 = vmatprep.subr.mxu0 0.0
        %5269 = vmatpush1.msra.mxu0 0.0
        %5270 = vmatprep.subr.mxu0 0.0
        %5271 = vmatpush1.msra.mxu0 0.0
        %5272 = vmatprep.subr.mxu0 0.0
        %5273 = vmatpush1.msra.mxu0 0.0
        %5274 = vmatprep.subr.mxu0 0.0
        %5275 = vmatpush1.msra.mxu0 0.0
        %5276 = vmatprep.subr.mxu0 0.0
        %5277 = vmatpush1.msra.mxu0 0.0
        %5278 = vmatprep.subr.mxu0 0.0
        %5279 = vmatpush1.msra.mxu0 0.0
        %5280 = vmatprep.subr.mxu0 0.0
        %5281 = vmatpush1.msra.mxu0 0.0
        %5282 = vmatprep.mubr.f32.mxu0 0.0
        %v5283 = vand.u32 %v4838, 4294901760
        %v5284 = vsub.f32 %v4838, %v5283
        %v5285 = vand.u32 %v5284, 4294901760
        %5286 = vmatmul.mubr.f32.gmra.mrb[0].mxu0 %v5285
        %v5287 = vpop.f32.mrb[0].mxu0
        %v5288 = vadd.f32 %v5199, %v5287
        %v5289 = vpop.f32.mrb[0].mxu0
        %5290 = vdwg.mxu0
        %5291 = vmatprep.subr.mxu0 0.0
        %v5292 = vand.u32 %v4840, 4294901760
        %v5293 = vsub.f32 %v4840, %v5292
        %v5294 = vand.u32 %v5293, 4294901760
        %5295 = vmatpush1.msra.mxu0 %v5294
        %5296 = vmatprep.subr.mxu0 0.0
        %v5297 = vand.u32 %v4841, 4294901760
        %v5298 = vsub.f32 %v4841, %v5297
        %v5299 = vand.u32 %v5298, 4294901760
        %5300 = vmatpush1.msra.mxu0 %v5299
        %5301 = vmatprep.subr.mxu0 0.0
        %v5302 = vand.u32 %v4842, 4294901760
        %v5303 = vsub.f32 %v4842, %v5302
        %v5304 = vand.u32 %v5303, 4294901760
        %5305 = vmatpush1.msra.mxu0 %v5304
        %5306 = vmatprep.subr.mxu0 0.0
        %v5307 = vand.u32 %v4843, 4294901760
        %v5308 = vsub.f32 %v4843, %v5307
        %v5309 = vand.u32 %v5308, 4294901760
        %5310 = vmatpush1.msra.mxu0 %v5309
        %5311 = vmatprep.subr.mxu0 0.0
        %v5312 = vand.u32 %v4844, 4294901760
        %v5313 = vsub.f32 %v4844, %v5312
        %v5314 = vand.u32 %v5313, 4294901760
        %5315 = vmatpush1.msra.mxu0 %v5314
        %5316 = vmatprep.subr.mxu0 0.0
        %v5317 = vand.u32 %v4845, 4294901760
        %v5318 = vsub.f32 %v4845, %v5317
        %v5319 = vand.u32 %v5318, 4294901760
        %5320 = vmatpush1.msra.mxu0 %v5319
        %5321 = vmatprep.subr.mxu0 0.0
        %v5322 = vand.u32 %v4846, 4294901760
        %v5323 = vsub.f32 %v4846, %v5322
        %v5324 = vand.u32 %v5323, 4294901760
        %5325 = vmatpush1.msra.mxu0 %v5324
        %5326 = vmatprep.subr.mxu0 0.0
        %v5327 = vand.u32 %v4847, 4294901760
        %v5328 = vsub.f32 %v4847, %v5327
        %v5329 = vand.u32 %v5328, 4294901760
        %5330 = vmatpush1.msra.mxu0 %v5329
        %5331 = vmatprep.subr.mxu0 0.0
        %v5332 = vand.u32 %v4848, 4294901760
        %v5333 = vsub.f32 %v4848, %v5332
        %v5334 = vand.u32 %v5333, 4294901760
        %5335 = vmatpush1.msra.mxu0 %v5334
        %5336 = vmatprep.subr.mxu0 0.0
        %v5337 = vand.u32 %v4849, 4294901760
        %v5338 = vsub.f32 %v4849, %v5337
        %v5339 = vand.u32 %v5338, 4294901760
        %5340 = vmatpush1.msra.mxu0 %v5339
        %5341 = vmatprep.subr.mxu0 0.0
        %v5342 = vand.u32 %v4850, 4294901760
        %v5343 = vsub.f32 %v4850, %v5342
        %v5344 = vand.u32 %v5343, 4294901760
        %5345 = vmatpush1.msra.mxu0 %v5344
        %5346 = vmatprep.subr.mxu0 0.0
        %v5347 = vand.u32 %v4851, 4294901760
        %v5348 = vsub.f32 %v4851, %v5347
        %v5349 = vand.u32 %v5348, 4294901760
        %5350 = vmatpush1.msra.mxu0 %v5349
        %5351 = vmatprep.subr.mxu0 0.0
        %v5352 = vand.u32 %v4852, 4294901760
        %v5353 = vsub.f32 %v4852, %v5352
        %v5354 = vand.u32 %v5353, 4294901760
        %5355 = vmatpush1.msra.mxu0 %v5354
        %5356 = vmatprep.subr.mxu0 0.0
        %v5357 = vand.u32 %v4853, 4294901760
        %v5358 = vsub.f32 %v4853, %v5357
        %v5359 = vand.u32 %v5358, 4294901760
        %5360 = vmatpush1.msra.mxu0 %v5359
        %5361 = vmatprep.subr.mxu0 0.0
        %v5362 = vand.u32 %v4854, 4294901760
        %v5363 = vsub.f32 %v4854, %v5362
        %v5364 = vand.u32 %v5363, 4294901760
        %5365 = vmatpush1.msra.mxu0 %v5364
        %5366 = vmatprep.subr.mxu0 0.0
        %v5367 = vand.u32 %v4855, 4294901760
        %v5368 = vsub.f32 %v4855, %v5367
        %v5369 = vand.u32 %v5368, 4294901760
        %5370 = vmatpush1.msra.mxu0 %v5369
        %5371 = vmatprep.subr.mxu0 0.0
        %5372 = vmatpush1.msra.mxu0 0.0
        %5373 = vmatprep.subr.mxu0 0.0
        %5374 = vmatpush1.msra.mxu0 0.0
        %5375 = vmatprep.subr.mxu0 0.0
        %5376 = vmatpush1.msra.mxu0 0.0
        %5377 = vmatprep.subr.mxu0 0.0
        %5378 = vmatpush1.msra.mxu0 0.0
        %5379 = vmatprep.subr.mxu0 0.0
        %5380 = vmatpush1.msra.mxu0 0.0
        %5381 = vmatprep.subr.mxu0 0.0
        %5382 = vmatpush1.msra.mxu0 0.0
        %5383 = vmatprep.subr.mxu0 0.0
        %5384 = vmatpush1.msra.mxu0 0.0
        %5385 = vmatprep.subr.mxu0 0.0
        %5386 = vmatpush1.msra.mxu0 0.0
        %5387 = vmatprep.subr.mxu0 0.0
        %5388 = vmatpush1.msra.mxu0 0.0
        %5389 = vmatprep.subr.mxu0 0.0
        %5390 = vmatpush1.msra.mxu0 0.0
        %5391 = vmatprep.subr.mxu0 0.0
        %5392 = vmatpush1.msra.mxu0 0.0
        %5393 = vmatprep.subr.mxu0 0.0
        %5394 = vmatpush1.msra.mxu0 0.0
        %5395 = vmatprep.subr.mxu0 0.0
        %5396 = vmatpush1.msra.mxu0 0.0
        %5397 = vmatprep.subr.mxu0 0.0
        %5398 = vmatpush1.msra.mxu0 0.0
        %5399 = vmatprep.subr.mxu0 0.0
        %5400 = vmatpush1.msra.mxu0 0.0
        %5401 = vmatprep.subr.mxu0 0.0
        %5402 = vmatpush1.msra.mxu0 0.0
        %5403 = vmatprep.mubr.f32.mxu0 0.0
        %v5404 = vand.u32 %v4838, 4294901760
        %5405 = vmatmul.mubr.f32.gmra.mrb[0].mxu0 %v5404
        %v5406 = vpop.f32.mrb[0].mxu0
        %v5407 = vadd.f32 %v5288, %v5406
        %v5408 = vpop.f32.mrb[0].mxu0
        %5409 = vdwg.mxu0
        %5410 = vmatprep.subr.mxu0 0.0
        %v5411 = vand.u32 %v4840, 4294901760
        %5412 = vmatpush1.msra.mxu0 %v5411
        %5413 = vmatprep.subr.mxu0 0.0
        %v5414 = vand.u32 %v4841, 4294901760
        %5415 = vmatpush1.msra.mxu0 %v5414
        %5416 = vmatprep.subr.mxu0 0.0
        %v5417 = vand.u32 %v4842, 4294901760
        %5418 = vmatpush1.msra.mxu0 %v5417
        %5419 = vmatprep.subr.mxu0 0.0
        %v5420 = vand.u32 %v4843, 4294901760
        %5421 = vmatpush1.msra.mxu0 %v5420
        %5422 = vmatprep.subr.mxu0 0.0
        %v5423 = vand.u32 %v4844, 4294901760
        %5424 = vmatpush1.msra.mxu0 %v5423
        %5425 = vmatprep.subr.mxu0 0.0
        %v5426 = vand.u32 %v4845, 4294901760
        %5427 = vmatpush1.msra.mxu0 %v5426
        %5428 = vmatprep.subr.mxu0 0.0
        %v5429 = vand.u32 %v4846, 4294901760
        %5430 = vmatpush1.msra.mxu0 %v5429
        %5431 = vmatprep.subr.mxu0 0.0
        %v5432 = vand.u32 %v4847, 4294901760
        %5433 = vmatpush1.msra.mxu0 %v5432
        %5434 = vmatprep.subr.mxu0 0.0
        %v5435 = vand.u32 %v4848, 4294901760
        %5436 = vmatpush1.msra.mxu0 %v5435
        %5437 = vmatprep.subr.mxu0 0.0
        %v5438 = vand.u32 %v4849, 4294901760
        %5439 = vmatpush1.msra.mxu0 %v5438
        %5440 = vmatprep.subr.mxu0 0.0
        %v5441 = vand.u32 %v4850, 4294901760
        %5442 = vmatpush1.msra.mxu0 %v5441
        %5443 = vmatprep.subr.mxu0 0.0
        %v5444 = vand.u32 %v4851, 4294901760
        %5445 = vmatpush1.msra.mxu0 %v5444
        %5446 = vmatprep.subr.mxu0 0.0
        %v5447 = vand.u32 %v4852, 4294901760
        %5448 = vmatpush1.msra.mxu0 %v5447
        %5449 = vmatprep.subr.mxu0 0.0
        %v5450 = vand.u32 %v4853, 4294901760
        %5451 = vmatpush1.msra.mxu0 %v5450
        %5452 = vmatprep.subr.mxu0 0.0
        %v5453 = vand.u32 %v4854, 4294901760
        %5454 = vmatpush1.msra.mxu0 %v5453
        %5455 = vmatprep.subr.mxu0 0.0
        %v5456 = vand.u32 %v4855, 4294901760
        %5457 = vmatpush1.msra.mxu0 %v5456
        %5458 = vmatprep.subr.mxu0 0.0
        %5459 = vmatpush1.msra.mxu0 0.0
        %5460 = vmatprep.subr.mxu0 0.0
        %5461 = vmatpush1.msra.mxu0 0.0
        %5462 = vmatprep.subr.mxu0 0.0
        %5463 = vmatpush1.msra.mxu0 0.0
        %5464 = vmatprep.subr.mxu0 0.0
        %5465 = vmatpush1.msra.mxu0 0.0
        %5466 = vmatprep.subr.mxu0 0.0
        %5467 = vmatpush1.msra.mxu0 0.0
        %5468 = vmatprep.subr.mxu0 0.0
        %5469 = vmatpush1.msra.mxu0 0.0
        %5470 = vmatprep.subr.mxu0 0.0
        %5471 = vmatpush1.msra.mxu0 0.0
        %5472 = vmatprep.subr.mxu0 0.0
        %5473 = vmatpush1.msra.mxu0 0.0
        %5474 = vmatprep.subr.mxu0 0.0
        %5475 = vmatpush1.msra.mxu0 0.0
        %5476 = vmatprep.subr.mxu0 0.0
        %5477 = vmatpush1.msra.mxu0 0.0
        %5478 = vmatprep.subr.mxu0 0.0
        %5479 = vmatpush1.msra.mxu0 0.0
        %5480 = vmatprep.subr.mxu0 0.0
        %5481 = vmatpush1.msra.mxu0 0.0
        %5482 = vmatprep.subr.mxu0 0.0
        %5483 = vmatpush1.msra.mxu0 0.0
        %5484 = vmatprep.subr.mxu0 0.0
        %5485 = vmatpush1.msra.mxu0 0.0
        %5486 = vmatprep.subr.mxu0 0.0
        %5487 = vmatpush1.msra.mxu0 0.0
        %5488 = vmatprep.subr.mxu0 0.0
        %5489 = vmatpush1.msra.mxu0 0.0
        %5490 = vmatprep.mubr.f32.mxu0 0.0
        %v5491 = vand.u32 %v4838, 4294901760
        %5492 = vmatmul.mubr.f32.gmra.mrb[0].mxu0 %v5491
        %v5493 = vpop.f32.mrb[0].mxu0
        %v5494 = vadd.f32 %v5407, %v5493
        %v5495 = vpop.f32.mrb[0].mxu0
        %5496 = vdwg.mxu0
        %s5497 = scalar_lea.vmem %s202, 56 [#allocation7]
        %5498 = vst [vmem:[%s5497] sm:$0xff] %v5494
        %s5499 = sand.u32 %s82, 1
        %s5500 = scalar_lea.sflag [#allocation4], %s5499
        %s5501 = sand.u32 %s82, 1
        %s5502 = smul.addr %s5501, 64
        %s5503 = scalar_lea.vmem [#allocation7], %s5502
        // Predicated region
        $region37: #{tpu_custom_call.1} parent=27 // pred_check
          %p5504 = pneg %p92
        $region38: #{tpu_custom_call.1} parent=27 // pred_check_branch
          %5506 = sbr.rel (%p5504) target = $region40
        $region39: #{tpu_custom_call.1} parent=27 // pred_region
          %s5507 = smul.u32 8, %s22
          %s5509 = ssub.s32 1024, 1024
          %5510 = vsyncadd %s5500, %s5509
          %s5511 = smul.addr %s5507, 128
          %s5512 = scalar_lea.hbm %s2, %s5511
          %s5513 = sshll.u32 %s5503, 4
          %s5514 = int_to_ptr.vmem [resolvable:$true] %s5513
          %5519 = dma.vmem_to_hbm [thread:$0]  %s5514, 1024, %s5512, %s5500, 128, 128, 8
        $region40: #{tpu_custom_call.1} parent=27 // pred_fallthru
          _
      $region28: #{tpu_custom_call.1} parent=5 // pred_fallthru
        _
      %p5520 = scmp.le.s32.totalorder 2, %s17
      // Predicated region
      $region41: #{tpu_custom_call.1} parent=5 // pred_check
        %p5521 = pneg %p5520
      $region42: #{tpu_custom_call.1} parent=5 // pred_check_branch
        %5523 = sbr.rel (%p5521) target = $region44
      $region43: #{tpu_custom_call.1} parent=5 // pred_region
        %s5524 = ssub.s32 %s17, 2
        // Predicated region
        $region45: #{tpu_custom_call.1} parent=43 // pred_check
          %p5525 = pneg %p98
        $region46: #{tpu_custom_call.1} parent=43 // pred_check_branch
          %5527 = sbr.rel (%p5525) target = $region48
        $region47: #{tpu_custom_call.1} parent=43 // pred_region
          %s5528 = sand.u32 %s83, 1
          %s5529 = scalar_lea.sflag [#allocation4], %s5528
          %s5530 = sand.u32 %s83, 1
          %s5531 = smul.addr %s5530, 64
          %s5532 = scalar_lea.vmem [#allocation7], %s5531
          %5533 = dma.done %s5529, 1024
        $region48: #{tpu_custom_call.1} parent=43 // pred_fallthru
          _
      $region44: #{tpu_custom_call.1} parent=5 // pred_fallthru
        _
    $region6: #{tpu_custom_call.1} parent=1 // loop_footer
      %s21 = sadd.s32 1, %s17
    $region7: #{tpu_custom_call.1} parent=1 // loop_footer_branch
      %16 = sbr.rel target = $region3
    $region8: #{tpu_custom_call.1} parent=1 // loop_exit
      _
    %5534 = vsyncpa [#allocation3], 1
    %s5535 = scalar_lea.sflag [#allocation3], 1
    %5536 = vsyncpa %s5535, 1
    %5537 = vsyncpa [#allocation6], 1
    %s5538 = scalar_lea.sflag [#allocation6], 1
    %5539 = vsyncpa %s5538, 1
    %5540 = vsyncpa [#allocation4], 1
    %s5541 = scalar_lea.sflag [#allocation4], 1
    %5542 = vsyncpa %s5541, 1

</llo_original>
